<compile_context>
chip_gen: v7x
topology: tpu7x:2x2x1
jax: 0.10.0
libtpu: 0.0.40
codegen_flags: <defaults>
</compile_context>

<pallas_src>
import jax
import jax.numpy as jnp
from jax import lax
from jax.experimental import pallas as pl
from jax.experimental.pallas import tpu as pltpu

NUM_ELECTRODES = 14
NUM_FEATURES = 8
FEATURE_SIZE = NUM_FEATURES * NUM_ELECTRODES   # 112
BOTTLENECK = 16                                 # LSTM hidden size
LAYER_DIM = 2
OUTPUT_SIZE = 3
H2 = BOTTLENECK // 2                            # 8
H4 = BOTTLENECK // 4                            # 4


def our_model_kernel(
    x_ref,                       # (Bt, T, F)  one batch tile, natural (b, t) layout
    wih0_ref, b0_ref,            # (F, 4H), (1, 4H)      layer-0 input proj
    whh0_ref,                    # (H, 4H)               layer-0 recurrent
    wih1_ref, whh1_ref, b1_ref,  # (H, 4H), (H, 4H), (1, 4H)   layer-1 (un-fused)
    wfc1_ref, bfc1_ref,          # (H, H2), (1, H2)
    wfc2_ref, bfc2_ref,          # (H2, H4), (1, H4)
    wfc_ref, bfc_ref,            # (H4, O), (1, O)
    out_ref,                     # (Bt, O)
    hid_ref,                     # (Bt, H)
    gx_ref,                      # VMEM scratch (T*Bt, 4H), rows ordered (t, b)
):
    Bt, T, F = x_ref.shape
    H = whh0_ref.shape[0]

    # ---- Hoisted layer-0 input projection (off the serial chain).
    # One-time (b,t)->(t,b) re-layout of the VMEM-resident x tile (minor dim kept),
    # then a single (T*Bt, F) x (F, 4H) matmul.  Per-step reads become plain
    # contiguous sublane slices of gx.
    x_tb = pltpu.einshape("btf->tbf", x_ref[...]).reshape(T * Bt, F)
    gx_ref[...] = (
        jnp.dot(x_tb, wih0_ref[...], preferred_element_type=jnp.float32)
        + b0_ref[...]
    )

    whh0 = whh0_ref[...]
    wih1 = wih1_ref[...]
    whh1 = whh1_ref[...]
    b1 = b1_ref[...]

    def activate(gates, c):
        # Activations over the whole (Bt, 4H) gate tile (2 EUP passes), then cheap
        # static lane slices.  PyTorch gate order: i, f, g, o.
        sg = jax.nn.sigmoid(gates)
        tg = jnp.tanh(gates)
        i = sg[:, 0 * H:1 * H]
        f = sg[:, 1 * H:2 * H]
        g = tg[:, 2 * H:3 * H]
        o = sg[:, 3 * H:4 * H]
        c_new = f * c + i * g
        return o * jnp.tanh(c_new), c_new

    def step(t, carry):
        h0, c0, h1, c1 = carry
        # Layer-1 recurrent matmul depends only on previous-step h1: issue it first
        # so it overlaps layer-0 instead of waiting on this step's h0.
        r1 = jnp.dot(h1, whh1, preferred_element_type=jnp.float32)
        # Layer 0: precomputed input gates + tiny K=16 recurrent matmul.
        start = pl.multiple_of(t * Bt, Bt)
        gates0 = gx_ref[pl.ds(start, Bt), :] + jnp.dot(
            h0, whh0, preferred_element_type=jnp.float32)
        h0, c0 = activate(gates0, c0)
        # Layer 1: r1 + this step's h0 projection.
        gates1 = r1 + jnp.dot(h0, wih1, preferred_element_type=jnp.float32) + b1
        h1, c1 = activate(gates1, c1)
        return (h0, c0, h1, c1)

    z = jnp.zeros((Bt, H), jnp.float32)
    _, _, h1, _ = lax.fori_loop(0, T, step, (z, z, z, z), unroll=min(T, 8))

    # out[:, -1, :] of the top LSTM layer == h1 at the final timestep.
    hid_ref[...] = h1

    # MLP head (dropout == identity at inference).
    y = jnp.maximum(
        jnp.dot(h1, wfc1_ref[...], preferred_element_type=jnp.float32)
        + bfc1_ref[...], 0.0)
    y = jnp.maximum(
        jnp.dot(y, wfc2_ref[...], preferred_element_type=jnp.float32)
        + bfc2_ref[...], 0.0)
    out_ref[...] = (
        jnp.dot(y, wfc_ref[...], preferred_element_type=jnp.float32)
        + bfc_ref[...]
    )


def _round_up(v, m):
    return -(-v // m) * m


def _pick_btile(B, T):
    """Batch tile: as large as the VMEM budget allows (multiple of 8, <=256), but
    kept to >= 2 grid steps when the batch permits so v7x's 2 TCs both get work."""
    Bp8 = _round_up(B, 8)
    bt = min(Bp8, 256)
    if Bp8 >= 16:
        bt = min(bt, _round_up(-(-Bp8 // 2), 8))
    # ~1.6 KiB of VMEM per (b, t) row (x block x2 pipeline buffers + in-kernel
    # reordered copy + gate scratch); 8192 rows stays inside v5e's 16 MiB scoped
    # default and far below v7x's 64 MiB physical VMEM.
    max_rows = 8192
    row_cap = max(8, (max_rows // max(T, 1)) // 8 * 8)
    return max(8, min(bt, row_cap))


@jax.jit
def our_model_forward(x, params):
    """x: (B, T, FEATURE_SIZE) float32, batch_first like the PyTorch module."""
    B, T, F = x.shape
    H = BOTTLENECK
    bt = _pick_btile(B, T)
    Bp = _round_up(B, bt)
    nb = Bp // bt

    xp = jnp.pad(x, ((0, Bp - B), (0, 0), (0, 0))) if Bp != B else x

    # Pre-transpose weights once -> native (K, N) MXU orientation.
    wih0_t = params["wih0"].T                    # (F, 4H)
    whh0_t = params["whh0"].T                    # (H, 4H)
    wih1_t = params["wih1"].T                    # (H, 4H)
    whh1_t = params["whh1"].T                    # (H, 4H)
    wfc1_t = params["wfc1"].T                    # (H, H2)
    wfc2_t = params["wfc2"].T                    # (H2, H4)
    wfc_t = params["wfc"].T                      # (H4, O)

    inputs = (
        xp,
        wih0_t, params["b0"],
        whh0_t,
        wih1_t, whh1_t, params["b1"],
        wfc1_t, params["bfc1"],
        wfc2_t, params["bfc2"],
        wfc_t, params["bfc"],
    )

    def full(shape):
        return pl.BlockSpec(shape, lambda b: (0,) * len(shape))

    in_specs = [
        pl.BlockSpec((bt, T, F), lambda b: (b, 0, 0)),
        full((F, 4 * H)), full((1, 4 * H)),
        full((H, 4 * H)),
        full((H, 4 * H)), full((H, 4 * H)), full((1, 4 * H)),
        full((H, H2)), full((1, H2)),
        full((H2, H4)), full((1, H4)),
        full((H4, OUTPUT_SIZE)), full((1, OUTPUT_SIZE)),
    ]
    out_specs = (
        pl.BlockSpec((bt, OUTPUT_SIZE), lambda b: (b, 0)),
        pl.BlockSpec((bt, H), lambda b: (b, 0)),
    )

    # Explicit VMEM budget (v5e's scoped default is only 16 MiB): x block (x2
    # pipeline buffers) + in-kernel reordered copy + gate scratch + headroom.
    rows = bt * T
    vmem_needed = 2 * rows * F * 4 + rows * F * 4 + rows * 4 * H * 4 + (4 << 20)
    vmem_limit = int(min(max(2 * vmem_needed, 32 << 20), 48 << 20))

    out, hidden = pl.pallas_call(
        our_model_kernel,
        grid=(nb,),
        out_shape=(
            jax.ShapeDtypeStruct((Bp, OUTPUT_SIZE), jnp.float32),
            jax.ShapeDtypeStruct((Bp, H), jnp.float32),
        ),
        in_specs=in_specs,
        out_specs=out_specs,
        scratch_shapes=[pltpu.VMEM((T * bt, 4 * H), jnp.float32)],
        compiler_params=pltpu.CompilerParams(
            dimension_semantics=("parallel",),
            vmem_limit_bytes=vmem_limit),
    )(*inputs)
    return out[:B], hidden[:B]


def init_params(key):
    """Deterministic PyTorch-style uniform init: U(-1/sqrt(H), 1/sqrt(H))."""
    k = 1.0 / jnp.sqrt(jnp.float32(BOTTLENECK))
    keys = jax.random.split(key, 16)

    def u(kk, shape):
        return jax.random.uniform(kk, shape, jnp.float32, -k, k)

    # LSTM layer 0
    wih0 = u(keys[0], (4 * BOTTLENECK, FEATURE_SIZE))
    whh0 = u(keys[1], (4 * BOTTLENECK, BOTTLENECK))
    b_ih0 = u(keys[2], (4 * BOTTLENECK,))
    b_hh0 = u(keys[3], (4 * BOTTLENECK,))
    # LSTM layer 1
    wih1 = u(keys[4], (4 * BOTTLENECK, BOTTLENECK))
    whh1 = u(keys[5], (4 * BOTTLENECK, BOTTLENECK))
    b_ih1 = u(keys[6], (4 * BOTTLENECK,))
    b_hh1 = u(keys[7], (4 * BOTTLENECK,))
    # Linear heads
    wfc1 = u(keys[8], (H2, BOTTLENECK))
    bfc1 = u(keys[9], (H2,))
    wfc2 = u(keys[10], (H4, H2))
    bfc2 = u(keys[11], (H4,))
    wfc = u(keys[12], (OUTPUT_SIZE, H4))
    bfc = u(keys[13], (OUTPUT_SIZE,))

    return {
        "wih0": wih0, "whh0": whh0, "b0": (b_ih0 + b_hh0).reshape(1, -1),
        "wih1": wih1, "whh1": whh1, "b1": (b_ih1 + b_hh1).reshape(1, -1),
        "wfc1": wfc1, "bfc1": bfc1.reshape(1, -1),
        "wfc2": wfc2, "bfc2": bfc2.reshape(1, -1),
        "wfc": wfc, "bfc": bfc.reshape(1, -1),
    }


def reference_forward(x, params):
    """Pure-JAX reference mirroring the PyTorch forward (eval mode)."""
    B, T, _ = x.shape
    H = BOTTLENECK

    def cell(x_t, h, c, w_ih, w_hh, b):
        gates = x_t @ w_ih.T + h @ w_hh.T + b
        i = jax.nn.sigmoid(gates[:, 0 * H:1 * H])
        f = jax.nn.sigmoid(gates[:, 1 * H:2 * H])
        g = jnp.tanh(gates[:, 2 * H:3 * H])
        o = jax.nn.sigmoid(gates[:, 3 * H:4 * H])
        c = f * c + i * g
        return o * jnp.tanh(c), c

    h0 = c0 = h1 = c1 = jnp.zeros((B, H), jnp.float32)
    for t in range(T):
        h0, c0 = cell(x[:, t, :], h0, c0, params["wih0"], params["whh0"], params["b0"])
        h1, c1 = cell(h0, h1, c1, params["wih1"], params["whh1"], params["b1"])
    hidden = h1
    z = jnp.maximum(h1 @ params["wfc1"].T + params["bfc1"], 0.0)
    z = jnp.maximum(z @ params["wfc2"].T + params["bfc2"], 0.0)
    out = z @ params["wfc"].T + params["bfc"]
    return out, hidden


if __name__ == "__main__":
    key = jax.random.PRNGKey(0)
    k_param, k_x = jax.random.split(key)

    B, T = 2, 8
    x = jax.random.normal(k_x, (B, T, FEATURE_SIZE), jnp.float32)
    params = init_params(k_param)

    out, hidden = our_model_forward(x, params)
    out, hidden = jax.block_until_ready((out, hidden))

    ref_out, ref_hidden = reference_forward(x, params)
    assert out.shape == (B, OUTPUT_SIZE) and hidden.shape == (B, BOTTLENECK)
    assert jnp.allclose(out, ref_out, atol=1e-4, rtol=1e-4)
    assert jnp.allclose(hidden, ref_hidden, atol=1e-4, rtol=1e-4)

    print("KERNEL_OK")
</pallas_src>

<mosaic_0001>
module attributes {stable_mosaic.version = 11 : i64} {
  func.func @our_model_kernel(%arg0: i32, %arg1: memref<8x8x112xf32, #tpu.memory_space<vmem>>, %arg2: memref<112x64xf32, #tpu.memory_space<vmem>>, %arg3: memref<1x64xf32, #tpu.memory_space<vmem>>, %arg4: memref<16x64xf32, #tpu.memory_space<vmem>>, %arg5: memref<16x64xf32, #tpu.memory_space<vmem>>, %arg6: memref<16x64xf32, #tpu.memory_space<vmem>>, %arg7: memref<1x64xf32, #tpu.memory_space<vmem>>, %arg8: memref<16x8xf32, #tpu.memory_space<vmem>>, %arg9: memref<1x8xf32, #tpu.memory_space<vmem>>, %arg10: memref<8x4xf32, #tpu.memory_space<vmem>>, %arg11: memref<1x4xf32, #tpu.memory_space<vmem>>, %arg12: memref<4x3xf32, #tpu.memory_space<vmem>>, %arg13: memref<1x3xf32, #tpu.memory_space<vmem>>, %arg14: memref<8x3xf32, #tpu.memory_space<vmem>>, %arg15: memref<8x16xf32, #tpu.memory_space<vmem>>, %arg16: memref<64x64xf32, #tpu.memory_space<vmem>>) attributes {dimension_semantics = [#tpu.dimension_semantics<parallel>], iteration_bounds = array<i64: 1>, scalar_prefetch = 0 : i64, scratch_operands = 1 : i64, tpu.core_type = #tpu.core_type<tc>, window_params = [{transform_indices = @transform_0, window_bounds = array<i64: 8, 8, 112>}, {pipeline_mode = #tpu.pipeline_mode<synchronous>, transform_indices = @transform_1, window_bounds = array<i64: 112, 64>}, {pipeline_mode = #tpu.pipeline_mode<synchronous>, transform_indices = @transform_2, window_bounds = array<i64: 1, 64>}, {pipeline_mode = #tpu.pipeline_mode<synchronous>, transform_indices = @transform_3, window_bounds = array<i64: 16, 64>}, {pipeline_mode = #tpu.pipeline_mode<synchronous>, transform_indices = @transform_4, window_bounds = array<i64: 16, 64>}, {pipeline_mode = #tpu.pipeline_mode<synchronous>, transform_indices = @transform_5, window_bounds = array<i64: 16, 64>}, {pipeline_mode = #tpu.pipeline_mode<synchronous>, transform_indices = @transform_6, window_bounds = array<i64: 1, 64>}, {pipeline_mode = #tpu.pipeline_mode<synchronous>, transform_indices = @transform_7, window_bounds = array<i64: 16, 8>}, {pipeline_mode = #tpu.pipeline_mode<synchronous>, transform_indices = @transform_8, window_bounds = array<i64: 1, 8>}, {pipeline_mode = #tpu.pipeline_mode<synchronous>, transform_indices = @transform_9, window_bounds = array<i64: 8, 4>}, {pipeline_mode = #tpu.pipeline_mode<synchronous>, transform_indices = @transform_10, window_bounds = array<i64: 1, 4>}, {pipeline_mode = #tpu.pipeline_mode<synchronous>, transform_indices = @transform_11, window_bounds = array<i64: 4, 3>}, {pipeline_mode = #tpu.pipeline_mode<synchronous>, transform_indices = @transform_12, window_bounds = array<i64: 1, 3>}, {transform_indices = @transform_13, window_bounds = array<i64: 8, 3>}, {transform_indices = @transform_14, window_bounds = array<i64: 8, 16>}]} {
    %c0 = arith.constant 0 : index
    %c0_0 = arith.constant 0 : index
    %c0_1 = arith.constant 0 : index
    %0 = vector.load %arg1[%c0, %c0_0, %c0_1] : memref<8x8x112xf32, #tpu.memory_space<vmem>>, vector<8x8x112xf32>
    %1 = tpu.transpose %0, [1, 0, 2] : vector<8x8x112xf32> -> vector<8x8x112xf32>
    %2 = vector.shape_cast %1 : vector<8x8x112xf32> to vector<64x112xf32>
    %c0_2 = arith.constant 0 : index
    %c0_3 = arith.constant 0 : index
    %3 = vector.load %arg2[%c0_2, %c0_3] : memref<112x64xf32, #tpu.memory_space<vmem>>, vector<112x64xf32>
    %cst = arith.constant dense<0.000000e+00> : vector<64x64xf32>
    %4 = tpu.matmul %2, %3, %cst {dimension_numbers = #tpu.dot_dimension_numbers<[1], [0], [0], [1], [0, 0, 1, 1], [], []>} : vector<64x112xf32>, vector<112x64xf32>, vector<64x64xf32> -> vector<64x64xf32>
    %c0_4 = arith.constant 0 : index
    %c0_5 = arith.constant 0 : index
    %5 = vector.load %arg3[%c0_4, %c0_5] : memref<1x64xf32, #tpu.memory_space<vmem>>, vector<1x64xf32>
    %6 = vector.broadcast %5 : vector<1x64xf32> to vector<64x64xf32>
    %7 = arith.addf %4, %6 : vector<64x64xf32>
    %c0_6 = arith.constant 0 : index
    %c0_7 = arith.constant 0 : index
    %8 = vector.load %arg16[%c0_6, %c0_7] : memref<64x64xf32, #tpu.memory_space<vmem>>, vector<64x64xf32>
    tpu.vector_store %arg16[%c0_6, %c0_7], %7 {strides = array<i32>} : memref<64x64xf32, #tpu.memory_space<vmem>>, vector<64x64xf32>,
    %c0_8 = arith.constant 0 : index
    %c0_9 = arith.constant 0 : index
    %9 = vector.load %arg4[%c0_8, %c0_9] : memref<16x64xf32, #tpu.memory_space<vmem>>, vector<16x64xf32>
    %c0_10 = arith.constant 0 : index
    %c0_11 = arith.constant 0 : index
    %10 = vector.load %arg5[%c0_10, %c0_11] : memref<16x64xf32, #tpu.memory_space<vmem>>, vector<16x64xf32>
    %c0_12 = arith.constant 0 : index
    %c0_13 = arith.constant 0 : index
    %11 = vector.load %arg6[%c0_12, %c0_13] : memref<16x64xf32, #tpu.memory_space<vmem>>, vector<16x64xf32>
    %c0_14 = arith.constant 0 : index
    %c0_15 = arith.constant 0 : index
    %12 = vector.load %arg7[%c0_14, %c0_15] : memref<1x64xf32, #tpu.memory_space<vmem>>, vector<1x64xf32>
    %cst_16 = arith.constant 0.000000e+00 : f32
    %13 = vector.broadcast %cst_16 : f32 to vector<8x16xf32>
    %c0_i32 = arith.constant 0 : i32
    %cst_17 = arith.constant dense<0.000000e+00> : vector<8x64xf32>
    %14 = tpu.matmul %13, %11, %cst_17 {dimension_numbers = #tpu.dot_dimension_numbers<[1], [0], [0], [1], [0, 0, 1, 1], [], []>} : vector<8x16xf32>, vector<16x64xf32>, vector<8x64xf32> -> vector<8x64xf32>
    %c8_i32 = arith.constant 8 : i32
    %15 = arith.muli %c0_i32, %c8_i32 : i32
    %16 = tpu.assume_multiple %15, 8 : i32
    %17 = arith.index_cast %16 : i32 to index
    %c0_18 = arith.constant 0 : index
    %18 = vector.load %arg16[%17, %c0_18] : memref<64x64xf32, #tpu.memory_space<vmem>>, vector<8x64xf32>
    %cst_19 = arith.constant dense<0.000000e+00> : vector<8x64xf32>
    %19 = tpu.matmul %13, %9, %cst_19 {dimension_numbers = #tpu.dot_dimension_numbers<[1], [0], [0], [1], [0, 0, 1, 1], [], []>} : vector<8x16xf32>, vector<16x64xf32>, vector<8x64xf32> -> vector<8x64xf32>
    %20 = arith.addf %18, %19 : vector<8x64xf32>
    %21 = arith.negf %20 : vector<8x64xf32>
    %22 = math.exp %21 : vector<8x64xf32>
    %cst_20 = arith.constant 1.000000e+00 : f32
    %23 = vector.broadcast %cst_20 : f32 to vector<8x64xf32>
    %24 = arith.addf %23, %22 : vector<8x64xf32>
    %25 = arith.divf %23, %24 : vector<8x64xf32>
    %26 = math.tanh %20 : vector<8x64xf32>
    %27 = vector.extract_strided_slice %25 {offsets = [0, 0], sizes = [8, 16], strides = [1, 1]} : vector<8x64xf32> to vector<8x16xf32>
    %28 = vector.extract_strided_slice %25 {offsets = [0, 16], sizes = [8, 16], strides = [1, 1]} : vector<8x64xf32> to vector<8x16xf32>
    %29 = vector.extract_strided_slice %26 {offsets = [0, 32], sizes = [8, 16], strides = [1, 1]} : vector<8x64xf32> to vector<8x16xf32>
    %30 = vector.extract_strided_slice %25 {offsets = [0, 48], sizes = [8, 16], strides = [1, 1]} : vector<8x64xf32> to vector<8x16xf32>
    %31 = arith.mulf %28, %13 : vector<8x16xf32>
    %32 = arith.mulf %27, %29 : vector<8x16xf32>
    %33 = arith.addf %31, %32 : vector<8x16xf32>
    %34 = math.tanh %33 : vector<8x16xf32>
    %35 = arith.mulf %30, %34 : vector<8x16xf32>
    %cst_21 = arith.constant dense<0.000000e+00> : vector<8x64xf32>
    %36 = tpu.matmul %35, %10, %cst_21 {dimension_numbers = #tpu.dot_dimension_numbers<[1], [0], [0], [1], [0, 0, 1, 1], [], []>} : vector<8x16xf32>, vector<16x64xf32>, vector<8x64xf32> -> vector<8x64xf32>
    %37 = arith.addf %14, %36 : vector<8x64xf32>
    %38 = vector.broadcast %12 : vector<1x64xf32> to vector<8x64xf32>
    %39 = arith.addf %37, %38 : vector<8x64xf32>
    %40 = arith.negf %39 : vector<8x64xf32>
    %41 = math.exp %40 : vector<8x64xf32>
    %cst_22 = arith.constant 1.000000e+00 : f32
    %42 = vector.broadcast %cst_22 : f32 to vector<8x64xf32>
    %43 = arith.addf %42, %41 : vector<8x64xf32>
    %44 = arith.divf %42, %43 : vector<8x64xf32>
    %45 = math.tanh %39 : vector<8x64xf32>
    %46 = vector.extract_strided_slice %44 {offsets = [0, 0], sizes = [8, 16], strides = [1, 1]} : vector<8x64xf32> to vector<8x16xf32>
    %47 = vector.extract_strided_slice %44 {offsets = [0, 16], sizes = [8, 16], strides = [1, 1]} : vector<8x64xf32> to vector<8x16xf32>
    %48 = vector.extract_strided_slice %45 {offsets = [0, 32], sizes = [8, 16], strides = [1, 1]} : vector<8x64xf32> to vector<8x16xf32>
    %49 = vector.extract_strided_slice %44 {offsets = [0, 48], sizes = [8, 16], strides = [1, 1]} : vector<8x64xf32> to vector<8x16xf32>
    %50 = arith.mulf %47, %13 : vector<8x16xf32>
    %51 = arith.mulf %46, %48 : vector<8x16xf32>
    %52 = arith.addf %50, %51 : vector<8x16xf32>
    %53 = math.tanh %52 : vector<8x16xf32>
    %54 = arith.mulf %49, %53 : vector<8x16xf32>
    %c1_i32 = arith.constant 1 : i32
    %cst_23 = arith.constant dense<0.000000e+00> : vector<8x64xf32>
    %55 = tpu.matmul %54, %11, %cst_23 {dimension_numbers = #tpu.dot_dimension_numbers<[1], [0], [0], [1], [0, 0, 1, 1], [], []>} : vector<8x16xf32>, vector<16x64xf32>, vector<8x64xf32> -> vector<8x64xf32>
    %c8_i32_24 = arith.constant 8 : i32
    %56 = arith.muli %c1_i32, %c8_i32_24 : i32
    %57 = tpu.assume_multiple %56, 8 : i32
    %58 = arith.index_cast %57 : i32 to index
    %c0_25 = arith.constant 0 : index
    %59 = vector.load %arg16[%58, %c0_25] : memref<64x64xf32, #tpu.memory_space<vmem>>, vector<8x64xf32>
    %cst_26 = arith.constant dense<0.000000e+00> : vector<8x64xf32>
    %60 = tpu.matmul %35, %9, %cst_26 {dimension_numbers = #tpu.dot_dimension_numbers<[1], [0], [0], [1], [0, 0, 1, 1], [], []>} : vector<8x16xf32>, vector<16x64xf32>, vector<8x64xf32> -> vector<8x64xf32>
    %61 = arith.addf %59, %60 : vector<8x64xf32>
    %62 = arith.negf %61 : vector<8x64xf32>
    %63 = math.exp %62 : vector<8x64xf32>
    %cst_27 = arith.constant 1.000000e+00 : f32
    %64 = vector.broadcast %cst_27 : f32 to vector<8x64xf32>
    %65 = arith.addf %64, %63 : vector<8x64xf32>
    %66 = arith.divf %64, %65 : vector<8x64xf32>
    %67 = math.tanh %61 : vector<8x64xf32>
    %68 = vector.extract_strided_slice %66 {offsets = [0, 0], sizes = [8, 16], strides = [1, 1]} : vector<8x64xf32> to vector<8x16xf32>
    %69 = vector.extract_strided_slice %66 {offsets = [0, 16], sizes = [8, 16], strides = [1, 1]} : vector<8x64xf32> to vector<8x16xf32>
    %70 = vector.extract_strided_slice %67 {offsets = [0, 32], sizes = [8, 16], strides = [1, 1]} : vector<8x64xf32> to vector<8x16xf32>
    %71 = vector.extract_strided_slice %66 {offsets = [0, 48], sizes = [8, 16], strides = [1, 1]} : vector<8x64xf32> to vector<8x16xf32>
    %72 = arith.mulf %69, %33 : vector<8x16xf32>
    %73 = arith.mulf %68, %70 : vector<8x16xf32>
    %74 = arith.addf %72, %73 : vector<8x16xf32>
    %75 = math.tanh %74 : vector<8x16xf32>
    %76 = arith.mulf %71, %75 : vector<8x16xf32>
    %cst_28 = arith.constant dense<0.000000e+00> : vector<8x64xf32>
    %77 = tpu.matmul %76, %10, %cst_28 {dimension_numbers = #tpu.dot_dimension_numbers<[1], [0], [0], [1], [0, 0, 1, 1], [], []>} : vector<8x16xf32>, vector<16x64xf32>, vector<8x64xf32> -> vector<8x64xf32>
    %78 = arith.addf %55, %77 : vector<8x64xf32>
    %79 = vector.broadcast %12 : vector<1x64xf32> to vector<8x64xf32>
    %80 = arith.addf %78, %79 : vector<8x64xf32>
    %81 = arith.negf %80 : vector<8x64xf32>
    %82 = math.exp %81 : vector<8x64xf32>
    %cst_29 = arith.constant 1.000000e+00 : f32
    %83 = vector.broadcast %cst_29 : f32 to vector<8x64xf32>
    %84 = arith.addf %83, %82 : vector<8x64xf32>
    %85 = arith.divf %83, %84 : vector<8x64xf32>
    %86 = math.tanh %80 : vector<8x64xf32>
    %87 = vector.extract_strided_slice %85 {offsets = [0, 0], sizes = [8, 16], strides = [1, 1]} : vector<8x64xf32> to vector<8x16xf32>
    %88 = vector.extract_strided_slice %85 {offsets = [0, 16], sizes = [8, 16], strides = [1, 1]} : vector<8x64xf32> to vector<8x16xf32>
    %89 = vector.extract_strided_slice %86 {offsets = [0, 32], sizes = [8, 16], strides = [1, 1]} : vector<8x64xf32> to vector<8x16xf32>
    %90 = vector.extract_strided_slice %85 {offsets = [0, 48], sizes = [8, 16], strides = [1, 1]} : vector<8x64xf32> to vector<8x16xf32>
    %91 = arith.mulf %88, %52 : vector<8x16xf32>
    %92 = arith.mulf %87, %89 : vector<8x16xf32>
    %93 = arith.addf %91, %92 : vector<8x16xf32>
    %94 = math.tanh %93 : vector<8x16xf32>
    %95 = arith.mulf %90, %94 : vector<8x16xf32>
    %c2_i32 = arith.constant 2 : i32
    %cst_30 = arith.constant dense<0.000000e+00> : vector<8x64xf32>
    %96 = tpu.matmul %95, %11, %cst_30 {dimension_numbers = #tpu.dot_dimension_numbers<[1], [0], [0], [1], [0, 0, 1, 1], [], []>} : vector<8x16xf32>, vector<16x64xf32>, vector<8x64xf32> -> vector<8x64xf32>
    %c8_i32_31 = arith.constant 8 : i32
    %97 = arith.muli %c2_i32, %c8_i32_31 : i32
    %98 = tpu.assume_multiple %97, 8 : i32
    %99 = arith.index_cast %98 : i32 to index
    %c0_32 = arith.constant 0 : index
    %100 = vector.load %arg16[%99, %c0_32] : memref<64x64xf32, #tpu.memory_space<vmem>>, vector<8x64xf32>
    %cst_33 = arith.constant dense<0.000000e+00> : vector<8x64xf32>
    %101 = tpu.matmul %76, %9, %cst_33 {dimension_numbers = #tpu.dot_dimension_numbers<[1], [0], [0], [1], [0, 0, 1, 1], [], []>} : vector<8x16xf32>, vector<16x64xf32>, vector<8x64xf32> -> vector<8x64xf32>
    %102 = arith.addf %100, %101 : vector<8x64xf32>
    %103 = arith.negf %102 : vector<8x64xf32>
    %104 = math.exp %103 : vector<8x64xf32>
    %cst_34 = arith.constant 1.000000e+00 : f32
    %105 = vector.broadcast %cst_34 : f32 to vector<8x64xf32>
    %106 = arith.addf %105, %104 : vector<8x64xf32>
    %107 = arith.divf %105, %106 : vector<8x64xf32>
    %108 = math.tanh %102 : vector<8x64xf32>
    %109 = vector.extract_strided_slice %107 {offsets = [0, 0], sizes = [8, 16], strides = [1, 1]} : vector<8x64xf32> to vector<8x16xf32>
    %110 = vector.extract_strided_slice %107 {offsets = [0, 16], sizes = [8, 16], strides = [1, 1]} : vector<8x64xf32> to vector<8x16xf32>
    %111 = vector.extract_strided_slice %108 {offsets = [0, 32], sizes = [8, 16], strides = [1, 1]} : vector<8x64xf32> to vector<8x16xf32>
    %112 = vector.extract_strided_slice %107 {offsets = [0, 48], sizes = [8, 16], strides = [1, 1]} : vector<8x64xf32> to vector<8x16xf32>
    %113 = arith.mulf %110, %74 : vector<8x16xf32>
    %114 = arith.mulf %109, %111 : vector<8x16xf32>
    %115 = arith.addf %113, %114 : vector<8x16xf32>
    %116 = math.tanh %115 : vector<8x16xf32>
    %117 = arith.mulf %112, %116 : vector<8x16xf32>
    %cst_35 = arith.constant dense<0.000000e+00> : vector<8x64xf32>
    %118 = tpu.matmul %117, %10, %cst_35 {dimension_numbers = #tpu.dot_dimension_numbers<[1], [0], [0], [1], [0, 0, 1, 1], [], []>} : vector<8x16xf32>, vector<16x64xf32>, vector<8x64xf32> -> vector<8x64xf32>
    %119 = arith.addf %96, %118 : vector<8x64xf32>
    %120 = vector.broadcast %12 : vector<1x64xf32> to vector<8x64xf32>
    %121 = arith.addf %119, %120 : vector<8x64xf32>
    %122 = arith.negf %121 : vector<8x64xf32>
    %123 = math.exp %122 : vector<8x64xf32>
    %cst_36 = arith.constant 1.000000e+00 : f32
    %124 = vector.broadcast %cst_36 : f32 to vector<8x64xf32>
    %125 = arith.addf %124, %123 : vector<8x64xf32>
    %126 = arith.divf %124, %125 : vector<8x64xf32>
    %127 = math.tanh %121 : vector<8x64xf32>
    %128 = vector.extract_strided_slice %126 {offsets = [0, 0], sizes = [8, 16], strides = [1, 1]} : vector<8x64xf32> to vector<8x16xf32>
    %129 = vector.extract_strided_slice %126 {offsets = [0, 16], sizes = [8, 16], strides = [1, 1]} : vector<8x64xf32> to vector<8x16xf32>
    %130 = vector.extract_strided_slice %127 {offsets = [0, 32], sizes = [8, 16], strides = [1, 1]} : vector<8x64xf32> to vector<8x16xf32>
    %131 = vector.extract_strided_slice %126 {offsets = [0, 48], sizes = [8, 16], strides = [1, 1]} : vector<8x64xf32> to vector<8x16xf32>
    %132 = arith.mulf %129, %93 : vector<8x16xf32>
    %133 = arith.mulf %128, %130 : vector<8x16xf32>
    %134 = arith.addf %132, %133 : vector<8x16xf32>
    %135 = math.tanh %134 : vector<8x16xf32>
    %136 = arith.mulf %131, %135 : vector<8x16xf32>
    %c3_i32 = arith.constant 3 : i32
    %cst_37 = arith.constant dense<0.000000e+00> : vector<8x64xf32>
    %137 = tpu.matmul %136, %11, %cst_37 {dimension_numbers = #tpu.dot_dimension_numbers<[1], [0], [0], [1], [0, 0, 1, 1], [], []>} : vector<8x16xf32>, vector<16x64xf32>, vector<8x64xf32> -> vector<8x64xf32>
    %c8_i32_38 = arith.constant 8 : i32
    %138 = arith.muli %c3_i32, %c8_i32_38 : i32
    %139 = tpu.assume_multiple %138, 8 : i32
    %140 = arith.index_cast %139 : i32 to index
    %c0_39 = arith.constant 0 : index
    %141 = vector.load %arg16[%140, %c0_39] : memref<64x64xf32, #tpu.memory_space<vmem>>, vector<8x64xf32>
    %cst_40 = arith.constant dense<0.000000e+00> : vector<8x64xf32>
    %142 = tpu.matmul %117, %9, %cst_40 {dimension_numbers = #tpu.dot_dimension_numbers<[1], [0], [0], [1], [0, 0, 1, 1], [], []>} : vector<8x16xf32>, vector<16x64xf32>, vector<8x64xf32> -> vector<8x64xf32>
    %143 = arith.addf %141, %142 : vector<8x64xf32>
    %144 = arith.negf %143 : vector<8x64xf32>
    %145 = math.exp %144 : vector<8x64xf32>
    %cst_41 = arith.constant 1.000000e+00 : f32
    %146 = vector.broadcast %cst_41 : f32 to vector<8x64xf32>
    %147 = arith.addf %146, %145 : vector<8x64xf32>
    %148 = arith.divf %146, %147 : vector<8x64xf32>
    %149 = math.tanh %143 : vector<8x64xf32>
    %150 = vector.extract_strided_slice %148 {offsets = [0, 0], sizes = [8, 16], strides = [1, 1]} : vector<8x64xf32> to vector<8x16xf32>
    %151 = vector.extract_strided_slice %148 {offsets = [0, 16], sizes = [8, 16], strides = [1, 1]} : vector<8x64xf32> to vector<8x16xf32>
    %152 = vector.extract_strided_slice %149 {offsets = [0, 32], sizes = [8, 16], strides = [1, 1]} : vector<8x64xf32> to vector<8x16xf32>
    %153 = vector.extract_strided_slice %148 {offsets = [0, 48], sizes = [8, 16], strides = [1, 1]} : vector<8x64xf32> to vector<8x16xf32>
    %154 = arith.mulf %151, %115 : vector<8x16xf32>
    %155 = arith.mulf %150, %152 : vector<8x16xf32>
    %156 = arith.addf %154, %155 : vector<8x16xf32>
    %157 = math.tanh %156 : vector<8x16xf32>
    %158 = arith.mulf %153, %157 : vector<8x16xf32>
    %cst_42 = arith.constant dense<0.000000e+00> : vector<8x64xf32>
    %159 = tpu.matmul %158, %10, %cst_42 {dimension_numbers = #tpu.dot_dimension_numbers<[1], [0], [0], [1], [0, 0, 1, 1], [], []>} : vector<8x16xf32>, vector<16x64xf32>, vector<8x64xf32> -> vector<8x64xf32>
    %160 = arith.addf %137, %159 : vector<8x64xf32>
    %161 = vector.broadcast %12 : vector<1x64xf32> to vector<8x64xf32>
    %162 = arith.addf %160, %161 : vector<8x64xf32>
    %163 = arith.negf %162 : vector<8x64xf32>
    %164 = math.exp %163 : vector<8x64xf32>
    %cst_43 = arith.constant 1.000000e+00 : f32
    %165 = vector.broadcast %cst_43 : f32 to vector<8x64xf32>
    %166 = arith.addf %165, %164 : vector<8x64xf32>
    %167 = arith.divf %165, %166 : vector<8x64xf32>
    %168 = math.tanh %162 : vector<8x64xf32>
    %169 = vector.extract_strided_slice %167 {offsets = [0, 0], sizes = [8, 16], strides = [1, 1]} : vector<8x64xf32> to vector<8x16xf32>
    %170 = vector.extract_strided_slice %167 {offsets = [0, 16], sizes = [8, 16], strides = [1, 1]} : vector<8x64xf32> to vector<8x16xf32>
    %171 = vector.extract_strided_slice %168 {offsets = [0, 32], sizes = [8, 16], strides = [1, 1]} : vector<8x64xf32> to vector<8x16xf32>
    %172 = vector.extract_strided_slice %167 {offsets = [0, 48], sizes = [8, 16], strides = [1, 1]} : vector<8x64xf32> to vector<8x16xf32>
    %173 = arith.mulf %170, %134 : vector<8x16xf32>
    %174 = arith.mulf %169, %171 : vector<8x16xf32>
    %175 = arith.addf %173, %174 : vector<8x16xf32>
    %176 = math.tanh %175 : vector<8x16xf32>
    %177 = arith.mulf %172, %176 : vector<8x16xf32>
    %c4_i32 = arith.constant 4 : i32
    %cst_44 = arith.constant dense<0.000000e+00> : vector<8x64xf32>
    %178 = tpu.matmul %177, %11, %cst_44 {dimension_numbers = #tpu.dot_dimension_numbers<[1], [0], [0], [1], [0, 0, 1, 1], [], []>} : vector<8x16xf32>, vector<16x64xf32>, vector<8x64xf32> -> vector<8x64xf32>
    %c8_i32_45 = arith.constant 8 : i32
    %179 = arith.muli %c4_i32, %c8_i32_45 : i32
    %180 = tpu.assume_multiple %179, 8 : i32
    %181 = arith.index_cast %180 : i32 to index
    %c0_46 = arith.constant 0 : index
    %182 = vector.load %arg16[%181, %c0_46] : memref<64x64xf32, #tpu.memory_space<vmem>>, vector<8x64xf32>
    %cst_47 = arith.constant dense<0.000000e+00> : vector<8x64xf32>
    %183 = tpu.matmul %158, %9, %cst_47 {dimension_numbers = #tpu.dot_dimension_numbers<[1], [0], [0], [1], [0, 0, 1, 1], [], []>} : vector<8x16xf32>, vector<16x64xf32>, vector<8x64xf32> -> vector<8x64xf32>
    %184 = arith.addf %182, %183 : vector<8x64xf32>
    %185 = arith.negf %184 : vector<8x64xf32>
    %186 = math.exp %185 : vector<8x64xf32>
    %cst_48 = arith.constant 1.000000e+00 : f32
    %187 = vector.broadcast %cst_48 : f32 to vector<8x64xf32>
    %188 = arith.addf %187, %186 : vector<8x64xf32>
    %189 = arith.divf %187, %188 : vector<8x64xf32>
    %190 = math.tanh %184 : vector<8x64xf32>
    %191 = vector.extract_strided_slice %189 {offsets = [0, 0], sizes = [8, 16], strides = [1, 1]} : vector<8x64xf32> to vector<8x16xf32>
    %192 = vector.extract_strided_slice %189 {offsets = [0, 16], sizes = [8, 16], strides = [1, 1]} : vector<8x64xf32> to vector<8x16xf32>
    %193 = vector.extract_strided_slice %190 {offsets = [0, 32], sizes = [8, 16], strides = [1, 1]} : vector<8x64xf32> to vector<8x16xf32>
    %194 = vector.extract_strided_slice %189 {offsets = [0, 48], sizes = [8, 16], strides = [1, 1]} : vector<8x64xf32> to vector<8x16xf32>
    %195 = arith.mulf %192, %156 : vector<8x16xf32>
    %196 = arith.mulf %191, %193 : vector<8x16xf32>
    %197 = arith.addf %195, %196 : vector<8x16xf32>
    %198 = math.tanh %197 : vector<8x16xf32>
    %199 = arith.mulf %194, %198 : vector<8x16xf32>
    %cst_49 = arith.constant dense<0.000000e+00> : vector<8x64xf32>
    %200 = tpu.matmul %199, %10, %cst_49 {dimension_numbers = #tpu.dot_dimension_numbers<[1], [0], [0], [1], [0, 0, 1, 1], [], []>} : vector<8x16xf32>, vector<16x64xf32>, vector<8x64xf32> -> vector<8x64xf32>
    %201 = arith.addf %178, %200 : vector<8x64xf32>
    %202 = vector.broadcast %12 : vector<1x64xf32> to vector<8x64xf32>
    %203 = arith.addf %201, %202 : vector<8x64xf32>
    %204 = arith.negf %203 : vector<8x64xf32>
    %205 = math.exp %204 : vector<8x64xf32>
    %cst_50 = arith.constant 1.000000e+00 : f32
    %206 = vector.broadcast %cst_50 : f32 to vector<8x64xf32>
    %207 = arith.addf %206, %205 : vector<8x64xf32>
    %208 = arith.divf %206, %207 : vector<8x64xf32>
    %209 = math.tanh %203 : vector<8x64xf32>
    %210 = vector.extract_strided_slice %208 {offsets = [0, 0], sizes = [8, 16], strides = [1, 1]} : vector<8x64xf32> to vector<8x16xf32>
    %211 = vector.extract_strided_slice %208 {offsets = [0, 16], sizes = [8, 16], strides = [1, 1]} : vector<8x64xf32> to vector<8x16xf32>
    %212 = vector.extract_strided_slice %209 {offsets = [0, 32], sizes = [8, 16], strides = [1, 1]} : vector<8x64xf32> to vector<8x16xf32>
    %213 = vector.extract_strided_slice %208 {offsets = [0, 48], sizes = [8, 16], strides = [1, 1]} : vector<8x64xf32> to vector<8x16xf32>
    %214 = arith.mulf %211, %175 : vector<8x16xf32>
    %215 = arith.mulf %210, %212 : vector<8x16xf32>
    %216 = arith.addf %214, %215 : vector<8x16xf32>
    %217 = math.tanh %216 : vector<8x16xf32>
    %218 = arith.mulf %213, %217 : vector<8x16xf32>
    %c5_i32 = arith.constant 5 : i32
    %cst_51 = arith.constant dense<0.000000e+00> : vector<8x64xf32>
    %219 = tpu.matmul %218, %11, %cst_51 {dimension_numbers = #tpu.dot_dimension_numbers<[1], [0], [0], [1], [0, 0, 1, 1], [], []>} : vector<8x16xf32>, vector<16x64xf32>, vector<8x64xf32> -> vector<8x64xf32>
    %c8_i32_52 = arith.constant 8 : i32
    %220 = arith.muli %c5_i32, %c8_i32_52 : i32
    %221 = tpu.assume_multiple %220, 8 : i32
    %222 = arith.index_cast %221 : i32 to index
    %c0_53 = arith.constant 0 : index
    %223 = vector.load %arg16[%222, %c0_53] : memref<64x64xf32, #tpu.memory_space<vmem>>, vector<8x64xf32>
    %cst_54 = arith.constant dense<0.000000e+00> : vector<8x64xf32>
    %224 = tpu.matmul %199, %9, %cst_54 {dimension_numbers = #tpu.dot_dimension_numbers<[1], [0], [0], [1], [0, 0, 1, 1], [], []>} : vector<8x16xf32>, vector<16x64xf32>, vector<8x64xf32> -> vector<8x64xf32>
    %225 = arith.addf %223, %224 : vector<8x64xf32>
    %226 = arith.negf %225 : vector<8x64xf32>
    %227 = math.exp %226 : vector<8x64xf32>
    %cst_55 = arith.constant 1.000000e+00 : f32
    %228 = vector.broadcast %cst_55 : f32 to vector<8x64xf32>
    %229 = arith.addf %228, %227 : vector<8x64xf32>
    %230 = arith.divf %228, %229 : vector<8x64xf32>
    %231 = math.tanh %225 : vector<8x64xf32>
    %232 = vector.extract_strided_slice %230 {offsets = [0, 0], sizes = [8, 16], strides = [1, 1]} : vector<8x64xf32> to vector<8x16xf32>
    %233 = vector.extract_strided_slice %230 {offsets = [0, 16], sizes = [8, 16], strides = [1, 1]} : vector<8x64xf32> to vector<8x16xf32>
    %234 = vector.extract_strided_slice %231 {offsets = [0, 32], sizes = [8, 16], strides = [1, 1]} : vector<8x64xf32> to vector<8x16xf32>
    %235 = vector.extract_strided_slice %230 {offsets = [0, 48], sizes = [8, 16], strides = [1, 1]} : vector<8x64xf32> to vector<8x16xf32>
    %236 = arith.mulf %233, %197 : vector<8x16xf32>
    %237 = arith.mulf %232, %234 : vector<8x16xf32>
    %238 = arith.addf %236, %237 : vector<8x16xf32>
    %239 = math.tanh %238 : vector<8x16xf32>
    %240 = arith.mulf %235, %239 : vector<8x16xf32>
    %cst_56 = arith.constant dense<0.000000e+00> : vector<8x64xf32>
    %241 = tpu.matmul %240, %10, %cst_56 {dimension_numbers = #tpu.dot_dimension_numbers<[1], [0], [0], [1], [0, 0, 1, 1], [], []>} : vector<8x16xf32>, vector<16x64xf32>, vector<8x64xf32> -> vector<8x64xf32>
    %242 = arith.addf %219, %241 : vector<8x64xf32>
    %243 = vector.broadcast %12 : vector<1x64xf32> to vector<8x64xf32>
    %244 = arith.addf %242, %243 : vector<8x64xf32>
    %245 = arith.negf %244 : vector<8x64xf32>
    %246 = math.exp %245 : vector<8x64xf32>
    %cst_57 = arith.constant 1.000000e+00 : f32
    %247 = vector.broadcast %cst_57 : f32 to vector<8x64xf32>
    %248 = arith.addf %247, %246 : vector<8x64xf32>
    %249 = arith.divf %247, %248 : vector<8x64xf32>
    %250 = math.tanh %244 : vector<8x64xf32>
    %251 = vector.extract_strided_slice %249 {offsets = [0, 0], sizes = [8, 16], strides = [1, 1]} : vector<8x64xf32> to vector<8x16xf32>
    %252 = vector.extract_strided_slice %249 {offsets = [0, 16], sizes = [8, 16], strides = [1, 1]} : vector<8x64xf32> to vector<8x16xf32>
    %253 = vector.extract_strided_slice %250 {offsets = [0, 32], sizes = [8, 16], strides = [1, 1]} : vector<8x64xf32> to vector<8x16xf32>
    %254 = vector.extract_strided_slice %249 {offsets = [0, 48], sizes = [8, 16], strides = [1, 1]} : vector<8x64xf32> to vector<8x16xf32>
    %255 = arith.mulf %252, %216 : vector<8x16xf32>
    %256 = arith.mulf %251, %253 : vector<8x16xf32>
    %257 = arith.addf %255, %256 : vector<8x16xf32>
    %258 = math.tanh %257 : vector<8x16xf32>
    %259 = arith.mulf %254, %258 : vector<8x16xf32>
    %c6_i32 = arith.constant 6 : i32
    %cst_58 = arith.constant dense<0.000000e+00> : vector<8x64xf32>
    %260 = tpu.matmul %259, %11, %cst_58 {dimension_numbers = #tpu.dot_dimension_numbers<[1], [0], [0], [1], [0, 0, 1, 1], [], []>} : vector<8x16xf32>, vector<16x64xf32>, vector<8x64xf32> -> vector<8x64xf32>
    %c8_i32_59 = arith.constant 8 : i32
    %261 = arith.muli %c6_i32, %c8_i32_59 : i32
    %262 = tpu.assume_multiple %261, 8 : i32
    %263 = arith.index_cast %262 : i32 to index
    %c0_60 = arith.constant 0 : index
    %264 = vector.load %arg16[%263, %c0_60] : memref<64x64xf32, #tpu.memory_space<vmem>>, vector<8x64xf32>
    %cst_61 = arith.constant dense<0.000000e+00> : vector<8x64xf32>
    %265 = tpu.matmul %240, %9, %cst_61 {dimension_numbers = #tpu.dot_dimension_numbers<[1], [0], [0], [1], [0, 0, 1, 1], [], []>} : vector<8x16xf32>, vector<16x64xf32>, vector<8x64xf32> -> vector<8x64xf32>
    %266 = arith.addf %264, %265 : vector<8x64xf32>
    %267 = arith.negf %266 : vector<8x64xf32>
    %268 = math.exp %267 : vector<8x64xf32>
    %cst_62 = arith.constant 1.000000e+00 : f32
    %269 = vector.broadcast %cst_62 : f32 to vector<8x64xf32>
    %270 = arith.addf %269, %268 : vector<8x64xf32>
    %271 = arith.divf %269, %270 : vector<8x64xf32>
    %272 = math.tanh %266 : vector<8x64xf32>
    %273 = vector.extract_strided_slice %271 {offsets = [0, 0], sizes = [8, 16], strides = [1, 1]} : vector<8x64xf32> to vector<8x16xf32>
    %274 = vector.extract_strided_slice %271 {offsets = [0, 16], sizes = [8, 16], strides = [1, 1]} : vector<8x64xf32> to vector<8x16xf32>
    %275 = vector.extract_strided_slice %272 {offsets = [0, 32], sizes = [8, 16], strides = [1, 1]} : vector<8x64xf32> to vector<8x16xf32>
    %276 = vector.extract_strided_slice %271 {offsets = [0, 48], sizes = [8, 16], strides = [1, 1]} : vector<8x64xf32> to vector<8x16xf32>
    %277 = arith.mulf %274, %238 : vector<8x16xf32>
    %278 = arith.mulf %273, %275 : vector<8x16xf32>
    %279 = arith.addf %277, %278 : vector<8x16xf32>
    %280 = math.tanh %279 : vector<8x16xf32>
    %281 = arith.mulf %276, %280 : vector<8x16xf32>
    %cst_63 = arith.constant dense<0.000000e+00> : vector<8x64xf32>
    %282 = tpu.matmul %281, %10, %cst_63 {dimension_numbers = #tpu.dot_dimension_numbers<[1], [0], [0], [1], [0, 0, 1, 1], [], []>} : vector<8x16xf32>, vector<16x64xf32>, vector<8x64xf32> -> vector<8x64xf32>
    %283 = arith.addf %260, %282 : vector<8x64xf32>
    %284 = vector.broadcast %12 : vector<1x64xf32> to vector<8x64xf32>
    %285 = arith.addf %283, %284 : vector<8x64xf32>
    %286 = arith.negf %285 : vector<8x64xf32>
    %287 = math.exp %286 : vector<8x64xf32>
    %cst_64 = arith.constant 1.000000e+00 : f32
    %288 = vector.broadcast %cst_64 : f32 to vector<8x64xf32>
    %289 = arith.addf %288, %287 : vector<8x64xf32>
    %290 = arith.divf %288, %289 : vector<8x64xf32>
    %291 = math.tanh %285 : vector<8x64xf32>
    %292 = vector.extract_strided_slice %290 {offsets = [0, 0], sizes = [8, 16], strides = [1, 1]} : vector<8x64xf32> to vector<8x16xf32>
    %293 = vector.extract_strided_slice %290 {offsets = [0, 16], sizes = [8, 16], strides = [1, 1]} : vector<8x64xf32> to vector<8x16xf32>
    %294 = vector.extract_strided_slice %291 {offsets = [0, 32], sizes = [8, 16], strides = [1, 1]} : vector<8x64xf32> to vector<8x16xf32>
    %295 = vector.extract_strided_slice %290 {offsets = [0, 48], sizes = [8, 16], strides = [1, 1]} : vector<8x64xf32> to vector<8x16xf32>
    %296 = arith.mulf %293, %257 : vector<8x16xf32>
    %297 = arith.mulf %292, %294 : vector<8x16xf32>
    %298 = arith.addf %296, %297 : vector<8x16xf32>
    %299 = math.tanh %298 : vector<8x16xf32>
    %300 = arith.mulf %295, %299 : vector<8x16xf32>
    %c7_i32 = arith.constant 7 : i32
    %cst_65 = arith.constant dense<0.000000e+00> : vector<8x64xf32>
    %301 = tpu.matmul %300, %11, %cst_65 {dimension_numbers = #tpu.dot_dimension_numbers<[1], [0], [0], [1], [0, 0, 1, 1], [], []>} : vector<8x16xf32>, vector<16x64xf32>, vector<8x64xf32> -> vector<8x64xf32>
    %c8_i32_66 = arith.constant 8 : i32
    %302 = arith.muli %c7_i32, %c8_i32_66 : i32
    %303 = tpu.assume_multiple %302, 8 : i32
    %304 = arith.index_cast %303 : i32 to index
    %c0_67 = arith.constant 0 : index
    %305 = vector.load %arg16[%304, %c0_67] : memref<64x64xf32, #tpu.memory_space<vmem>>, vector<8x64xf32>
    %cst_68 = arith.constant dense<0.000000e+00> : vector<8x64xf32>
    %306 = tpu.matmul %281, %9, %cst_68 {dimension_numbers = #tpu.dot_dimension_numbers<[1], [0], [0], [1], [0, 0, 1, 1], [], []>} : vector<8x16xf32>, vector<16x64xf32>, vector<8x64xf32> -> vector<8x64xf32>
    %307 = arith.addf %305, %306 : vector<8x64xf32>
    %308 = arith.negf %307 : vector<8x64xf32>
    %309 = math.exp %308 : vector<8x64xf32>
    %cst_69 = arith.constant 1.000000e+00 : f32
    %310 = vector.broadcast %cst_69 : f32 to vector<8x64xf32>
    %311 = arith.addf %310, %309 : vector<8x64xf32>
    %312 = arith.divf %310, %311 : vector<8x64xf32>
    %313 = math.tanh %307 : vector<8x64xf32>
    %314 = vector.extract_strided_slice %312 {offsets = [0, 0], sizes = [8, 16], strides = [1, 1]} : vector<8x64xf32> to vector<8x16xf32>
    %315 = vector.extract_strided_slice %312 {offsets = [0, 16], sizes = [8, 16], strides = [1, 1]} : vector<8x64xf32> to vector<8x16xf32>
    %316 = vector.extract_strided_slice %313 {offsets = [0, 32], sizes = [8, 16], strides = [1, 1]} : vector<8x64xf32> to vector<8x16xf32>
    %317 = vector.extract_strided_slice %312 {offsets = [0, 48], sizes = [8, 16], strides = [1, 1]} : vector<8x64xf32> to vector<8x16xf32>
    %318 = arith.mulf %315, %279 : vector<8x16xf32>
    %319 = arith.mulf %314, %316 : vector<8x16xf32>
    %320 = arith.addf %318, %319 : vector<8x16xf32>
    %321 = math.tanh %320 : vector<8x16xf32>
    %322 = arith.mulf %317, %321 : vector<8x16xf32>
    %cst_70 = arith.constant dense<0.000000e+00> : vector<8x64xf32>
    %323 = tpu.matmul %322, %10, %cst_70 {dimension_numbers = #tpu.dot_dimension_numbers<[1], [0], [0], [1], [0, 0, 1, 1], [], []>} : vector<8x16xf32>, vector<16x64xf32>, vector<8x64xf32> -> vector<8x64xf32>
    %324 = arith.addf %301, %323 : vector<8x64xf32>
    %325 = vector.broadcast %12 : vector<1x64xf32> to vector<8x64xf32>
    %326 = arith.addf %324, %325 : vector<8x64xf32>
    %327 = arith.negf %326 : vector<8x64xf32>
    %328 = math.exp %327 : vector<8x64xf32>
    %cst_71 = arith.constant 1.000000e+00 : f32
    %329 = vector.broadcast %cst_71 : f32 to vector<8x64xf32>
    %330 = arith.addf %329, %328 : vector<8x64xf32>
    %331 = arith.divf %329, %330 : vector<8x64xf32>
    %332 = math.tanh %326 : vector<8x64xf32>
    %333 = vector.extract_strided_slice %331 {offsets = [0, 0], sizes = [8, 16], strides = [1, 1]} : vector<8x64xf32> to vector<8x16xf32>
    %334 = vector.extract_strided_slice %331 {offsets = [0, 16], sizes = [8, 16], strides = [1, 1]} : vector<8x64xf32> to vector<8x16xf32>
    %335 = vector.extract_strided_slice %332 {offsets = [0, 32], sizes = [8, 16], strides = [1, 1]} : vector<8x64xf32> to vector<8x16xf32>
    %336 = vector.extract_strided_slice %331 {offsets = [0, 48], sizes = [8, 16], strides = [1, 1]} : vector<8x64xf32> to vector<8x16xf32>
    %337 = arith.mulf %334, %298 : vector<8x16xf32>
    %338 = arith.mulf %333, %335 : vector<8x16xf32>
    %339 = arith.addf %337, %338 : vector<8x16xf32>
    %340 = math.tanh %339 : vector<8x16xf32>
    %341 = arith.mulf %336, %340 : vector<8x16xf32>
    %c8_i32_72 = arith.constant 8 : i32
    %c0_73 = arith.constant 0 : index
    %c0_74 = arith.constant 0 : index
    %342 = vector.load %arg15[%c0_73, %c0_74] : memref<8x16xf32, #tpu.memory_space<vmem>>, vector<8x16xf32>
    tpu.vector_store %arg15[%c0_73, %c0_74], %341 {strides = array<i32>} : memref<8x16xf32, #tpu.memory_space<vmem>>, vector<8x16xf32>,
    %c0_75 = arith.constant 0 : index
    %c0_76 = arith.constant 0 : index
    %343 = vector.load %arg8[%c0_75, %c0_76] : memref<16x8xf32, #tpu.memory_space<vmem>>, vector<16x8xf32>
    %cst_77 = arith.constant dense<0.000000e+00> : vector<8x8xf32>
    %344 = tpu.matmul %341, %343, %cst_77 {dimension_numbers = #tpu.dot_dimension_numbers<[1], [0], [0], [1], [0, 0, 1, 1], [], []>} : vector<8x16xf32>, vector<16x8xf32>, vector<8x8xf32> -> vector<8x8xf32>
    %c0_78 = arith.constant 0 : index
    %c0_79 = arith.constant 0 : index
    %345 = vector.load %arg9[%c0_78, %c0_79] : memref<1x8xf32, #tpu.memory_space<vmem>>, vector<1x8xf32>
    %346 = vector.broadcast %345 : vector<1x8xf32> to vector<8x8xf32>
    %347 = arith.addf %344, %346 : vector<8x8xf32>
    %cst_80 = arith.constant 0.000000e+00 : f32
    %348 = vector.broadcast %cst_80 : f32 to vector<8x8xf32>
    %349 = arith.maximumf %347, %348 : vector<8x8xf32>
    %c0_81 = arith.constant 0 : index
    %c0_82 = arith.constant 0 : index
    %350 = vector.load %arg10[%c0_81, %c0_82] : memref<8x4xf32, #tpu.memory_space<vmem>>, vector<8x4xf32>
    %cst_83 = arith.constant dense<0.000000e+00> : vector<8x4xf32>
    %351 = tpu.matmul %349, %350, %cst_83 {dimension_numbers = #tpu.dot_dimension_numbers<[1], [0], [0], [1], [0, 0, 1, 1], [], []>} : vector<8x8xf32>, vector<8x4xf32>, vector<8x4xf32> -> vector<8x4xf32>
    %c0_84 = arith.constant 0 : index
    %c0_85 = arith.constant 0 : index
    %352 = vector.load %arg11[%c0_84, %c0_85] : memref<1x4xf32, #tpu.memory_space<vmem>>, vector<1x4xf32>
    %353 = vector.broadcast %352 : vector<1x4xf32> to vector<8x4xf32>
    %354 = arith.addf %351, %353 : vector<8x4xf32>
    %cst_86 = arith.constant 0.000000e+00 : f32
    %355 = vector.broadcast %cst_86 : f32 to vector<8x4xf32>
    %356 = arith.maximumf %354, %355 : vector<8x4xf32>
    %c0_87 = arith.constant 0 : index
    %c0_88 = arith.constant 0 : index
    %357 = vector.load %arg12[%c0_87, %c0_88] : memref<4x3xf32, #tpu.memory_space<vmem>>, vector<4x3xf32>
    %cst_89 = arith.constant dense<0.000000e+00> : vector<8x3xf32>
    %358 = tpu.matmul %356, %357, %cst_89 {dimension_numbers = #tpu.dot_dimension_numbers<[1], [0], [0], [1], [0, 0, 1, 1], [], []>} : vector<8x4xf32>, vector<4x3xf32>, vector<8x3xf32> -> vector<8x3xf32>
    %c0_90 = arith.constant 0 : index
    %c0_91 = arith.constant 0 : index
    %359 = vector.load %arg13[%c0_90, %c0_91] : memref<1x3xf32, #tpu.memory_space<vmem>>, vector<1x3xf32>
    %360 = vector.broadcast %359 : vector<1x3xf32> to vector<8x3xf32>
    %361 = arith.addf %358, %360 : vector<8x3xf32>
    %c0_92 = arith.constant 0 : index
    %c0_93 = arith.constant 0 : index
    %362 = vector.load %arg14[%c0_92, %c0_93] : memref<8x3xf32, #tpu.memory_space<vmem>>, vector<8x3xf32>
    tpu.vector_store %arg14[%c0_92, %c0_93], %361 {strides = array<i32>} : memref<8x3xf32, #tpu.memory_space<vmem>>, vector<8x3xf32>,
    return
  }
  func.func @transform_0(%arg0: i32) -> (i32, i32, i32) {
    %c0_i32 = arith.constant 0 : i32
    %c0_i32_0 = arith.constant 0 : i32
    %c0_i32_1 = arith.constant 0 : i32
    return %arg0, %c0_i32, %c0_i32_0 : i32, i32, i32
  }
  func.func @transform_1(%arg0: i32) -> (i32, i32) {
    %c0_i32 = arith.constant 0 : i32
    %c0_i32_0 = arith.constant 0 : i32
    %c0_i32_1 = arith.constant 0 : i32
    return %c0_i32, %c0_i32_0 : i32, i32
  }
  func.func @transform_2(%arg0: i32) -> (i32, i32) {
    %c0_i32 = arith.constant 0 : i32
    %c0_i32_0 = arith.constant 0 : i32
    %c0_i32_1 = arith.constant 0 : i32
    return %c0_i32, %c0_i32_0 : i32, i32
  }
  func.func @transform_3(%arg0: i32) -> (i32, i32) {
    %c0_i32 = arith.constant 0 : i32
    %c0_i32_0 = arith.constant 0 : i32
    %c0_i32_1 = arith.constant 0 : i32
    return %c0_i32, %c0_i32_0 : i32, i32
  }
  func.func @transform_4(%arg0: i32) -> (i32, i32) {
    %c0_i32 = arith.constant 0 : i32
    %c0_i32_0 = arith.constant 0 : i32
    %c0_i32_1 = arith.constant 0 : i32
    return %c0_i32, %c0_i32_0 : i32, i32
  }
  func.func @transform_5(%arg0: i32) -> (i32, i32) {
    %c0_i32 = arith.constant 0 : i32
    %c0_i32_0 = arith.constant 0 : i32
    %c0_i32_1 = arith.constant 0 : i32
    return %c0_i32, %c0_i32_0 : i32, i32
  }
  func.func @transform_6(%arg0: i32) -> (i32, i32) {
    %c0_i32 = arith.constant 0 : i32
    %c0_i32_0 = arith.constant 0 : i32
    %c0_i32_1 = arith.constant 0 : i32
    return %c0_i32, %c0_i32_0 : i32, i32
  }
  func.func @transform_7(%arg0: i32) -> (i32, i32) {
    %c0_i32 = arith.constant 0 : i32
    %c0_i32_0 = arith.constant 0 : i32
    %c0_i32_1 = arith.constant 0 : i32
    return %c0_i32, %c0_i32_0 : i32, i32
  }
  func.func @transform_8(%arg0: i32) -> (i32, i32) {
    %c0_i32 = arith.constant 0 : i32
    %c0_i32_0 = arith.constant 0 : i32
    %c0_i32_1 = arith.constant 0 : i32
    return %c0_i32, %c0_i32_0 : i32, i32
  }
  func.func @transform_9(%arg0: i32) -> (i32, i32) {
    %c0_i32 = arith.constant 0 : i32
    %c0_i32_0 = arith.constant 0 : i32
    %c0_i32_1 = arith.constant 0 : i32
    return %c0_i32, %c0_i32_0 : i32, i32
  }
  func.func @transform_10(%arg0: i32) -> (i32, i32) {
    %c0_i32 = arith.constant 0 : i32
    %c0_i32_0 = arith.constant 0 : i32
    %c0_i32_1 = arith.constant 0 : i32
    return %c0_i32, %c0_i32_0 : i32, i32
  }
  func.func @transform_11(%arg0: i32) -> (i32, i32) {
    %c0_i32 = arith.constant 0 : i32
    %c0_i32_0 = arith.constant 0 : i32
    %c0_i32_1 = arith.constant 0 : i32
    return %c0_i32, %c0_i32_0 : i32, i32
  }
  func.func @transform_12(%arg0: i32) -> (i32, i32) {
    %c0_i32 = arith.constant 0 : i32
    %c0_i32_0 = arith.constant 0 : i32
    %c0_i32_1 = arith.constant 0 : i32
    return %c0_i32, %c0_i32_0 : i32, i32
  }
  func.func @transform_13(%arg0: i32) -> (i32, i32) {
    %c0_i32 = arith.constant 0 : i32
    %c0_i32_0 = arith.constant 0 : i32
    return %arg0, %c0_i32 : i32, i32
  }
  func.func @transform_14(%arg0: i32) -> (i32, i32) {
    %c0_i32 = arith.constant 0 : i32
    %c0_i32_0 = arith.constant 0 : i32
    return %arg0, %c0_i32 : i32, i32
  }
}

</mosaic_0001>

<llo_original>
// kernel: our_model_forward.1
$region0: #{our_model_forward.1}
  #allocation0 [shape = 'u32[]', space=smem, size = 0x4, offset = 0x4, fixed_abs, tag = 'smem constant byte address 0x4 - core index']
  #allocation1 [shape = 'u32[144,128]{1,0:T(1,128)}', space=vmem, size = 0x12000, scoped, tag = 'internal scratch']
  #allocation2 [shape = 'f32[64,64]{1,0:T(8,128)}', space=vmem, size = 0x8000, scoped, tag = 'scratch operand']
  %s0 = inlined_call_operand.vmem [shape: f32[8,8,112], index: 0, kind: input, shape index: {}]
  %s1 = inlined_call_operand.vmem [shape: f32[112,64], index: 1, kind: input, shape index: {}]
  %s2 = inlined_call_operand.vmem [shape: f32[1,64], index: 2, kind: input, shape index: {}]
  %s3 = inlined_call_operand.vmem [shape: f32[16,64], index: 3, kind: input, shape index: {}]
  %s4 = inlined_call_operand.vmem [shape: f32[16,64], index: 4, kind: input, shape index: {}]
  %s5 = inlined_call_operand.vmem [shape: f32[16,64], index: 5, kind: input, shape index: {}]
  %s6 = inlined_call_operand.vmem [shape: f32[1,64], index: 6, kind: input, shape index: {}]
  %s7 = inlined_call_operand.vmem [shape: f32[16,8], index: 7, kind: input, shape index: {}]
  %s8 = inlined_call_operand.vmem [shape: f32[1,8], index: 8, kind: input, shape index: {}]
  %s9 = inlined_call_operand.vmem [shape: f32[8,4], index: 9, kind: input, shape index: {}]
  %s10 = inlined_call_operand.vmem [shape: f32[1,4], index: 10, kind: input, shape index: {}]
  %s11 = inlined_call_operand.vmem [shape: f32[4,3], index: 11, kind: input, shape index: {}]
  %s12 = inlined_call_operand.vmem [shape: f32[1,3], index: 12, kind: input, shape index: {}]
  %s13 = inlined_call_operand.vmem [shape: f32[8,3], index: 13, kind: output, shape index: {0}]
  %s14 = inlined_call_operand.vmem [shape: f32[8,16], index: 14, kind: output, shape index: {1}]
  %15 = xla_tuple %s13, %s14
  %s16 = sld [smem:[#allocation0]]
  $region70: #{our_model_forward.1} parent=0
    _
  %s18 = ssub.s32 1, %s16
  %s19 = scalar_select 0, %s18, %s16
  // Predicated region
  $region2: #{our_model_forward.1} parent=0 // pred_check
    _
  $region3: #{our_model_forward.1} parent=0 // pred_check_branch
    %21 = sbr.rel (0) target = $region5
  $region4: #{our_model_forward.1} parent=0 // pred_region
    _
  $region5: #{our_model_forward.1} parent=0 // pred_fallthru
    _
  // Predicated region
  $region6: #{our_model_forward.1} parent=0 // pred_check
    _
  $region7: #{our_model_forward.1} parent=0 // pred_check_branch
    %23 = sbr.rel (0) target = $region9
  $region8: #{our_model_forward.1} parent=0 // pred_region
    _
  $region9: #{our_model_forward.1} parent=0 // pred_fallthru
    _
  // Predicated region
  $region10: #{our_model_forward.1} parent=0 // pred_check
    _
  $region11: #{our_model_forward.1} parent=0 // pred_check_branch
    %25 = sbr.rel (0) target = $region13
  $region12: #{our_model_forward.1} parent=0 // pred_region
    _
  $region13: #{our_model_forward.1} parent=0 // pred_fallthru
    _
  // Predicated region
  $region14: #{our_model_forward.1} parent=0 // pred_check
    _
  $region15: #{our_model_forward.1} parent=0 // pred_check_branch
    %27 = sbr.rel (0) target = $region17
  $region16: #{our_model_forward.1} parent=0 // pred_region
    _
  $region17: #{our_model_forward.1} parent=0 // pred_fallthru
    _
  // Predicated region
  $region18: #{our_model_forward.1} parent=0 // pred_check
    _
  $region19: #{our_model_forward.1} parent=0 // pred_check_branch
    %29 = sbr.rel (0) target = $region21
  $region20: #{our_model_forward.1} parent=0 // pred_region
    _
  $region21: #{our_model_forward.1} parent=0 // pred_fallthru
    _
  // Predicated region
  $region22: #{our_model_forward.1} parent=0 // pred_check
    _
  $region23: #{our_model_forward.1} parent=0 // pred_check_branch
    %31 = sbr.rel (0) target = $region25
  $region24: #{our_model_forward.1} parent=0 // pred_region
    _
  $region25: #{our_model_forward.1} parent=0 // pred_fallthru
    _
  // Predicated region
  $region26: #{our_model_forward.1} parent=0 // pred_check
    _
  $region27: #{our_model_forward.1} parent=0 // pred_check_branch
    %33 = sbr.rel (0) target = $region29
  $region28: #{our_model_forward.1} parent=0 // pred_region
    _
  $region29: #{our_model_forward.1} parent=0 // pred_fallthru
    _
  // Predicated region
  $region30: #{our_model_forward.1} parent=0 // pred_check
    _
  $region31: #{our_model_forward.1} parent=0 // pred_check_branch
    %35 = sbr.rel (0) target = $region33
  $region32: #{our_model_forward.1} parent=0 // pred_region
    _
  $region33: #{our_model_forward.1} parent=0 // pred_fallthru
    _
  // Predicated region
  $region34: #{our_model_forward.1} parent=0 // pred_check
    _
  $region35: #{our_model_forward.1} parent=0 // pred_check_branch
    %37 = sbr.rel (0) target = $region37
  $region36: #{our_model_forward.1} parent=0 // pred_region
    _
  $region37: #{our_model_forward.1} parent=0 // pred_fallthru
    _
  // Predicated region
  $region38: #{our_model_forward.1} parent=0 // pred_check
    _
  $region39: #{our_model_forward.1} parent=0 // pred_check_branch
    %39 = sbr.rel (0) target = $region41
  $region40: #{our_model_forward.1} parent=0 // pred_region
    _
  $region41: #{our_model_forward.1} parent=0 // pred_fallthru
    _
  // Predicated region
  $region42: #{our_model_forward.1} parent=0 // pred_check
    _
  $region43: #{our_model_forward.1} parent=0 // pred_check_branch
    %41 = sbr.rel (0) target = $region45
  $region44: #{our_model_forward.1} parent=0 // pred_region
    _
  $region45: #{our_model_forward.1} parent=0 // pred_fallthru
    _
  // Predicated region
  $region46: #{our_model_forward.1} parent=0 // pred_check
    _
  $region47: #{our_model_forward.1} parent=0 // pred_check_branch
    %43 = sbr.rel (0) target = $region49
  $region48: #{our_model_forward.1} parent=0 // pred_region
    _
  $region49: #{our_model_forward.1} parent=0 // pred_fallthru
    _
  // Predicated region
  $region50: #{our_model_forward.1} parent=0 // pred_check
    _
  $region51: #{our_model_forward.1} parent=0 // pred_check_branch
    %45 = sbr.rel (0) target = $region53
  $region52: #{our_model_forward.1} parent=0 // pred_region
    _
  $region53: #{our_model_forward.1} parent=0 // pred_fallthru
    _
  %v46 = vld [vmem:[%s0] sm:$0xff]
  %v47 = vld [vmem:[%s0 + $0x8] sm:$0xff]
  %v48 = vld [vmem:[%s0 + $0x10] sm:$0xff]
  %v49 = vld [vmem:[%s0 + $0x18] sm:$0xff]
  %v50 = vld [vmem:[%s0 + $0x20] sm:$0xff]
  %v51 = vld [vmem:[%s0 + $0x28] sm:$0xff]
  %v52 = vld [vmem:[%s0 + $0x30] sm:$0xff]
  %v53 = vld [vmem:[%s0 + $0x38] sm:$0xff]
  %v54 = vcombine.low %v46, %v48
  %v55 = vcombine.high %v46, %v48
  %v57 = vunpack.c.l.s4 1983009808
  %v58 = vunpack.c.0.s8 %v57
  %v59 = vlaneseq
  %v60 = vshrl.u32 %v59, 7
  %v61 = vsub.s32 %v58, %v60
  %v62 = vrot.slane %v54, %v61
  %v64 = vunpack.c.l.s4 1983009808
  %v65 = vunpack.c.0.s8 %v64
  %v66 = vlaneseq
  %v67 = vshrl.u32 %v66, 7
  %v68 = vsub.s32 %v65, %v67
  %v69 = vrot.slane %v55, %v68
  %v70 = vcombine.low %v47, %v49
  %v71 = vcombine.high %v47, %v49
  %v73 = vunpack.c.l.s4 1983009808
  %v74 = vunpack.c.0.s8 %v73
  %v75 = vlaneseq
  %v76 = vshrl.u32 %v75, 7
  %v77 = vsub.s32 %v74, %v76
  %v78 = vrot.slane %v70, %v77
  %v80 = vunpack.c.l.s4 1983009808
  %v81 = vunpack.c.0.s8 %v80
  %v82 = vlaneseq
  %v83 = vshrl.u32 %v82, 7
  %v84 = vsub.s32 %v81, %v83
  %v85 = vrot.slane %v71, %v84
  %v86 = vcombine.low %v50, %v52
  %v87 = vcombine.high %v50, %v52
  %v89 = vunpack.c.l.s4 1983009808
  %v90 = vunpack.c.0.s8 %v89
  %v91 = vlaneseq
  %v92 = vshrl.u32 %v91, 7
  %v93 = vsub.s32 %v90, %v92
  %v94 = vrot.slane %v86, %v93
  %v96 = vunpack.c.l.s4 1983009808
  %v97 = vunpack.c.0.s8 %v96
  %v98 = vlaneseq
  %v99 = vshrl.u32 %v98, 7
  %v100 = vsub.s32 %v97, %v99
  %v101 = vrot.slane %v87, %v100
  %v102 = vcombine.low %v51, %v53
  %v103 = vcombine.high %v51, %v53
  %v105 = vunpack.c.l.s4 1983009808
  %v106 = vunpack.c.0.s8 %v105
  %v107 = vlaneseq
  %v108 = vshrl.u32 %v107, 7
  %v109 = vsub.s32 %v106, %v108
  %v110 = vrot.slane %v102, %v109
  %v112 = vunpack.c.l.s4 1983009808
  %v113 = vunpack.c.0.s8 %v112
  %v114 = vlaneseq
  %v115 = vshrl.u32 %v114, 7
  %v116 = vsub.s32 %v113, %v115
  %v117 = vrot.slane %v103, %v116
  %v118 = vcombine.low %v62, %v78
  %v119 = vcombine.high %v62, %v78
  %v121 = vunpack.c.l.s4 1934713408
  %v122 = vunpack.c.0.s8 %v121
  %v123 = vlaneseq
  %v124 = vshrl.u32 %v123, 7
  %v125 = vsub.s32 %v122, %v124
  %v126 = vrot.slane %v118, %v125
  %v128 = vunpack.c.l.s4 1934713408
  %v129 = vunpack.c.0.s8 %v128
  %v130 = vlaneseq
  %v131 = vshrl.u32 %v130, 7
  %v132 = vsub.s32 %v129, %v131
  %v133 = vrot.slane %v119, %v132
  %v134 = vcombine.low %v69, %v85
  %v135 = vcombine.high %v69, %v85
  %v137 = vunpack.c.l.s4 1934713408
  %v138 = vunpack.c.0.s8 %v137
  %v139 = vlaneseq
  %v140 = vshrl.u32 %v139, 7
  %v141 = vsub.s32 %v138, %v140
  %v142 = vrot.slane %v134, %v141
  %v144 = vunpack.c.l.s4 1934713408
  %v145 = vunpack.c.0.s8 %v144
  %v146 = vlaneseq
  %v147 = vshrl.u32 %v146, 7
  %v148 = vsub.s32 %v145, %v147
  %v149 = vrot.slane %v135, %v148
  %v150 = vcombine.low %v94, %v110
  %v151 = vcombine.high %v94, %v110
  %v153 = vunpack.c.l.s4 1934713408
  %v154 = vunpack.c.0.s8 %v153
  %v155 = vlaneseq
  %v156 = vshrl.u32 %v155, 7
  %v157 = vsub.s32 %v154, %v156
  %v158 = vrot.slane %v150, %v157
  %v160 = vunpack.c.l.s4 1934713408
  %v161 = vunpack.c.0.s8 %v160
  %v162 = vlaneseq
  %v163 = vshrl.u32 %v162, 7
  %v164 = vsub.s32 %v161, %v163
  %v165 = vrot.slane %v151, %v164
  %v166 = vcombine.low %v101, %v117
  %v167 = vcombine.high %v101, %v117
  %v169 = vunpack.c.l.s4 1934713408
  %v170 = vunpack.c.0.s8 %v169
  %v171 = vlaneseq
  %v172 = vshrl.u32 %v171, 7
  %v173 = vsub.s32 %v170, %v172
  %v174 = vrot.slane %v166, %v173
  %v176 = vunpack.c.l.s4 1934713408
  %v177 = vunpack.c.0.s8 %v176
  %v178 = vlaneseq
  %v179 = vshrl.u32 %v178, 7
  %v180 = vsub.s32 %v177, %v179
  %v181 = vrot.slane %v167, %v180
  %v182 = vcombine.low %v126, %v158
  %v183 = vcombine.high %v126, %v158
  %v184 = vcombine.low %v133, %v165
  %v185 = vcombine.high %v133, %v165
  %v186 = vcombine.low %v142, %v174
  %v187 = vcombine.high %v142, %v174
  %v188 = vcombine.low %v149, %v181
  %v189 = vcombine.high %v149, %v181
  %v190 = vld [vmem:[%s1] sm:$0xff]
  %v191 = vld [vmem:[%s1 + $0x8] sm:$0xff]
  %v192 = vld [vmem:[%s1 + $0x10] sm:$0xff]
  %v193 = vld [vmem:[%s1 + $0x18] sm:$0xff]
  %v194 = vld [vmem:[%s1 + $0x20] sm:$0xff]
  %v195 = vld [vmem:[%s1 + $0x28] sm:$0xff]
  %v196 = vld [vmem:[%s1 + $0x30] sm:$0xff]
  %v197 = vld [vmem:[%s1 + $0x38] sm:$0xff]
  %v198 = vld [vmem:[%s1 + $0x40] sm:$0xff]
  %v199 = vld [vmem:[%s1 + $0x48] sm:$0xff]
  %v200 = vld [vmem:[%s1 + $0x50] sm:$0xff]
  %v201 = vld [vmem:[%s1 + $0x58] sm:$0xff]
  %v202 = vld [vmem:[%s1 + $0x60] sm:$0xff]
  %v203 = vld [vmem:[%s1 + $0x68] sm:$0xff]
  %v204 = vld [vmem:[%s2] sm:$0x1]
  %v206 = vlaneseq
  %v207 = vshrl.u32 %v206, 7
  %v208 = vsub.s32 0, %v207
  %v209 = vrot.slane %v204, %v208
  %vm211 = vcmask 916480
  %v213 = vsel %vm211, %v182, 0
  %v216 = vsel %vm211, %v183, 0
  %v219 = vsel %vm211, %v184, 0
  %v222 = vsel %vm211, %v185, 0
  %v225 = vsel %vm211, %v186, 0
  %v228 = vsel %vm211, %v187, 0
  %v231 = vsel %vm211, %v188, 0
  %v234 = vsel %vm211, %v189, 0
  %236 = vmatprep.subr.mxu0 0.0
  %237 = vmatpush1.msra.mxu0 %v190
  %238 = vmatprep.subr.mxu0 0.0
  %239 = vmatpush1.msra.mxu0 %v191
  %240 = vmatprep.subr.mxu0 0.0
  %241 = vmatpush1.msra.mxu0 %v192
  %242 = vmatprep.subr.mxu0 0.0
  %243 = vmatpush1.msra.mxu0 %v193
  %244 = vmatprep.subr.mxu0 0.0
  %245 = vmatpush1.msra.mxu0 %v194
  %246 = vmatprep.subr.mxu0 0.0
  %247 = vmatpush1.msra.mxu0 %v195
  %248 = vmatprep.subr.mxu0 0.0
  %249 = vmatpush1.msra.mxu0 %v196
  %250 = vmatprep.subr.mxu0 0.0
  %251 = vmatpush1.msra.mxu0 %v197
  %252 = vmatprep.subr.mxu0 0.0
  %253 = vmatpush1.msra.mxu0 %v198
  %254 = vmatprep.subr.mxu0 0.0
  %255 = vmatpush1.msra.mxu0 %v199
  %256 = vmatprep.subr.mxu0 0.0
  %257 = vmatpush1.msra.mxu0 %v200
  %258 = vmatprep.subr.mxu0 0.0
  %259 = vmatpush1.msra.mxu0 %v201
  %260 = vmatprep.subr.mxu0 0.0
  %261 = vmatpush1.msra.mxu0 %v202
  %262 = vmatprep.subr.mxu0 0.0
  %263 = vmatpush1.msra.mxu0 %v203
  %264 = vmatprep.subr.mxu0 0.0
  %265 = vmatpush1.msra.mxu0 0.0
  %266 = vmatprep.subr.mxu0 0.0
  %267 = vmatpush1.msra.mxu0 0.0
  %268 = vmatprep.subr.mxu0 0.0
  %269 = vmatpush1.msra.mxu0 0.0
  %270 = vmatprep.subr.mxu0 0.0
  %271 = vmatpush1.msra.mxu0 0.0
  %272 = vmatprep.subr.mxu0 0.0
  %273 = vmatpush1.msra.mxu0 0.0
  %274 = vmatprep.subr.mxu0 0.0
  %275 = vmatpush1.msra.mxu0 0.0
  %276 = vmatprep.subr.mxu0 0.0
  %277 = vmatpush1.msra.mxu0 0.0
  %278 = vmatprep.subr.mxu0 0.0
  %279 = vmatpush1.msra.mxu0 0.0
  %280 = vmatprep.subr.mxu0 0.0
  %281 = vmatpush1.msra.mxu0 0.0
  %282 = vmatprep.subr.mxu0 0.0
  %283 = vmatpush1.msra.mxu0 0.0
  %284 = vmatprep.subr.mxu0 0.0
  %285 = vmatpush1.msra.mxu0 0.0
  %286 = vmatprep.subr.mxu0 0.0
  %287 = vmatpush1.msra.mxu0 0.0
  %288 = vmatprep.subr.mxu0 0.0
  %289 = vmatpush1.msra.mxu0 0.0
  %290 = vmatprep.subr.mxu0 0.0
  %291 = vmatpush1.msra.mxu0 0.0
  %292 = vmatprep.subr.mxu0 0.0
  %293 = vmatpush1.msra.mxu0 0.0
  %294 = vmatprep.subr.mxu0 0.0
  %295 = vmatpush1.msra.mxu0 0.0
  %296 = vmatprep.subr.mxu0 0.0
  %297 = vmatpush1.msra.mxu0 0.0
  %298 = vmatprep.subr.mxu0 0.0
  %299 = vmatpush1.msra.mxu0 0.0
  %300 = vmatprep.mubr.f32.mxu0 0.0
  %301 = vmatmul.mubr.f32.gmra.mrb[0].mxu0 %v213
  %v302 = vpop.f32.mrb[0].mxu0
  %v303 = vadd.f32 %v209, %v302
  %v304 = vpop.f32.mrb[0].mxu0
  %305 = vmatprep.mubr.f32.mxu0 0.0
  %306 = vmatmul.mubr.f32.gmra.mrb[0].mxu0 %v216
  %v307 = vpop.f32.mrb[0].mxu0
  %v308 = vadd.f32 %v209, %v307
  %v309 = vpop.f32.mrb[0].mxu0
  %310 = vmatprep.mubr.f32.mxu0 0.0
  %311 = vmatmul.mubr.f32.gmra.mrb[0].mxu0 %v219
  %v312 = vpop.f32.mrb[0].mxu0
  %v313 = vadd.f32 %v209, %v312
  %v314 = vpop.f32.mrb[0].mxu0
  %315 = vmatprep.mubr.f32.mxu0 0.0
  %316 = vmatmul.mubr.f32.gmra.mrb[0].mxu0 %v222
  %v317 = vpop.f32.mrb[0].mxu0
  %v318 = vadd.f32 %v209, %v317
  %v319 = vpop.f32.mrb[0].mxu0
  %320 = vmatprep.mubr.f32.mxu0 0.0
  %321 = vmatmul.mubr.f32.gmra.mrb[0].mxu0 %v225
  %v322 = vpop.f32.mrb[0].mxu0
  %v323 = vadd.f32 %v209, %v322
  %v324 = vpop.f32.mrb[0].mxu0
  %325 = vmatprep.mubr.f32.mxu0 0.0
  %326 = vmatmul.mubr.f32.gmra.mrb[0].mxu0 %v228
  %v327 = vpop.f32.mrb[0].mxu0
  %v328 = vadd.f32 %v209, %v327
  %v329 = vpop.f32.mrb[0].mxu0
  %330 = vmatprep.mubr.f32.mxu0 0.0
  %331 = vmatmul.mubr.f32.gmra.mrb[0].mxu0 %v231
  %v332 = vpop.f32.mrb[0].mxu0
  %v333 = vadd.f32 %v209, %v332
  %v334 = vpop.f32.mrb[0].mxu0
  %335 = vmatprep.mubr.f32.mxu0 0.0
  %336 = vmatmul.mubr.f32.gmra.mrb[0].mxu0 %v234
  %v337 = vpop.f32.mrb[0].mxu0
  %v338 = vadd.f32 %v209, %v337
  %v339 = vpop.f32.mrb[0].mxu0
  %340 = vdwg.mxu0
  %vm341 = vcmask 523264
  %342 = vst.msk [vmem:[#allocation2] sm:$0xff] %vm341, %v303
  %343 = vst.msk [vmem:[#allocation2 + $0x8] sm:$0xff] %vm341, %v308
  %344 = vst.msk [vmem:[#allocation2 + $0x10] sm:$0xff] %vm341, %v313
  %345 = vst.msk [vmem:[#allocation2 + $0x18] sm:$0xff] %vm341, %v318
  %346 = vst.msk [vmem:[#allocation2 + $0x20] sm:$0xff] %vm341, %v323
  %347 = vst.msk [vmem:[#allocation2 + $0x28] sm:$0xff] %vm341, %v328
  %348 = vst.msk [vmem:[#allocation2 + $0x30] sm:$0xff] %vm341, %v333
  %349 = vst.msk [vmem:[#allocation2 + $0x38] sm:$0xff] %vm341, %v338
  %v350 = vld [vmem:[%s3] sm:$0xff]
  %v351 = vld [vmem:[%s3 + $0x8] sm:$0xff]
  %v352 = vld [vmem:[%s4] sm:$0xff]
  %v353 = vld [vmem:[%s4 + $0x8] sm:$0xff]
  %v354 = vld [vmem:[%s5] sm:$0xff]
  %v355 = vld [vmem:[%s5 + $0x8] sm:$0xff]
  %v356 = vld [vmem:[%s6] sm:$0x1]
  %v357 = vld [vmem:[#allocation2] sm:$0xff]
  %vm358 = vcmask 130048
  %v360 = vsel %vm358, 0.0, 0
  %362 = vmatprep.subr.mxu0 0.0
  %363 = vmatpush1.msra.mxu0 %v350
  %364 = vmatprep.subr.mxu0 0.0
  %365 = vmatpush1.msra.mxu0 %v351
  %366 = vmatprep.subr.mxu0 0.0
  %367 = vmatpush1.msra.mxu0 0.0
  %368 = vmatprep.subr.mxu0 0.0
  %369 = vmatpush1.msra.mxu0 0.0
  %370 = vmatprep.subr.mxu0 0.0
  %371 = vmatpush1.msra.mxu0 0.0
  %372 = vmatprep.subr.mxu0 0.0
  %373 = vmatpush1.msra.mxu0 0.0
  %374 = vmatprep.subr.mxu0 0.0
  %375 = vmatpush1.msra.mxu0 0.0
  %376 = vmatprep.subr.mxu0 0.0
  %377 = vmatpush1.msra.mxu0 0.0
  %378 = vmatprep.subr.mxu0 0.0
  %379 = vmatpush1.msra.mxu0 0.0
  %380 = vmatprep.subr.mxu0 0.0
  %381 = vmatpush1.msra.mxu0 0.0
  %382 = vmatprep.subr.mxu0 0.0
  %383 = vmatpush1.msra.mxu0 0.0
  %384 = vmatprep.subr.mxu0 0.0
  %385 = vmatpush1.msra.mxu0 0.0
  %386 = vmatprep.subr.mxu0 0.0
  %387 = vmatpush1.msra.mxu0 0.0
  %388 = vmatprep.subr.mxu0 0.0
  %389 = vmatpush1.msra.mxu0 0.0
  %390 = vmatprep.subr.mxu0 0.0
  %391 = vmatpush1.msra.mxu0 0.0
  %392 = vmatprep.subr.mxu0 0.0
  %393 = vmatpush1.msra.mxu0 0.0
  %394 = vmatprep.subr.mxu0 0.0
  %395 = vmatpush1.msra.mxu0 0.0
  %396 = vmatprep.subr.mxu0 0.0
  %397 = vmatpush1.msra.mxu0 0.0
  %398 = vmatprep.subr.mxu0 0.0
  %399 = vmatpush1.msra.mxu0 0.0
  %400 = vmatprep.subr.mxu0 0.0
  %401 = vmatpush1.msra.mxu0 0.0
  %402 = vmatprep.subr.mxu0 0.0
  %403 = vmatpush1.msra.mxu0 0.0
  %404 = vmatprep.subr.mxu0 0.0
  %405 = vmatpush1.msra.mxu0 0.0
  %406 = vmatprep.subr.mxu0 0.0
  %407 = vmatpush1.msra.mxu0 0.0
  %408 = vmatprep.subr.mxu0 0.0
  %409 = vmatpush1.msra.mxu0 0.0
  %410 = vmatprep.subr.mxu0 0.0
  %411 = vmatpush1.msra.mxu0 0.0
  %412 = vmatprep.subr.mxu0 0.0
  %413 = vmatpush1.msra.mxu0 0.0
  %414 = vmatprep.subr.mxu0 0.0
  %415 = vmatpush1.msra.mxu0 0.0
  %416 = vmatprep.subr.mxu0 0.0
  %417 = vmatpush1.msra.mxu0 0.0
  %418 = vmatprep.subr.mxu0 0.0
  %419 = vmatpush1.msra.mxu0 0.0
  %420 = vmatprep.subr.mxu0 0.0
  %421 = vmatpush1.msra.mxu0 0.0
  %422 = vmatprep.subr.mxu0 0.0
  %423 = vmatpush1.msra.mxu0 0.0
  %424 = vmatprep.subr.mxu0 0.0
  %425 = vmatpush1.msra.mxu0 0.0
  %426 = vmatprep.mubr.f32.mxu0 0.0
  %427 = vmatmul.mubr.f32.gmra.mrb[0].mxu0 %v360
  %v428 = vpop.f32.mrb[0].mxu0
  %v429 = vadd.f32 0.0, %v428
  %v430 = vpop.f32.mrb[0].mxu0
  %431 = vdwg.mxu0
  %v432 = vadd.f32 %v357, %v429
  %v433 = vxor.u32 %v432, 2147483648
  %v434 = vmul.f32 %v433, 1.442695
  %v435 = vpow.pop %v434
  %v436 = vadd.f32 %v435, 1.0
  %v437 = vrcp.pop %v436
  %v438 = vmul.f32 1.0, %v437
  %v439 = vtanh.pop %v432
  %v440 = vmul.f32 %v438, 0.0
  %442 = vrot.lane.b32.xlu0 %v439, 96
  %v443 = vpop.permute.xlu0 %442
  %v445 = vmul.f32 %v438, %v443
  %447 = vrot.lane.b32.xlu0 %v445, 16
  %v448 = vpop.permute.xlu0 %447
  %v450 = vadd.f32 %v440, %v448
  %v451 = vtanh.pop %v450
  %453 = vrot.lane.b32.xlu0 %v451, 32
  %v454 = vpop.permute.xlu0 %453
  %v456 = vmul.f32 %v438, %v454
  %458 = vrot.lane.b32.xlu0 %v456, 80
  %v459 = vpop.permute.xlu0 %458
  %v460 = vsel %vm358, %v459, 0
  %462 = vmatprep.subr.mxu0 0.0
  %463 = vmatpush1.msra.mxu0 %v352
  %464 = vmatprep.subr.mxu0 0.0
  %465 = vmatpush1.msra.mxu0 %v353
  %466 = vmatprep.subr.mxu0 0.0
  %467 = vmatpush1.msra.mxu0 0.0
  %468 = vmatprep.subr.mxu0 0.0
  %469 = vmatpush1.msra.mxu0 0.0
  %470 = vmatprep.subr.mxu0 0.0
  %471 = vmatpush1.msra.mxu0 0.0
  %472 = vmatprep.subr.mxu0 0.0
  %473 = vmatpush1.msra.mxu0 0.0
  %474 = vmatprep.subr.mxu0 0.0
  %475 = vmatpush1.msra.mxu0 0.0
  %476 = vmatprep.subr.mxu0 0.0
  %477 = vmatpush1.msra.mxu0 0.0
  %478 = vmatprep.subr.mxu0 0.0
  %479 = vmatpush1.msra.mxu0 0.0
  %480 = vmatprep.subr.mxu0 0.0
  %481 = vmatpush1.msra.mxu0 0.0
  %482 = vmatprep.subr.mxu0 0.0
  %483 = vmatpush1.msra.mxu0 0.0
  %484 = vmatprep.subr.mxu0 0.0
  %485 = vmatpush1.msra.mxu0 0.0
  %486 = vmatprep.subr.mxu0 0.0
  %487 = vmatpush1.msra.mxu0 0.0
  %488 = vmatprep.subr.mxu0 0.0
  %489 = vmatpush1.msra.mxu0 0.0
  %490 = vmatprep.subr.mxu0 0.0
  %491 = vmatpush1.msra.mxu0 0.0
  %492 = vmatprep.subr.mxu0 0.0
  %493 = vmatpush1.msra.mxu0 0.0
  %494 = vmatprep.subr.mxu0 0.0
  %495 = vmatpush1.msra.mxu0 0.0
  %496 = vmatprep.subr.mxu0 0.0
  %497 = vmatpush1.msra.mxu0 0.0
  %498 = vmatprep.subr.mxu0 0.0
  %499 = vmatpush1.msra.mxu0 0.0
  %500 = vmatprep.subr.mxu0 0.0
  %501 = vmatpush1.msra.mxu0 0.0
  %502 = vmatprep.subr.mxu0 0.0
  %503 = vmatpush1.msra.mxu0 0.0
  %504 = vmatprep.subr.mxu0 0.0
  %505 = vmatpush1.msra.mxu0 0.0
  %506 = vmatprep.subr.mxu0 0.0
  %507 = vmatpush1.msra.mxu0 0.0
  %508 = vmatprep.subr.mxu0 0.0
  %509 = vmatpush1.msra.mxu0 0.0
  %510 = vmatprep.subr.mxu0 0.0
  %511 = vmatpush1.msra.mxu0 0.0
  %512 = vmatprep.subr.mxu0 0.0
  %513 = vmatpush1.msra.mxu0 0.0
  %514 = vmatprep.subr.mxu0 0.0
  %515 = vmatpush1.msra.mxu0 0.0
  %516 = vmatprep.subr.mxu0 0.0
  %517 = vmatpush1.msra.mxu0 0.0
  %518 = vmatprep.subr.mxu0 0.0
  %519 = vmatpush1.msra.mxu0 0.0
  %520 = vmatprep.subr.mxu0 0.0
  %521 = vmatpush1.msra.mxu0 0.0
  %522 = vmatprep.subr.mxu0 0.0
  %523 = vmatpush1.msra.mxu0 0.0
  %524 = vmatprep.subr.mxu0 0.0
  %525 = vmatpush1.msra.mxu0 0.0
  %526 = vmatprep.mubr.f32.mxu0 0.0
  %527 = vmatmul.mubr.f32.gmra.mrb[0].mxu0 %v460
  %v528 = vpop.f32.mrb[0].mxu0
  %v529 = vadd.f32 0.0, %v528
  %v530 = vpop.f32.mrb[0].mxu0
  %531 = vdwg.mxu0
  %532 = vmatprep.subr.mxu0 0.0
  %533 = vmatpush1.msra.mxu0 %v354
  %534 = vmatprep.subr.mxu0 0.0
  %535 = vmatpush1.msra.mxu0 %v355
  %536 = vmatprep.subr.mxu0 0.0
  %537 = vmatpush1.msra.mxu0 0.0
  %538 = vmatprep.subr.mxu0 0.0
  %539 = vmatpush1.msra.mxu0 0.0
  %540 = vmatprep.subr.mxu0 0.0
  %541 = vmatpush1.msra.mxu0 0.0
  %542 = vmatprep.subr.mxu0 0.0
  %543 = vmatpush1.msra.mxu0 0.0
  %544 = vmatprep.subr.mxu0 0.0
  %545 = vmatpush1.msra.mxu0 0.0
  %546 = vmatprep.subr.mxu0 0.0
  %547 = vmatpush1.msra.mxu0 0.0
  %548 = vmatprep.subr.mxu0 0.0
  %549 = vmatpush1.msra.mxu0 0.0
  %550 = vmatprep.subr.mxu0 0.0
  %551 = vmatpush1.msra.mxu0 0.0
  %552 = vmatprep.subr.mxu0 0.0
  %553 = vmatpush1.msra.mxu0 0.0
  %554 = vmatprep.subr.mxu0 0.0
  %555 = vmatpush1.msra.mxu0 0.0
  %556 = vmatprep.subr.mxu0 0.0
  %557 = vmatpush1.msra.mxu0 0.0
  %558 = vmatprep.subr.mxu0 0.0
  %559 = vmatpush1.msra.mxu0 0.0
  %560 = vmatprep.subr.mxu0 0.0
  %561 = vmatpush1.msra.mxu0 0.0
  %562 = vmatprep.subr.mxu0 0.0
  %563 = vmatpush1.msra.mxu0 0.0
  %564 = vmatprep.subr.mxu0 0.0
  %565 = vmatpush1.msra.mxu0 0.0
  %566 = vmatprep.subr.mxu0 0.0
  %567 = vmatpush1.msra.mxu0 0.0
  %568 = vmatprep.subr.mxu0 0.0
  %569 = vmatpush1.msra.mxu0 0.0
  %570 = vmatprep.subr.mxu0 0.0
  %571 = vmatpush1.msra.mxu0 0.0
  %572 = vmatprep.subr.mxu0 0.0
  %573 = vmatpush1.msra.mxu0 0.0
  %574 = vmatprep.subr.mxu0 0.0
  %575 = vmatpush1.msra.mxu0 0.0
  %576 = vmatprep.subr.mxu0 0.0
  %577 = vmatpush1.msra.mxu0 0.0
  %578 = vmatprep.subr.mxu0 0.0
  %579 = vmatpush1.msra.mxu0 0.0
  %580 = vmatprep.subr.mxu0 0.0
  %581 = vmatpush1.msra.mxu0 0.0
  %582 = vmatprep.subr.mxu0 0.0
  %583 = vmatpush1.msra.mxu0 0.0
  %584 = vmatprep.subr.mxu0 0.0
  %585 = vmatpush1.msra.mxu0 0.0
  %586 = vmatprep.subr.mxu0 0.0
  %587 = vmatpush1.msra.mxu0 0.0
  %588 = vmatprep.subr.mxu0 0.0
  %589 = vmatpush1.msra.mxu0 0.0
  %590 = vmatprep.subr.mxu0 0.0
  %591 = vmatpush1.msra.mxu0 0.0
  %592 = vmatprep.subr.mxu0 0.0
  %593 = vmatpush1.msra.mxu0 0.0
  %594 = vmatprep.subr.mxu0 0.0
  %595 = vmatpush1.msra.mxu0 0.0
  %596 = vmatprep.mubr.f32.mxu0 0.0
  %597 = vmatmul.mubr.f32.gmra.mrb[0].mxu0 %v360
  %v598 = vpop.f32.mrb[0].mxu0
  %v599 = vadd.f32 %v529, %v598
  %v600 = vpop.f32.mrb[0].mxu0
  %601 = vdwg.mxu0
  %v603 = vlaneseq
  %v604 = vshrl.u32 %v603, 7
  %v605 = vsub.s32 0, %v604
  %v606 = vrot.slane %v356, %v605
  %v608 = vadd.f32 %v599, %v606
  %v609 = vxor.u32 %v608, 2147483648
  %v610 = vmul.f32 %v609, 1.442695
  %v611 = vpow.pop %v610
  %v612 = vadd.f32 %v611, 1.0
  %v613 = vrcp.pop %v612
  %v614 = vmul.f32 1.0, %v613
  %v615 = vtanh.pop %v608
  %v616 = vmul.f32 %v614, 0.0
  %618 = vrot.lane.b32.xlu0 %v615, 96
  %v619 = vpop.permute.xlu0 %618
  %v621 = vmul.f32 %v614, %v619
  %623 = vrot.lane.b32.xlu0 %v621, 16
  %v624 = vpop.permute.xlu0 %623
  %v626 = vadd.f32 %v616, %v624
  %v627 = vtanh.pop %v626
  %629 = vrot.lane.b32.xlu0 %v627, 32
  %v630 = vpop.permute.xlu0 %629
  %v632 = vmul.f32 %v614, %v630
  %s633 = scalar_lea.vmem [#allocation2], 8
  %v634 = vld [vmem:[%s633] sm:$0xff]
  %635 = vmatprep.subr.mxu0 0.0
  %636 = vmatpush1.msra.mxu0 %v350
  %637 = vmatprep.subr.mxu0 0.0
  %638 = vmatpush1.msra.mxu0 %v351
  %639 = vmatprep.subr.mxu0 0.0
  %640 = vmatpush1.msra.mxu0 0.0
  %641 = vmatprep.subr.mxu0 0.0
  %642 = vmatpush1.msra.mxu0 0.0
  %643 = vmatprep.subr.mxu0 0.0
  %644 = vmatpush1.msra.mxu0 0.0
  %645 = vmatprep.subr.mxu0 0.0
  %646 = vmatpush1.msra.mxu0 0.0
  %647 = vmatprep.subr.mxu0 0.0
  %648 = vmatpush1.msra.mxu0 0.0
  %649 = vmatprep.subr.mxu0 0.0
  %650 = vmatpush1.msra.mxu0 0.0
  %651 = vmatprep.subr.mxu0 0.0
  %652 = vmatpush1.msra.mxu0 0.0
  %653 = vmatprep.subr.mxu0 0.0
  %654 = vmatpush1.msra.mxu0 0.0
  %655 = vmatprep.subr.mxu0 0.0
  %656 = vmatpush1.msra.mxu0 0.0
  %657 = vmatprep.subr.mxu0 0.0
  %658 = vmatpush1.msra.mxu0 0.0
  %659 = vmatprep.subr.mxu0 0.0
  %660 = vmatpush1.msra.mxu0 0.0
  %661 = vmatprep.subr.mxu0 0.0
  %662 = vmatpush1.msra.mxu0 0.0
  %663 = vmatprep.subr.mxu0 0.0
  %664 = vmatpush1.msra.mxu0 0.0
  %665 = vmatprep.subr.mxu0 0.0
  %666 = vmatpush1.msra.mxu0 0.0
  %667 = vmatprep.subr.mxu0 0.0
  %668 = vmatpush1.msra.mxu0 0.0
  %669 = vmatprep.subr.mxu0 0.0
  %670 = vmatpush1.msra.mxu0 0.0
  %671 = vmatprep.subr.mxu0 0.0
  %672 = vmatpush1.msra.mxu0 0.0
  %673 = vmatprep.subr.mxu0 0.0
  %674 = vmatpush1.msra.mxu0 0.0
  %675 = vmatprep.subr.mxu0 0.0
  %676 = vmatpush1.msra.mxu0 0.0
  %677 = vmatprep.subr.mxu0 0.0
  %678 = vmatpush1.msra.mxu0 0.0
  %679 = vmatprep.subr.mxu0 0.0
  %680 = vmatpush1.msra.mxu0 0.0
  %681 = vmatprep.subr.mxu0 0.0
  %682 = vmatpush1.msra.mxu0 0.0
  %683 = vmatprep.subr.mxu0 0.0
  %684 = vmatpush1.msra.mxu0 0.0
  %685 = vmatprep.subr.mxu0 0.0
  %686 = vmatpush1.msra.mxu0 0.0
  %687 = vmatprep.subr.mxu0 0.0
  %688 = vmatpush1.msra.mxu0 0.0
  %689 = vmatprep.subr.mxu0 0.0
  %690 = vmatpush1.msra.mxu0 0.0
  %691 = vmatprep.subr.mxu0 0.0
  %692 = vmatpush1.msra.mxu0 0.0
  %693 = vmatprep.subr.mxu0 0.0
  %694 = vmatpush1.msra.mxu0 0.0
  %695 = vmatprep.subr.mxu0 0.0
  %696 = vmatpush1.msra.mxu0 0.0
  %697 = vmatprep.subr.mxu0 0.0
  %698 = vmatpush1.msra.mxu0 0.0
  %699 = vmatprep.mubr.f32.mxu0 0.0
  %700 = vmatmul.mubr.f32.gmra.mrb[0].mxu0 %v460
  %v701 = vpop.f32.mrb[0].mxu0
  %v702 = vadd.f32 0.0, %v701
  %v703 = vpop.f32.mrb[0].mxu0
  %704 = vdwg.mxu0
  %v705 = vadd.f32 %v634, %v702
  %v706 = vxor.u32 %v705, 2147483648
  %v707 = vmul.f32 %v706, 1.442695
  %v708 = vpow.pop %v707
  %v709 = vadd.f32 %v708, 1.0
  %v710 = vrcp.pop %v709
  %v711 = vmul.f32 1.0, %v710
  %v712 = vtanh.pop %v705
  %v713 = vmul.f32 %v711, %v450
  %715 = vrot.lane.b32.xlu0 %v712, 96
  %v716 = vpop.permute.xlu0 %715
  %v718 = vmul.f32 %v711, %v716
  %720 = vrot.lane.b32.xlu0 %v718, 16
  %v721 = vpop.permute.xlu0 %720
  %v723 = vadd.f32 %v713, %v721
  %v724 = vtanh.pop %v723
  %726 = vrot.lane.b32.xlu0 %v724, 32
  %v727 = vpop.permute.xlu0 %726
  %v729 = vmul.f32 %v711, %v727
  %731 = vrot.lane.b32.xlu0 %v729, 80
  %v732 = vpop.permute.xlu0 %731
  %v733 = vsel %vm358, %v732, 0
  %735 = vmatprep.subr.mxu0 0.0
  %736 = vmatpush1.msra.mxu0 %v352
  %737 = vmatprep.subr.mxu0 0.0
  %738 = vmatpush1.msra.mxu0 %v353
  %739 = vmatprep.subr.mxu0 0.0
  %740 = vmatpush1.msra.mxu0 0.0
  %741 = vmatprep.subr.mxu0 0.0
  %742 = vmatpush1.msra.mxu0 0.0
  %743 = vmatprep.subr.mxu0 0.0
  %744 = vmatpush1.msra.mxu0 0.0
  %745 = vmatprep.subr.mxu0 0.0
  %746 = vmatpush1.msra.mxu0 0.0
  %747 = vmatprep.subr.mxu0 0.0
  %748 = vmatpush1.msra.mxu0 0.0
  %749 = vmatprep.subr.mxu0 0.0
  %750 = vmatpush1.msra.mxu0 0.0
  %751 = vmatprep.subr.mxu0 0.0
  %752 = vmatpush1.msra.mxu0 0.0
  %753 = vmatprep.subr.mxu0 0.0
  %754 = vmatpush1.msra.mxu0 0.0
  %755 = vmatprep.subr.mxu0 0.0
  %756 = vmatpush1.msra.mxu0 0.0
  %757 = vmatprep.subr.mxu0 0.0
  %758 = vmatpush1.msra.mxu0 0.0
  %759 = vmatprep.subr.mxu0 0.0
  %760 = vmatpush1.msra.mxu0 0.0
  %761 = vmatprep.subr.mxu0 0.0
  %762 = vmatpush1.msra.mxu0 0.0
  %763 = vmatprep.subr.mxu0 0.0
  %764 = vmatpush1.msra.mxu0 0.0
  %765 = vmatprep.subr.mxu0 0.0
  %766 = vmatpush1.msra.mxu0 0.0
  %767 = vmatprep.subr.mxu0 0.0
  %768 = vmatpush1.msra.mxu0 0.0
  %769 = vmatprep.subr.mxu0 0.0
  %770 = vmatpush1.msra.mxu0 0.0
  %771 = vmatprep.subr.mxu0 0.0
  %772 = vmatpush1.msra.mxu0 0.0
  %773 = vmatprep.subr.mxu0 0.0
  %774 = vmatpush1.msra.mxu0 0.0
  %775 = vmatprep.subr.mxu0 0.0
  %776 = vmatpush1.msra.mxu0 0.0
  %777 = vmatprep.subr.mxu0 0.0
  %778 = vmatpush1.msra.mxu0 0.0
  %779 = vmatprep.subr.mxu0 0.0
  %780 = vmatpush1.msra.mxu0 0.0
  %781 = vmatprep.subr.mxu0 0.0
  %782 = vmatpush1.msra.mxu0 0.0
  %783 = vmatprep.subr.mxu0 0.0
  %784 = vmatpush1.msra.mxu0 0.0
  %785 = vmatprep.subr.mxu0 0.0
  %786 = vmatpush1.msra.mxu0 0.0
  %787 = vmatprep.subr.mxu0 0.0
  %788 = vmatpush1.msra.mxu0 0.0
  %789 = vmatprep.subr.mxu0 0.0
  %790 = vmatpush1.msra.mxu0 0.0
  %791 = vmatprep.subr.mxu0 0.0
  %792 = vmatpush1.msra.mxu0 0.0
  %793 = vmatprep.subr.mxu0 0.0
  %794 = vmatpush1.msra.mxu0 0.0
  %795 = vmatprep.subr.mxu0 0.0
  %796 = vmatpush1.msra.mxu0 0.0
  %797 = vmatprep.subr.mxu0 0.0
  %798 = vmatpush1.msra.mxu0 0.0
  %799 = vmatprep.mubr.f32.mxu0 0.0
  %800 = vmatmul.mubr.f32.gmra.mrb[0].mxu0 %v733
  %v801 = vpop.f32.mrb[0].mxu0
  %v802 = vadd.f32 0.0, %v801
  %v803 = vpop.f32.mrb[0].mxu0
  %804 = vdwg.mxu0
  %806 = vrot.lane.b32.xlu0 %v632, 80
  %v807 = vpop.permute.xlu0 %806
  %v808 = vsel %vm358, %v807, 0
  %810 = vmatprep.subr.mxu0 0.0
  %811 = vmatpush1.msra.mxu0 %v354
  %812 = vmatprep.subr.mxu0 0.0
  %813 = vmatpush1.msra.mxu0 %v355
  %814 = vmatprep.subr.mxu0 0.0
  %815 = vmatpush1.msra.mxu0 0.0
  %816 = vmatprep.subr.mxu0 0.0
  %817 = vmatpush1.msra.mxu0 0.0
  %818 = vmatprep.subr.mxu0 0.0
  %819 = vmatpush1.msra.mxu0 0.0
  %820 = vmatprep.subr.mxu0 0.0
  %821 = vmatpush1.msra.mxu0 0.0
  %822 = vmatprep.subr.mxu0 0.0
  %823 = vmatpush1.msra.mxu0 0.0
  %824 = vmatprep.subr.mxu0 0.0
  %825 = vmatpush1.msra.mxu0 0.0
  %826 = vmatprep.subr.mxu0 0.0
  %827 = vmatpush1.msra.mxu0 0.0
  %828 = vmatprep.subr.mxu0 0.0
  %829 = vmatpush1.msra.mxu0 0.0
  %830 = vmatprep.subr.mxu0 0.0
  %831 = vmatpush1.msra.mxu0 0.0
  %832 = vmatprep.subr.mxu0 0.0
  %833 = vmatpush1.msra.mxu0 0.0
  %834 = vmatprep.subr.mxu0 0.0
  %835 = vmatpush1.msra.mxu0 0.0
  %836 = vmatprep.subr.mxu0 0.0
  %837 = vmatpush1.msra.mxu0 0.0
  %838 = vmatprep.subr.mxu0 0.0
  %839 = vmatpush1.msra.mxu0 0.0
  %840 = vmatprep.subr.mxu0 0.0
  %841 = vmatpush1.msra.mxu0 0.0
  %842 = vmatprep.subr.mxu0 0.0
  %843 = vmatpush1.msra.mxu0 0.0
  %844 = vmatprep.subr.mxu0 0.0
  %845 = vmatpush1.msra.mxu0 0.0
  %846 = vmatprep.subr.mxu0 0.0
  %847 = vmatpush1.msra.mxu0 0.0
  %848 = vmatprep.subr.mxu0 0.0
  %849 = vmatpush1.msra.mxu0 0.0
  %850 = vmatprep.subr.mxu0 0.0
  %851 = vmatpush1.msra.mxu0 0.0
  %852 = vmatprep.subr.mxu0 0.0
  %853 = vmatpush1.msra.mxu0 0.0
  %854 = vmatprep.subr.mxu0 0.0
  %855 = vmatpush1.msra.mxu0 0.0
  %856 = vmatprep.subr.mxu0 0.0
  %857 = vmatpush1.msra.mxu0 0.0
  %858 = vmatprep.subr.mxu0 0.0
  %859 = vmatpush1.msra.mxu0 0.0
  %860 = vmatprep.subr.mxu0 0.0
  %861 = vmatpush1.msra.mxu0 0.0
  %862 = vmatprep.subr.mxu0 0.0
  %863 = vmatpush1.msra.mxu0 0.0
  %864 = vmatprep.subr.mxu0 0.0
  %865 = vmatpush1.msra.mxu0 0.0
  %866 = vmatprep.subr.mxu0 0.0
  %867 = vmatpush1.msra.mxu0 0.0
  %868 = vmatprep.subr.mxu0 0.0
  %869 = vmatpush1.msra.mxu0 0.0
  %870 = vmatprep.subr.mxu0 0.0
  %871 = vmatpush1.msra.mxu0 0.0
  %872 = vmatprep.subr.mxu0 0.0
  %873 = vmatpush1.msra.mxu0 0.0
  %874 = vmatprep.mubr.f32.mxu0 0.0
  %875 = vmatmul.mubr.f32.gmra.mrb[0].mxu0 %v808
  %v876 = vpop.f32.mrb[0].mxu0
  %v877 = vadd.f32 %v802, %v876
  %v878 = vpop.f32.mrb[0].mxu0
  %879 = vdwg.mxu0
  %v880 = vadd.f32 %v877, %v606
  %v881 = vxor.u32 %v880, 2147483648
  %v882 = vmul.f32 %v881, 1.442695
  %v883 = vpow.pop %v882
  %v884 = vadd.f32 %v883, 1.0
  %v885 = vrcp.pop %v884
  %v886 = vmul.f32 1.0, %v885
  %v887 = vtanh.pop %v880
  %v888 = vmul.f32 %v886, %v626
  %890 = vrot.lane.b32.xlu0 %v887, 96
  %v891 = vpop.permute.xlu0 %890
  %v893 = vmul.f32 %v886, %v891
  %895 = vrot.lane.b32.xlu0 %v893, 16
  %v896 = vpop.permute.xlu0 %895
  %v898 = vadd.f32 %v888, %v896
  %v899 = vtanh.pop %v898
  %901 = vrot.lane.b32.xlu0 %v899, 32
  %v902 = vpop.permute.xlu0 %901
  %v904 = vmul.f32 %v886, %v902
  %s905 = scalar_lea.vmem [#allocation2], 16
  %v906 = vld [vmem:[%s905] sm:$0xff]
  %907 = vmatprep.subr.mxu0 0.0
  %908 = vmatpush1.msra.mxu0 %v350
  %909 = vmatprep.subr.mxu0 0.0
  %910 = vmatpush1.msra.mxu0 %v351
  %911 = vmatprep.subr.mxu0 0.0
  %912 = vmatpush1.msra.mxu0 0.0
  %913 = vmatprep.subr.mxu0 0.0
  %914 = vmatpush1.msra.mxu0 0.0
  %915 = vmatprep.subr.mxu0 0.0
  %916 = vmatpush1.msra.mxu0 0.0
  %917 = vmatprep.subr.mxu0 0.0
  %918 = vmatpush1.msra.mxu0 0.0
  %919 = vmatprep.subr.mxu0 0.0
  %920 = vmatpush1.msra.mxu0 0.0
  %921 = vmatprep.subr.mxu0 0.0
  %922 = vmatpush1.msra.mxu0 0.0
  %923 = vmatprep.subr.mxu0 0.0
  %924 = vmatpush1.msra.mxu0 0.0
  %925 = vmatprep.subr.mxu0 0.0
  %926 = vmatpush1.msra.mxu0 0.0
  %927 = vmatprep.subr.mxu0 0.0
  %928 = vmatpush1.msra.mxu0 0.0
  %929 = vmatprep.subr.mxu0 0.0
  %930 = vmatpush1.msra.mxu0 0.0
  %931 = vmatprep.subr.mxu0 0.0
  %932 = vmatpush1.msra.mxu0 0.0
  %933 = vmatprep.subr.mxu0 0.0
  %934 = vmatpush1.msra.mxu0 0.0
  %935 = vmatprep.subr.mxu0 0.0
  %936 = vmatpush1.msra.mxu0 0.0
  %937 = vmatprep.subr.mxu0 0.0
  %938 = vmatpush1.msra.mxu0 0.0
  %939 = vmatprep.subr.mxu0 0.0
  %940 = vmatpush1.msra.mxu0 0.0
  %941 = vmatprep.subr.mxu0 0.0
  %942 = vmatpush1.msra.mxu0 0.0
  %943 = vmatprep.subr.mxu0 0.0
  %944 = vmatpush1.msra.mxu0 0.0
  %945 = vmatprep.subr.mxu0 0.0
  %946 = vmatpush1.msra.mxu0 0.0
  %947 = vmatprep.subr.mxu0 0.0
  %948 = vmatpush1.msra.mxu0 0.0
  %949 = vmatprep.subr.mxu0 0.0
  %950 = vmatpush1.msra.mxu0 0.0
  %951 = vmatprep.subr.mxu0 0.0
  %952 = vmatpush1.msra.mxu0 0.0
  %953 = vmatprep.subr.mxu0 0.0
  %954 = vmatpush1.msra.mxu0 0.0
  %955 = vmatprep.subr.mxu0 0.0
  %956 = vmatpush1.msra.mxu0 0.0
  %957 = vmatprep.subr.mxu0 0.0
  %958 = vmatpush1.msra.mxu0 0.0
  %959 = vmatprep.subr.mxu0 0.0
  %960 = vmatpush1.msra.mxu0 0.0
  %961 = vmatprep.subr.mxu0 0.0
  %962 = vmatpush1.msra.mxu0 0.0
  %963 = vmatprep.subr.mxu0 0.0
  %964 = vmatpush1.msra.mxu0 0.0
  %965 = vmatprep.subr.mxu0 0.0
  %966 = vmatpush1.msra.mxu0 0.0
  %967 = vmatprep.subr.mxu0 0.0
  %968 = vmatpush1.msra.mxu0 0.0
  %969 = vmatprep.subr.mxu0 0.0
  %970 = vmatpush1.msra.mxu0 0.0
  %971 = vmatprep.mubr.f32.mxu0 0.0
  %972 = vmatmul.mubr.f32.gmra.mrb[0].mxu0 %v733
  %v973 = vpop.f32.mrb[0].mxu0
  %v974 = vadd.f32 0.0, %v973
  %v975 = vpop.f32.mrb[0].mxu0
  %976 = vdwg.mxu0
  %v977 = vadd.f32 %v906, %v974
  %v978 = vxor.u32 %v977, 2147483648
  %v979 = vmul.f32 %v978, 1.442695
  %v980 = vpow.pop %v979
  %v981 = vadd.f32 %v980, 1.0
  %v982 = vrcp.pop %v981
  %v983 = vmul.f32 1.0, %v982
  %v984 = vtanh.pop %v977
  %v985 = vmul.f32 %v983, %v723
  %987 = vrot.lane.b32.xlu0 %v984, 96
  %v988 = vpop.permute.xlu0 %987
  %v990 = vmul.f32 %v983, %v988
  %992 = vrot.lane.b32.xlu0 %v990, 16
  %v993 = vpop.permute.xlu0 %992
  %v995 = vadd.f32 %v985, %v993
  %v996 = vtanh.pop %v995
  %998 = vrot.lane.b32.xlu0 %v996, 32
  %v999 = vpop.permute.xlu0 %998
  %v1001 = vmul.f32 %v983, %v999
  %1003 = vrot.lane.b32.xlu0 %v1001, 80
  %v1004 = vpop.permute.xlu0 %1003
  %v1005 = vsel %vm358, %v1004, 0
  %1007 = vmatprep.subr.mxu0 0.0
  %1008 = vmatpush1.msra.mxu0 %v352
  %1009 = vmatprep.subr.mxu0 0.0
  %1010 = vmatpush1.msra.mxu0 %v353
  %1011 = vmatprep.subr.mxu0 0.0
  %1012 = vmatpush1.msra.mxu0 0.0
  %1013 = vmatprep.subr.mxu0 0.0
  %1014 = vmatpush1.msra.mxu0 0.0
  %1015 = vmatprep.subr.mxu0 0.0
  %1016 = vmatpush1.msra.mxu0 0.0
  %1017 = vmatprep.subr.mxu0 0.0
  %1018 = vmatpush1.msra.mxu0 0.0
  %1019 = vmatprep.subr.mxu0 0.0
  %1020 = vmatpush1.msra.mxu0 0.0
  %1021 = vmatprep.subr.mxu0 0.0
  %1022 = vmatpush1.msra.mxu0 0.0
  %1023 = vmatprep.subr.mxu0 0.0
  %1024 = vmatpush1.msra.mxu0 0.0
  %1025 = vmatprep.subr.mxu0 0.0
  %1026 = vmatpush1.msra.mxu0 0.0
  %1027 = vmatprep.subr.mxu0 0.0
  %1028 = vmatpush1.msra.mxu0 0.0
  %1029 = vmatprep.subr.mxu0 0.0
  %1030 = vmatpush1.msra.mxu0 0.0
  %1031 = vmatprep.subr.mxu0 0.0
  %1032 = vmatpush1.msra.mxu0 0.0
  %1033 = vmatprep.subr.mxu0 0.0
  %1034 = vmatpush1.msra.mxu0 0.0
  %1035 = vmatprep.subr.mxu0 0.0
  %1036 = vmatpush1.msra.mxu0 0.0
  %1037 = vmatprep.subr.mxu0 0.0
  %1038 = vmatpush1.msra.mxu0 0.0
  %1039 = vmatprep.subr.mxu0 0.0
  %1040 = vmatpush1.msra.mxu0 0.0
  %1041 = vmatprep.subr.mxu0 0.0
  %1042 = vmatpush1.msra.mxu0 0.0
  %1043 = vmatprep.subr.mxu0 0.0
  %1044 = vmatpush1.msra.mxu0 0.0
  %1045 = vmatprep.subr.mxu0 0.0
  %1046 = vmatpush1.msra.mxu0 0.0
  %1047 = vmatprep.subr.mxu0 0.0
  %1048 = vmatpush1.msra.mxu0 0.0
  %1049 = vmatprep.subr.mxu0 0.0
  %1050 = vmatpush1.msra.mxu0 0.0
  %1051 = vmatprep.subr.mxu0 0.0
  %1052 = vmatpush1.msra.mxu0 0.0
  %1053 = vmatprep.subr.mxu0 0.0
  %1054 = vmatpush1.msra.mxu0 0.0
  %1055 = vmatprep.subr.mxu0 0.0
  %1056 = vmatpush1.msra.mxu0 0.0
  %1057 = vmatprep.subr.mxu0 0.0
  %1058 = vmatpush1.msra.mxu0 0.0
  %1059 = vmatprep.subr.mxu0 0.0
  %1060 = vmatpush1.msra.mxu0 0.0
  %1061 = vmatprep.subr.mxu0 0.0
  %1062 = vmatpush1.msra.mxu0 0.0
  %1063 = vmatprep.subr.mxu0 0.0
  %1064 = vmatpush1.msra.mxu0 0.0
  %1065 = vmatprep.subr.mxu0 0.0
  %1066 = vmatpush1.msra.mxu0 0.0
  %1067 = vmatprep.subr.mxu0 0.0
  %1068 = vmatpush1.msra.mxu0 0.0
  %1069 = vmatprep.subr.mxu0 0.0
  %1070 = vmatpush1.msra.mxu0 0.0
  %1071 = vmatprep.mubr.f32.mxu0 0.0
  %1072 = vmatmul.mubr.f32.gmra.mrb[0].mxu0 %v1005
  %v1073 = vpop.f32.mrb[0].mxu0
  %v1074 = vadd.f32 0.0, %v1073
  %v1075 = vpop.f32.mrb[0].mxu0
  %1076 = vdwg.mxu0
  %1078 = vrot.lane.b32.xlu0 %v904, 80
  %v1079 = vpop.permute.xlu0 %1078
  %v1080 = vsel %vm358, %v1079, 0
  %1082 = vmatprep.subr.mxu0 0.0
  %1083 = vmatpush1.msra.mxu0 %v354
  %1084 = vmatprep.subr.mxu0 0.0
  %1085 = vmatpush1.msra.mxu0 %v355
  %1086 = vmatprep.subr.mxu0 0.0
  %1087 = vmatpush1.msra.mxu0 0.0
  %1088 = vmatprep.subr.mxu0 0.0
  %1089 = vmatpush1.msra.mxu0 0.0
  %1090 = vmatprep.subr.mxu0 0.0
  %1091 = vmatpush1.msra.mxu0 0.0
  %1092 = vmatprep.subr.mxu0 0.0
  %1093 = vmatpush1.msra.mxu0 0.0
  %1094 = vmatprep.subr.mxu0 0.0
  %1095 = vmatpush1.msra.mxu0 0.0
  %1096 = vmatprep.subr.mxu0 0.0
  %1097 = vmatpush1.msra.mxu0 0.0
  %1098 = vmatprep.subr.mxu0 0.0
  %1099 = vmatpush1.msra.mxu0 0.0
  %1100 = vmatprep.subr.mxu0 0.0
  %1101 = vmatpush1.msra.mxu0 0.0
  %1102 = vmatprep.subr.mxu0 0.0
  %1103 = vmatpush1.msra.mxu0 0.0
  %1104 = vmatprep.subr.mxu0 0.0
  %1105 = vmatpush1.msra.mxu0 0.0
  %1106 = vmatprep.subr.mxu0 0.0
  %1107 = vmatpush1.msra.mxu0 0.0
  %1108 = vmatprep.subr.mxu0 0.0
  %1109 = vmatpush1.msra.mxu0 0.0
  %1110 = vmatprep.subr.mxu0 0.0
  %1111 = vmatpush1.msra.mxu0 0.0
  %1112 = vmatprep.subr.mxu0 0.0
  %1113 = vmatpush1.msra.mxu0 0.0
  %1114 = vmatprep.subr.mxu0 0.0
  %1115 = vmatpush1.msra.mxu0 0.0
  %1116 = vmatprep.subr.mxu0 0.0
  %1117 = vmatpush1.msra.mxu0 0.0
  %1118 = vmatprep.subr.mxu0 0.0
  %1119 = vmatpush1.msra.mxu0 0.0
  %1120 = vmatprep.subr.mxu0 0.0
  %1121 = vmatpush1.msra.mxu0 0.0
  %1122 = vmatprep.subr.mxu0 0.0
  %1123 = vmatpush1.msra.mxu0 0.0
  %1124 = vmatprep.subr.mxu0 0.0
  %1125 = vmatpush1.msra.mxu0 0.0
  %1126 = vmatprep.subr.mxu0 0.0
  %1127 = vmatpush1.msra.mxu0 0.0
  %1128 = vmatprep.subr.mxu0 0.0
  %1129 = vmatpush1.msra.mxu0 0.0
  %1130 = vmatprep.subr.mxu0 0.0
  %1131 = vmatpush1.msra.mxu0 0.0
  %1132 = vmatprep.subr.mxu0 0.0
  %1133 = vmatpush1.msra.mxu0 0.0
  %1134 = vmatprep.subr.mxu0 0.0
  %1135 = vmatpush1.msra.mxu0 0.0
  %1136 = vmatprep.subr.mxu0 0.0
  %1137 = vmatpush1.msra.mxu0 0.0
  %1138 = vmatprep.subr.mxu0 0.0
  %1139 = vmatpush1.msra.mxu0 0.0
  %1140 = vmatprep.subr.mxu0 0.0
  %1141 = vmatpush1.msra.mxu0 0.0
  %1142 = vmatprep.subr.mxu0 0.0
  %1143 = vmatpush1.msra.mxu0 0.0
  %1144 = vmatprep.subr.mxu0 0.0
  %1145 = vmatpush1.msra.mxu0 0.0
  %1146 = vmatprep.mubr.f32.mxu0 0.0
  %1147 = vmatmul.mubr.f32.gmra.mrb[0].mxu0 %v1080
  %v1148 = vpop.f32.mrb[0].mxu0
  %v1149 = vadd.f32 %v1074, %v1148
  %v1150 = vpop.f32.mrb[0].mxu0
  %1151 = vdwg.mxu0
  %v1152 = vadd.f32 %v1149, %v606
  %v1153 = vxor.u32 %v1152, 2147483648
  %v1154 = vmul.f32 %v1153, 1.442695
  %v1155 = vpow.pop %v1154
  %v1156 = vadd.f32 %v1155, 1.0
  %v1157 = vrcp.pop %v1156
  %v1158 = vmul.f32 1.0, %v1157
  %v1159 = vtanh.pop %v1152
  %v1160 = vmul.f32 %v1158, %v898
  %1162 = vrot.lane.b32.xlu0 %v1159, 96
  %v1163 = vpop.permute.xlu0 %1162
  %v1165 = vmul.f32 %v1158, %v1163
  %1167 = vrot.lane.b32.xlu0 %v1165, 16
  %v1168 = vpop.permute.xlu0 %1167
  %v1170 = vadd.f32 %v1160, %v1168
  %v1171 = vtanh.pop %v1170
  %1173 = vrot.lane.b32.xlu0 %v1171, 32
  %v1174 = vpop.permute.xlu0 %1173
  %v1176 = vmul.f32 %v1158, %v1174
  %s1177 = scalar_lea.vmem [#allocation2], 24
  %v1178 = vld [vmem:[%s1177] sm:$0xff]
  %1179 = vmatprep.subr.mxu0 0.0
  %1180 = vmatpush1.msra.mxu0 %v350
  %1181 = vmatprep.subr.mxu0 0.0
  %1182 = vmatpush1.msra.mxu0 %v351
  %1183 = vmatprep.subr.mxu0 0.0
  %1184 = vmatpush1.msra.mxu0 0.0
  %1185 = vmatprep.subr.mxu0 0.0
  %1186 = vmatpush1.msra.mxu0 0.0
  %1187 = vmatprep.subr.mxu0 0.0
  %1188 = vmatpush1.msra.mxu0 0.0
  %1189 = vmatprep.subr.mxu0 0.0
  %1190 = vmatpush1.msra.mxu0 0.0
  %1191 = vmatprep.subr.mxu0 0.0
  %1192 = vmatpush1.msra.mxu0 0.0
  %1193 = vmatprep.subr.mxu0 0.0
  %1194 = vmatpush1.msra.mxu0 0.0
  %1195 = vmatprep.subr.mxu0 0.0
  %1196 = vmatpush1.msra.mxu0 0.0
  %1197 = vmatprep.subr.mxu0 0.0
  %1198 = vmatpush1.msra.mxu0 0.0
  %1199 = vmatprep.subr.mxu0 0.0
  %1200 = vmatpush1.msra.mxu0 0.0
  %1201 = vmatprep.subr.mxu0 0.0
  %1202 = vmatpush1.msra.mxu0 0.0
  %1203 = vmatprep.subr.mxu0 0.0
  %1204 = vmatpush1.msra.mxu0 0.0
  %1205 = vmatprep.subr.mxu0 0.0
  %1206 = vmatpush1.msra.mxu0 0.0
  %1207 = vmatprep.subr.mxu0 0.0
  %1208 = vmatpush1.msra.mxu0 0.0
  %1209 = vmatprep.subr.mxu0 0.0
  %1210 = vmatpush1.msra.mxu0 0.0
  %1211 = vmatprep.subr.mxu0 0.0
  %1212 = vmatpush1.msra.mxu0 0.0
  %1213 = vmatprep.subr.mxu0 0.0
  %1214 = vmatpush1.msra.mxu0 0.0
  %1215 = vmatprep.subr.mxu0 0.0
  %1216 = vmatpush1.msra.mxu0 0.0
  %1217 = vmatprep.subr.mxu0 0.0
  %1218 = vmatpush1.msra.mxu0 0.0
  %1219 = vmatprep.subr.mxu0 0.0
  %1220 = vmatpush1.msra.mxu0 0.0
  %1221 = vmatprep.subr.mxu0 0.0
  %1222 = vmatpush1.msra.mxu0 0.0
  %1223 = vmatprep.subr.mxu0 0.0
  %1224 = vmatpush1.msra.mxu0 0.0
  %1225 = vmatprep.subr.mxu0 0.0
  %1226 = vmatpush1.msra.mxu0 0.0
  %1227 = vmatprep.subr.mxu0 0.0
  %1228 = vmatpush1.msra.mxu0 0.0
  %1229 = vmatprep.subr.mxu0 0.0
  %1230 = vmatpush1.msra.mxu0 0.0
  %1231 = vmatprep.subr.mxu0 0.0
  %1232 = vmatpush1.msra.mxu0 0.0
  %1233 = vmatprep.subr.mxu0 0.0
  %1234 = vmatpush1.msra.mxu0 0.0
  %1235 = vmatprep.subr.mxu0 0.0
  %1236 = vmatpush1.msra.mxu0 0.0
  %1237 = vmatprep.subr.mxu0 0.0
  %1238 = vmatpush1.msra.mxu0 0.0
  %1239 = vmatprep.subr.mxu0 0.0
  %1240 = vmatpush1.msra.mxu0 0.0
  %1241 = vmatprep.subr.mxu0 0.0
  %1242 = vmatpush1.msra.mxu0 0.0
  %1243 = vmatprep.mubr.f32.mxu0 0.0
  %1244 = vmatmul.mubr.f32.gmra.mrb[0].mxu0 %v1005
  %v1245 = vpop.f32.mrb[0].mxu0
  %v1246 = vadd.f32 0.0, %v1245
  %v1247 = vpop.f32.mrb[0].mxu0
  %1248 = vdwg.mxu0
  %v1249 = vadd.f32 %v1178, %v1246
  %v1250 = vxor.u32 %v1249, 2147483648
  %v1251 = vmul.f32 %v1250, 1.442695
  %v1252 = vpow.pop %v1251
  %v1253 = vadd.f32 %v1252, 1.0
  %v1254 = vrcp.pop %v1253
  %v1255 = vmul.f32 1.0, %v1254
  %v1256 = vtanh.pop %v1249
  %v1257 = vmul.f32 %v1255, %v995
  %1259 = vrot.lane.b32.xlu0 %v1256, 96
  %v1260 = vpop.permute.xlu0 %1259
  %v1262 = vmul.f32 %v1255, %v1260
  %1264 = vrot.lane.b32.xlu0 %v1262, 16
  %v1265 = vpop.permute.xlu0 %1264
  %v1267 = vadd.f32 %v1257, %v1265
  %v1268 = vtanh.pop %v1267
  %1270 = vrot.lane.b32.xlu0 %v1268, 32
  %v1271 = vpop.permute.xlu0 %1270
  %v1273 = vmul.f32 %v1255, %v1271
  %1275 = vrot.lane.b32.xlu0 %v1273, 80
  %v1276 = vpop.permute.xlu0 %1275
  %v1277 = vsel %vm358, %v1276, 0
  %1279 = vmatprep.subr.mxu0 0.0
  %1280 = vmatpush1.msra.mxu0 %v352
  %1281 = vmatprep.subr.mxu0 0.0
  %1282 = vmatpush1.msra.mxu0 %v353
  %1283 = vmatprep.subr.mxu0 0.0
  %1284 = vmatpush1.msra.mxu0 0.0
  %1285 = vmatprep.subr.mxu0 0.0
  %1286 = vmatpush1.msra.mxu0 0.0
  %1287 = vmatprep.subr.mxu0 0.0
  %1288 = vmatpush1.msra.mxu0 0.0
  %1289 = vmatprep.subr.mxu0 0.0
  %1290 = vmatpush1.msra.mxu0 0.0
  %1291 = vmatprep.subr.mxu0 0.0
  %1292 = vmatpush1.msra.mxu0 0.0
  %1293 = vmatprep.subr.mxu0 0.0
  %1294 = vmatpush1.msra.mxu0 0.0
  %1295 = vmatprep.subr.mxu0 0.0
  %1296 = vmatpush1.msra.mxu0 0.0
  %1297 = vmatprep.subr.mxu0 0.0
  %1298 = vmatpush1.msra.mxu0 0.0
  %1299 = vmatprep.subr.mxu0 0.0
  %1300 = vmatpush1.msra.mxu0 0.0
  %1301 = vmatprep.subr.mxu0 0.0
  %1302 = vmatpush1.msra.mxu0 0.0
  %1303 = vmatprep.subr.mxu0 0.0
  %1304 = vmatpush1.msra.mxu0 0.0
  %1305 = vmatprep.subr.mxu0 0.0
  %1306 = vmatpush1.msra.mxu0 0.0
  %1307 = vmatprep.subr.mxu0 0.0
  %1308 = vmatpush1.msra.mxu0 0.0
  %1309 = vmatprep.subr.mxu0 0.0
  %1310 = vmatpush1.msra.mxu0 0.0
  %1311 = vmatprep.subr.mxu0 0.0
  %1312 = vmatpush1.msra.mxu0 0.0
  %1313 = vmatprep.subr.mxu0 0.0
  %1314 = vmatpush1.msra.mxu0 0.0
  %1315 = vmatprep.subr.mxu0 0.0
  %1316 = vmatpush1.msra.mxu0 0.0
  %1317 = vmatprep.subr.mxu0 0.0
  %1318 = vmatpush1.msra.mxu0 0.0
  %1319 = vmatprep.subr.mxu0 0.0
  %1320 = vmatpush1.msra.mxu0 0.0
  %1321 = vmatprep.subr.mxu0 0.0
  %1322 = vmatpush1.msra.mxu0 0.0
  %1323 = vmatprep.subr.mxu0 0.0
  %1324 = vmatpush1.msra.mxu0 0.0
  %1325 = vmatprep.subr.mxu0 0.0
  %1326 = vmatpush1.msra.mxu0 0.0
  %1327 = vmatprep.subr.mxu0 0.0
  %1328 = vmatpush1.msra.mxu0 0.0
  %1329 = vmatprep.subr.mxu0 0.0
  %1330 = vmatpush1.msra.mxu0 0.0
  %1331 = vmatprep.subr.mxu0 0.0
  %1332 = vmatpush1.msra.mxu0 0.0
  %1333 = vmatprep.subr.mxu0 0.0
  %1334 = vmatpush1.msra.mxu0 0.0
  %1335 = vmatprep.subr.mxu0 0.0
  %1336 = vmatpush1.msra.mxu0 0.0
  %1337 = vmatprep.subr.mxu0 0.0
  %1338 = vmatpush1.msra.mxu0 0.0
  %1339 = vmatprep.subr.mxu0 0.0
  %1340 = vmatpush1.msra.mxu0 0.0
  %1341 = vmatprep.subr.mxu0 0.0
  %1342 = vmatpush1.msra.mxu0 0.0
  %1343 = vmatprep.mubr.f32.mxu0 0.0
  %1344 = vmatmul.mubr.f32.gmra.mrb[0].mxu0 %v1277
  %v1345 = vpop.f32.mrb[0].mxu0
  %v1346 = vadd.f32 0.0, %v1345
  %v1347 = vpop.f32.mrb[0].mxu0
  %1348 = vdwg.mxu0
  %1350 = vrot.lane.b32.xlu0 %v1176, 80
  %v1351 = vpop.permute.xlu0 %1350
  %v1352 = vsel %vm358, %v1351, 0
  %1354 = vmatprep.subr.mxu0 0.0
  %1355 = vmatpush1.msra.mxu0 %v354
  %1356 = vmatprep.subr.mxu0 0.0
  %1357 = vmatpush1.msra.mxu0 %v355
  %1358 = vmatprep.subr.mxu0 0.0
  %1359 = vmatpush1.msra.mxu0 0.0
  %1360 = vmatprep.subr.mxu0 0.0
  %1361 = vmatpush1.msra.mxu0 0.0
  %1362 = vmatprep.subr.mxu0 0.0
  %1363 = vmatpush1.msra.mxu0 0.0
  %1364 = vmatprep.subr.mxu0 0.0
  %1365 = vmatpush1.msra.mxu0 0.0
  %1366 = vmatprep.subr.mxu0 0.0
  %1367 = vmatpush1.msra.mxu0 0.0
  %1368 = vmatprep.subr.mxu0 0.0
  %1369 = vmatpush1.msra.mxu0 0.0
  %1370 = vmatprep.subr.mxu0 0.0
  %1371 = vmatpush1.msra.mxu0 0.0
  %1372 = vmatprep.subr.mxu0 0.0
  %1373 = vmatpush1.msra.mxu0 0.0
  %1374 = vmatprep.subr.mxu0 0.0
  %1375 = vmatpush1.msra.mxu0 0.0
  %1376 = vmatprep.subr.mxu0 0.0
  %1377 = vmatpush1.msra.mxu0 0.0
  %1378 = vmatprep.subr.mxu0 0.0
  %1379 = vmatpush1.msra.mxu0 0.0
  %1380 = vmatprep.subr.mxu0 0.0
  %1381 = vmatpush1.msra.mxu0 0.0
  %1382 = vmatprep.subr.mxu0 0.0
  %1383 = vmatpush1.msra.mxu0 0.0
  %1384 = vmatprep.subr.mxu0 0.0
  %1385 = vmatpush1.msra.mxu0 0.0
  %1386 = vmatprep.subr.mxu0 0.0
  %1387 = vmatpush1.msra.mxu0 0.0
  %1388 = vmatprep.subr.mxu0 0.0
  %1389 = vmatpush1.msra.mxu0 0.0
  %1390 = vmatprep.subr.mxu0 0.0
  %1391 = vmatpush1.msra.mxu0 0.0
  %1392 = vmatprep.subr.mxu0 0.0
  %1393 = vmatpush1.msra.mxu0 0.0
  %1394 = vmatprep.subr.mxu0 0.0
  %1395 = vmatpush1.msra.mxu0 0.0
  %1396 = vmatprep.subr.mxu0 0.0
  %1397 = vmatpush1.msra.mxu0 0.0
  %1398 = vmatprep.subr.mxu0 0.0
  %1399 = vmatpush1.msra.mxu0 0.0
  %1400 = vmatprep.subr.mxu0 0.0
  %1401 = vmatpush1.msra.mxu0 0.0
  %1402 = vmatprep.subr.mxu0 0.0
  %1403 = vmatpush1.msra.mxu0 0.0
  %1404 = vmatprep.subr.mxu0 0.0
  %1405 = vmatpush1.msra.mxu0 0.0
  %1406 = vmatprep.subr.mxu0 0.0
  %1407 = vmatpush1.msra.mxu0 0.0
  %1408 = vmatprep.subr.mxu0 0.0
  %1409 = vmatpush1.msra.mxu0 0.0
  %1410 = vmatprep.subr.mxu0 0.0
  %1411 = vmatpush1.msra.mxu0 0.0
  %1412 = vmatprep.subr.mxu0 0.0
  %1413 = vmatpush1.msra.mxu0 0.0
  %1414 = vmatprep.subr.mxu0 0.0
  %1415 = vmatpush1.msra.mxu0 0.0
  %1416 = vmatprep.subr.mxu0 0.0
  %1417 = vmatpush1.msra.mxu0 0.0
  %1418 = vmatprep.mubr.f32.mxu0 0.0
  %1419 = vmatmul.mubr.f32.gmra.mrb[0].mxu0 %v1352
  %v1420 = vpop.f32.mrb[0].mxu0
  %v1421 = vadd.f32 %v1346, %v1420
  %v1422 = vpop.f32.mrb[0].mxu0
  %1423 = vdwg.mxu0
  %v1424 = vadd.f32 %v1421, %v606
  %v1425 = vxor.u32 %v1424, 2147483648
  %v1426 = vmul.f32 %v1425, 1.442695
  %v1427 = vpow.pop %v1426
  %v1428 = vadd.f32 %v1427, 1.0
  %v1429 = vrcp.pop %v1428
  %v1430 = vmul.f32 1.0, %v1429
  %v1431 = vtanh.pop %v1424
  %v1432 = vmul.f32 %v1430, %v1170
  %1434 = vrot.lane.b32.xlu0 %v1431, 96
  %v1435 = vpop.permute.xlu0 %1434
  %v1437 = vmul.f32 %v1430, %v1435
  %1439 = vrot.lane.b32.xlu0 %v1437, 16
  %v1440 = vpop.permute.xlu0 %1439
  %v1442 = vadd.f32 %v1432, %v1440
  %v1443 = vtanh.pop %v1442
  %1445 = vrot.lane.b32.xlu0 %v1443, 32
  %v1446 = vpop.permute.xlu0 %1445
  %v1448 = vmul.f32 %v1430, %v1446
  %s1449 = scalar_lea.vmem [#allocation2], 32
  %v1450 = vld [vmem:[%s1449] sm:$0xff]
  %1451 = vmatprep.subr.mxu0 0.0
  %1452 = vmatpush1.msra.mxu0 %v350
  %1453 = vmatprep.subr.mxu0 0.0
  %1454 = vmatpush1.msra.mxu0 %v351
  %1455 = vmatprep.subr.mxu0 0.0
  %1456 = vmatpush1.msra.mxu0 0.0
  %1457 = vmatprep.subr.mxu0 0.0
  %1458 = vmatpush1.msra.mxu0 0.0
  %1459 = vmatprep.subr.mxu0 0.0
  %1460 = vmatpush1.msra.mxu0 0.0
  %1461 = vmatprep.subr.mxu0 0.0
  %1462 = vmatpush1.msra.mxu0 0.0
  %1463 = vmatprep.subr.mxu0 0.0
  %1464 = vmatpush1.msra.mxu0 0.0
  %1465 = vmatprep.subr.mxu0 0.0
  %1466 = vmatpush1.msra.mxu0 0.0
  %1467 = vmatprep.subr.mxu0 0.0
  %1468 = vmatpush1.msra.mxu0 0.0
  %1469 = vmatprep.subr.mxu0 0.0
  %1470 = vmatpush1.msra.mxu0 0.0
  %1471 = vmatprep.subr.mxu0 0.0
  %1472 = vmatpush1.msra.mxu0 0.0
  %1473 = vmatprep.subr.mxu0 0.0
  %1474 = vmatpush1.msra.mxu0 0.0
  %1475 = vmatprep.subr.mxu0 0.0
  %1476 = vmatpush1.msra.mxu0 0.0
  %1477 = vmatprep.subr.mxu0 0.0
  %1478 = vmatpush1.msra.mxu0 0.0
  %1479 = vmatprep.subr.mxu0 0.0
  %1480 = vmatpush1.msra.mxu0 0.0
  %1481 = vmatprep.subr.mxu0 0.0
  %1482 = vmatpush1.msra.mxu0 0.0
  %1483 = vmatprep.subr.mxu0 0.0
  %1484 = vmatpush1.msra.mxu0 0.0
  %1485 = vmatprep.subr.mxu0 0.0
  %1486 = vmatpush1.msra.mxu0 0.0
  %1487 = vmatprep.subr.mxu0 0.0
  %1488 = vmatpush1.msra.mxu0 0.0
  %1489 = vmatprep.subr.mxu0 0.0
  %1490 = vmatpush1.msra.mxu0 0.0
  %1491 = vmatprep.subr.mxu0 0.0
  %1492 = vmatpush1.msra.mxu0 0.0
  %1493 = vmatprep.subr.mxu0 0.0
  %1494 = vmatpush1.msra.mxu0 0.0
  %1495 = vmatprep.subr.mxu0 0.0
  %1496 = vmatpush1.msra.mxu0 0.0
  %1497 = vmatprep.subr.mxu0 0.0
  %1498 = vmatpush1.msra.mxu0 0.0
  %1499 = vmatprep.subr.mxu0 0.0
  %1500 = vmatpush1.msra.mxu0 0.0
  %1501 = vmatprep.subr.mxu0 0.0
  %1502 = vmatpush1.msra.mxu0 0.0
  %1503 = vmatprep.subr.mxu0 0.0
  %1504 = vmatpush1.msra.mxu0 0.0
  %1505 = vmatprep.subr.mxu0 0.0
  %1506 = vmatpush1.msra.mxu0 0.0
  %1507 = vmatprep.subr.mxu0 0.0
  %1508 = vmatpush1.msra.mxu0 0.0
  %1509 = vmatprep.subr.mxu0 0.0
  %1510 = vmatpush1.msra.mxu0 0.0
  %1511 = vmatprep.subr.mxu0 0.0
  %1512 = vmatpush1.msra.mxu0 0.0
  %1513 = vmatprep.subr.mxu0 0.0
  %1514 = vmatpush1.msra.mxu0 0.0
  %1515 = vmatprep.mubr.f32.mxu0 0.0
  %1516 = vmatmul.mubr.f32.gmra.mrb[0].mxu0 %v1277
  %v1517 = vpop.f32.mrb[0].mxu0
  %v1518 = vadd.f32 0.0, %v1517
  %v1519 = vpop.f32.mrb[0].mxu0
  %1520 = vdwg.mxu0
  %v1521 = vadd.f32 %v1450, %v1518
  %v1522 = vxor.u32 %v1521, 2147483648
  %v1523 = vmul.f32 %v1522, 1.442695
  %v1524 = vpow.pop %v1523
  %v1525 = vadd.f32 %v1524, 1.0
  %v1526 = vrcp.pop %v1525
  %v1527 = vmul.f32 1.0, %v1526
  %v1528 = vtanh.pop %v1521
  %v1529 = vmul.f32 %v1527, %v1267
  %1531 = vrot.lane.b32.xlu0 %v1528, 96
  %v1532 = vpop.permute.xlu0 %1531
  %v1534 = vmul.f32 %v1527, %v1532
  %1536 = vrot.lane.b32.xlu0 %v1534, 16
  %v1537 = vpop.permute.xlu0 %1536
  %v1539 = vadd.f32 %v1529, %v1537
  %v1540 = vtanh.pop %v1539
  %1542 = vrot.lane.b32.xlu0 %v1540, 32
  %v1543 = vpop.permute.xlu0 %1542
  %v1545 = vmul.f32 %v1527, %v1543
  %1547 = vrot.lane.b32.xlu0 %v1545, 80
  %v1548 = vpop.permute.xlu0 %1547
  %v1549 = vsel %vm358, %v1548, 0
  %1551 = vmatprep.subr.mxu0 0.0
  %1552 = vmatpush1.msra.mxu0 %v352
  %1553 = vmatprep.subr.mxu0 0.0
  %1554 = vmatpush1.msra.mxu0 %v353
  %1555 = vmatprep.subr.mxu0 0.0
  %1556 = vmatpush1.msra.mxu0 0.0
  %1557 = vmatprep.subr.mxu0 0.0
  %1558 = vmatpush1.msra.mxu0 0.0
  %1559 = vmatprep.subr.mxu0 0.0
  %1560 = vmatpush1.msra.mxu0 0.0
  %1561 = vmatprep.subr.mxu0 0.0
  %1562 = vmatpush1.msra.mxu0 0.0
  %1563 = vmatprep.subr.mxu0 0.0
  %1564 = vmatpush1.msra.mxu0 0.0
  %1565 = vmatprep.subr.mxu0 0.0
  %1566 = vmatpush1.msra.mxu0 0.0
  %1567 = vmatprep.subr.mxu0 0.0
  %1568 = vmatpush1.msra.mxu0 0.0
  %1569 = vmatprep.subr.mxu0 0.0
  %1570 = vmatpush1.msra.mxu0 0.0
  %1571 = vmatprep.subr.mxu0 0.0
  %1572 = vmatpush1.msra.mxu0 0.0
  %1573 = vmatprep.subr.mxu0 0.0
  %1574 = vmatpush1.msra.mxu0 0.0
  %1575 = vmatprep.subr.mxu0 0.0
  %1576 = vmatpush1.msra.mxu0 0.0
  %1577 = vmatprep.subr.mxu0 0.0
  %1578 = vmatpush1.msra.mxu0 0.0
  %1579 = vmatprep.subr.mxu0 0.0
  %1580 = vmatpush1.msra.mxu0 0.0
  %1581 = vmatprep.subr.mxu0 0.0
  %1582 = vmatpush1.msra.mxu0 0.0
  %1583 = vmatprep.subr.mxu0 0.0
  %1584 = vmatpush1.msra.mxu0 0.0
  %1585 = vmatprep.subr.mxu0 0.0
  %1586 = vmatpush1.msra.mxu0 0.0
  %1587 = vmatprep.subr.mxu0 0.0
  %1588 = vmatpush1.msra.mxu0 0.0
  %1589 = vmatprep.subr.mxu0 0.0
  %1590 = vmatpush1.msra.mxu0 0.0
  %1591 = vmatprep.subr.mxu0 0.0
  %1592 = vmatpush1.msra.mxu0 0.0
  %1593 = vmatprep.subr.mxu0 0.0
  %1594 = vmatpush1.msra.mxu0 0.0
  %1595 = vmatprep.subr.mxu0 0.0
  %1596 = vmatpush1.msra.mxu0 0.0
  %1597 = vmatprep.subr.mxu0 0.0
  %1598 = vmatpush1.msra.mxu0 0.0
  %1599 = vmatprep.subr.mxu0 0.0
  %1600 = vmatpush1.msra.mxu0 0.0
  %1601 = vmatprep.subr.mxu0 0.0
  %1602 = vmatpush1.msra.mxu0 0.0
  %1603 = vmatprep.subr.mxu0 0.0
  %1604 = vmatpush1.msra.mxu0 0.0
  %1605 = vmatprep.subr.mxu0 0.0
  %1606 = vmatpush1.msra.mxu0 0.0
  %1607 = vmatprep.subr.mxu0 0.0
  %1608 = vmatpush1.msra.mxu0 0.0
  %1609 = vmatprep.subr.mxu0 0.0
  %1610 = vmatpush1.msra.mxu0 0.0
  %1611 = vmatprep.subr.mxu0 0.0
  %1612 = vmatpush1.msra.mxu0 0.0
  %1613 = vmatprep.subr.mxu0 0.0
  %1614 = vmatpush1.msra.mxu0 0.0
  %1615 = vmatprep.mubr.f32.mxu0 0.0
  %1616 = vmatmul.mubr.f32.gmra.mrb[0].mxu0 %v1549
  %v1617 = vpop.f32.mrb[0].mxu0
  %v1618 = vadd.f32 0.0, %v1617
  %v1619 = vpop.f32.mrb[0].mxu0
  %1620 = vdwg.mxu0
  %1622 = vrot.lane.b32.xlu0 %v1448, 80
  %v1623 = vpop.permute.xlu0 %1622
  %v1624 = vsel %vm358, %v1623, 0
  %1626 = vmatprep.subr.mxu0 0.0
  %1627 = vmatpush1.msra.mxu0 %v354
  %1628 = vmatprep.subr.mxu0 0.0
  %1629 = vmatpush1.msra.mxu0 %v355
  %1630 = vmatprep.subr.mxu0 0.0
  %1631 = vmatpush1.msra.mxu0 0.0
  %1632 = vmatprep.subr.mxu0 0.0
  %1633 = vmatpush1.msra.mxu0 0.0
  %1634 = vmatprep.subr.mxu0 0.0
  %1635 = vmatpush1.msra.mxu0 0.0
  %1636 = vmatprep.subr.mxu0 0.0
  %1637 = vmatpush1.msra.mxu0 0.0
  %1638 = vmatprep.subr.mxu0 0.0
  %1639 = vmatpush1.msra.mxu0 0.0
  %1640 = vmatprep.subr.mxu0 0.0
  %1641 = vmatpush1.msra.mxu0 0.0
  %1642 = vmatprep.subr.mxu0 0.0
  %1643 = vmatpush1.msra.mxu0 0.0
  %1644 = vmatprep.subr.mxu0 0.0
  %1645 = vmatpush1.msra.mxu0 0.0
  %1646 = vmatprep.subr.mxu0 0.0
  %1647 = vmatpush1.msra.mxu0 0.0
  %1648 = vmatprep.subr.mxu0 0.0
  %1649 = vmatpush1.msra.mxu0 0.0
  %1650 = vmatprep.subr.mxu0 0.0
  %1651 = vmatpush1.msra.mxu0 0.0
  %1652 = vmatprep.subr.mxu0 0.0
  %1653 = vmatpush1.msra.mxu0 0.0
  %1654 = vmatprep.subr.mxu0 0.0
  %1655 = vmatpush1.msra.mxu0 0.0
  %1656 = vmatprep.subr.mxu0 0.0
  %1657 = vmatpush1.msra.mxu0 0.0
  %1658 = vmatprep.subr.mxu0 0.0
  %1659 = vmatpush1.msra.mxu0 0.0
  %1660 = vmatprep.subr.mxu0 0.0
  %1661 = vmatpush1.msra.mxu0 0.0
  %1662 = vmatprep.subr.mxu0 0.0
  %1663 = vmatpush1.msra.mxu0 0.0
  %1664 = vmatprep.subr.mxu0 0.0
  %1665 = vmatpush1.msra.mxu0 0.0
  %1666 = vmatprep.subr.mxu0 0.0
  %1667 = vmatpush1.msra.mxu0 0.0
  %1668 = vmatprep.subr.mxu0 0.0
  %1669 = vmatpush1.msra.mxu0 0.0
  %1670 = vmatprep.subr.mxu0 0.0
  %1671 = vmatpush1.msra.mxu0 0.0
  %1672 = vmatprep.subr.mxu0 0.0
  %1673 = vmatpush1.msra.mxu0 0.0
  %1674 = vmatprep.subr.mxu0 0.0
  %1675 = vmatpush1.msra.mxu0 0.0
  %1676 = vmatprep.subr.mxu0 0.0
  %1677 = vmatpush1.msra.mxu0 0.0
  %1678 = vmatprep.subr.mxu0 0.0
  %1679 = vmatpush1.msra.mxu0 0.0
  %1680 = vmatprep.subr.mxu0 0.0
  %1681 = vmatpush1.msra.mxu0 0.0
  %1682 = vmatprep.subr.mxu0 0.0
  %1683 = vmatpush1.msra.mxu0 0.0
  %1684 = vmatprep.subr.mxu0 0.0
  %1685 = vmatpush1.msra.mxu0 0.0
  %1686 = vmatprep.subr.mxu0 0.0
  %1687 = vmatpush1.msra.mxu0 0.0
  %1688 = vmatprep.subr.mxu0 0.0
  %1689 = vmatpush1.msra.mxu0 0.0
  %1690 = vmatprep.mubr.f32.mxu0 0.0
  %1691 = vmatmul.mubr.f32.gmra.mrb[0].mxu0 %v1624
  %v1692 = vpop.f32.mrb[0].mxu0
  %v1693 = vadd.f32 %v1618, %v1692
  %v1694 = vpop.f32.mrb[0].mxu0
  %1695 = vdwg.mxu0
  %v1696 = vadd.f32 %v1693, %v606
  %v1697 = vxor.u32 %v1696, 2147483648
  %v1698 = vmul.f32 %v1697, 1.442695
  %v1699 = vpow.pop %v1698
  %v1700 = vadd.f32 %v1699, 1.0
  %v1701 = vrcp.pop %v1700
  %v1702 = vmul.f32 1.0, %v1701
  %v1703 = vtanh.pop %v1696
  %v1704 = vmul.f32 %v1702, %v1442
  %1706 = vrot.lane.b32.xlu0 %v1703, 96
  %v1707 = vpop.permute.xlu0 %1706
  %v1709 = vmul.f32 %v1702, %v1707
  %1711 = vrot.lane.b32.xlu0 %v1709, 16
  %v1712 = vpop.permute.xlu0 %1711
  %v1714 = vadd.f32 %v1704, %v1712
  %v1715 = vtanh.pop %v1714
  %1717 = vrot.lane.b32.xlu0 %v1715, 32
  %v1718 = vpop.permute.xlu0 %1717
  %v1720 = vmul.f32 %v1702, %v1718
  %s1721 = scalar_lea.vmem [#allocation2], 40
  %v1722 = vld [vmem:[%s1721] sm:$0xff]
  %1723 = vmatprep.subr.mxu0 0.0
  %1724 = vmatpush1.msra.mxu0 %v350
  %1725 = vmatprep.subr.mxu0 0.0
  %1726 = vmatpush1.msra.mxu0 %v351
  %1727 = vmatprep.subr.mxu0 0.0
  %1728 = vmatpush1.msra.mxu0 0.0
  %1729 = vmatprep.subr.mxu0 0.0
  %1730 = vmatpush1.msra.mxu0 0.0
  %1731 = vmatprep.subr.mxu0 0.0
  %1732 = vmatpush1.msra.mxu0 0.0
  %1733 = vmatprep.subr.mxu0 0.0
  %1734 = vmatpush1.msra.mxu0 0.0
  %1735 = vmatprep.subr.mxu0 0.0
  %1736 = vmatpush1.msra.mxu0 0.0
  %1737 = vmatprep.subr.mxu0 0.0
  %1738 = vmatpush1.msra.mxu0 0.0
  %1739 = vmatprep.subr.mxu0 0.0
  %1740 = vmatpush1.msra.mxu0 0.0
  %1741 = vmatprep.subr.mxu0 0.0
  %1742 = vmatpush1.msra.mxu0 0.0
  %1743 = vmatprep.subr.mxu0 0.0
  %1744 = vmatpush1.msra.mxu0 0.0
  %1745 = vmatprep.subr.mxu0 0.0
  %1746 = vmatpush1.msra.mxu0 0.0
  %1747 = vmatprep.subr.mxu0 0.0
  %1748 = vmatpush1.msra.mxu0 0.0
  %1749 = vmatprep.subr.mxu0 0.0
  %1750 = vmatpush1.msra.mxu0 0.0
  %1751 = vmatprep.subr.mxu0 0.0
  %1752 = vmatpush1.msra.mxu0 0.0
  %1753 = vmatprep.subr.mxu0 0.0
  %1754 = vmatpush1.msra.mxu0 0.0
  %1755 = vmatprep.subr.mxu0 0.0
  %1756 = vmatpush1.msra.mxu0 0.0
  %1757 = vmatprep.subr.mxu0 0.0
  %1758 = vmatpush1.msra.mxu0 0.0
  %1759 = vmatprep.subr.mxu0 0.0
  %1760 = vmatpush1.msra.mxu0 0.0
  %1761 = vmatprep.subr.mxu0 0.0
  %1762 = vmatpush1.msra.mxu0 0.0
  %1763 = vmatprep.subr.mxu0 0.0
  %1764 = vmatpush1.msra.mxu0 0.0
  %1765 = vmatprep.subr.mxu0 0.0
  %1766 = vmatpush1.msra.mxu0 0.0
  %1767 = vmatprep.subr.mxu0 0.0
  %1768 = vmatpush1.msra.mxu0 0.0
  %1769 = vmatprep.subr.mxu0 0.0
  %1770 = vmatpush1.msra.mxu0 0.0
  %1771 = vmatprep.subr.mxu0 0.0
  %1772 = vmatpush1.msra.mxu0 0.0
  %1773 = vmatprep.subr.mxu0 0.0
  %1774 = vmatpush1.msra.mxu0 0.0
  %1775 = vmatprep.subr.mxu0 0.0
  %1776 = vmatpush1.msra.mxu0 0.0
  %1777 = vmatprep.subr.mxu0 0.0
  %1778 = vmatpush1.msra.mxu0 0.0
  %1779 = vmatprep.subr.mxu0 0.0
  %1780 = vmatpush1.msra.mxu0 0.0
  %1781 = vmatprep.subr.mxu0 0.0
  %1782 = vmatpush1.msra.mxu0 0.0
  %1783 = vmatprep.subr.mxu0 0.0
  %1784 = vmatpush1.msra.mxu0 0.0
  %1785 = vmatprep.subr.mxu0 0.0
  %1786 = vmatpush1.msra.mxu0 0.0
  %1787 = vmatprep.mubr.f32.mxu0 0.0
  %1788 = vmatmul.mubr.f32.gmra.mrb[0].mxu0 %v1549
  %v1789 = vpop.f32.mrb[0].mxu0
  %v1790 = vadd.f32 0.0, %v1789
  %v1791 = vpop.f32.mrb[0].mxu0
  %1792 = vdwg.mxu0
  %v1793 = vadd.f32 %v1722, %v1790
  %v1794 = vxor.u32 %v1793, 2147483648
  %v1795 = vmul.f32 %v1794, 1.442695
  %v1796 = vpow.pop %v1795
  %v1797 = vadd.f32 %v1796, 1.0
  %v1798 = vrcp.pop %v1797
  %v1799 = vmul.f32 1.0, %v1798
  %v1800 = vtanh.pop %v1793
  %v1801 = vmul.f32 %v1799, %v1539
  %1803 = vrot.lane.b32.xlu0 %v1800, 96
  %v1804 = vpop.permute.xlu0 %1803
  %v1806 = vmul.f32 %v1799, %v1804
  %1808 = vrot.lane.b32.xlu0 %v1806, 16
  %v1809 = vpop.permute.xlu0 %1808
  %v1811 = vadd.f32 %v1801, %v1809
  %v1812 = vtanh.pop %v1811
  %1814 = vrot.lane.b32.xlu0 %v1812, 32
  %v1815 = vpop.permute.xlu0 %1814
  %v1817 = vmul.f32 %v1799, %v1815
  %1819 = vrot.lane.b32.xlu0 %v1817, 80
  %v1820 = vpop.permute.xlu0 %1819
  %v1821 = vsel %vm358, %v1820, 0
  %1823 = vmatprep.subr.mxu0 0.0
  %1824 = vmatpush1.msra.mxu0 %v352
  %1825 = vmatprep.subr.mxu0 0.0
  %1826 = vmatpush1.msra.mxu0 %v353
  %1827 = vmatprep.subr.mxu0 0.0
  %1828 = vmatpush1.msra.mxu0 0.0
  %1829 = vmatprep.subr.mxu0 0.0
  %1830 = vmatpush1.msra.mxu0 0.0
  %1831 = vmatprep.subr.mxu0 0.0
  %1832 = vmatpush1.msra.mxu0 0.0
  %1833 = vmatprep.subr.mxu0 0.0
  %1834 = vmatpush1.msra.mxu0 0.0
  %1835 = vmatprep.subr.mxu0 0.0
  %1836 = vmatpush1.msra.mxu0 0.0
  %1837 = vmatprep.subr.mxu0 0.0
  %1838 = vmatpush1.msra.mxu0 0.0
  %1839 = vmatprep.subr.mxu0 0.0
  %1840 = vmatpush1.msra.mxu0 0.0
  %1841 = vmatprep.subr.mxu0 0.0
  %1842 = vmatpush1.msra.mxu0 0.0
  %1843 = vmatprep.subr.mxu0 0.0
  %1844 = vmatpush1.msra.mxu0 0.0
  %1845 = vmatprep.subr.mxu0 0.0
  %1846 = vmatpush1.msra.mxu0 0.0
  %1847 = vmatprep.subr.mxu0 0.0
  %1848 = vmatpush1.msra.mxu0 0.0
  %1849 = vmatprep.subr.mxu0 0.0
  %1850 = vmatpush1.msra.mxu0 0.0
  %1851 = vmatprep.subr.mxu0 0.0
  %1852 = vmatpush1.msra.mxu0 0.0
  %1853 = vmatprep.subr.mxu0 0.0
  %1854 = vmatpush1.msra.mxu0 0.0
  %1855 = vmatprep.subr.mxu0 0.0
  %1856 = vmatpush1.msra.mxu0 0.0
  %1857 = vmatprep.subr.mxu0 0.0
  %1858 = vmatpush1.msra.mxu0 0.0
  %1859 = vmatprep.subr.mxu0 0.0
  %1860 = vmatpush1.msra.mxu0 0.0
  %1861 = vmatprep.subr.mxu0 0.0
  %1862 = vmatpush1.msra.mxu0 0.0
  %1863 = vmatprep.subr.mxu0 0.0
  %1864 = vmatpush1.msra.mxu0 0.0
  %1865 = vmatprep.subr.mxu0 0.0
  %1866 = vmatpush1.msra.mxu0 0.0
  %1867 = vmatprep.subr.mxu0 0.0
  %1868 = vmatpush1.msra.mxu0 0.0
  %1869 = vmatprep.subr.mxu0 0.0
  %1870 = vmatpush1.msra.mxu0 0.0
  %1871 = vmatprep.subr.mxu0 0.0
  %1872 = vmatpush1.msra.mxu0 0.0
  %1873 = vmatprep.subr.mxu0 0.0
  %1874 = vmatpush1.msra.mxu0 0.0
  %1875 = vmatprep.subr.mxu0 0.0
  %1876 = vmatpush1.msra.mxu0 0.0
  %1877 = vmatprep.subr.mxu0 0.0
  %1878 = vmatpush1.msra.mxu0 0.0
  %1879 = vmatprep.subr.mxu0 0.0
  %1880 = vmatpush1.msra.mxu0 0.0
  %1881 = vmatprep.subr.mxu0 0.0
  %1882 = vmatpush1.msra.mxu0 0.0
  %1883 = vmatprep.subr.mxu0 0.0
  %1884 = vmatpush1.msra.mxu0 0.0
  %1885 = vmatprep.subr.mxu0 0.0
  %1886 = vmatpush1.msra.mxu0 0.0
  %1887 = vmatprep.mubr.f32.mxu0 0.0
  %1888 = vmatmul.mubr.f32.gmra.mrb[0].mxu0 %v1821
  %v1889 = vpop.f32.mrb[0].mxu0
  %v1890 = vadd.f32 0.0, %v1889
  %v1891 = vpop.f32.mrb[0].mxu0
  %1892 = vdwg.mxu0
  %1894 = vrot.lane.b32.xlu0 %v1720, 80
  %v1895 = vpop.permute.xlu0 %1894
  %v1896 = vsel %vm358, %v1895, 0
  %1898 = vmatprep.subr.mxu0 0.0
  %1899 = vmatpush1.msra.mxu0 %v354
  %1900 = vmatprep.subr.mxu0 0.0
  %1901 = vmatpush1.msra.mxu0 %v355
  %1902 = vmatprep.subr.mxu0 0.0
  %1903 = vmatpush1.msra.mxu0 0.0
  %1904 = vmatprep.subr.mxu0 0.0
  %1905 = vmatpush1.msra.mxu0 0.0
  %1906 = vmatprep.subr.mxu0 0.0
  %1907 = vmatpush1.msra.mxu0 0.0
  %1908 = vmatprep.subr.mxu0 0.0
  %1909 = vmatpush1.msra.mxu0 0.0
  %1910 = vmatprep.subr.mxu0 0.0
  %1911 = vmatpush1.msra.mxu0 0.0
  %1912 = vmatprep.subr.mxu0 0.0
  %1913 = vmatpush1.msra.mxu0 0.0
  %1914 = vmatprep.subr.mxu0 0.0
  %1915 = vmatpush1.msra.mxu0 0.0
  %1916 = vmatprep.subr.mxu0 0.0
  %1917 = vmatpush1.msra.mxu0 0.0
  %1918 = vmatprep.subr.mxu0 0.0
  %1919 = vmatpush1.msra.mxu0 0.0
  %1920 = vmatprep.subr.mxu0 0.0
  %1921 = vmatpush1.msra.mxu0 0.0
  %1922 = vmatprep.subr.mxu0 0.0
  %1923 = vmatpush1.msra.mxu0 0.0
  %1924 = vmatprep.subr.mxu0 0.0
  %1925 = vmatpush1.msra.mxu0 0.0
  %1926 = vmatprep.subr.mxu0 0.0
  %1927 = vmatpush1.msra.mxu0 0.0
  %1928 = vmatprep.subr.mxu0 0.0
  %1929 = vmatpush1.msra.mxu0 0.0
  %1930 = vmatprep.subr.mxu0 0.0
  %1931 = vmatpush1.msra.mxu0 0.0
  %1932 = vmatprep.subr.mxu0 0.0
  %1933 = vmatpush1.msra.mxu0 0.0
  %1934 = vmatprep.subr.mxu0 0.0
  %1935 = vmatpush1.msra.mxu0 0.0
  %1936 = vmatprep.subr.mxu0 0.0
  %1937 = vmatpush1.msra.mxu0 0.0
  %1938 = vmatprep.subr.mxu0 0.0
  %1939 = vmatpush1.msra.mxu0 0.0
  %1940 = vmatprep.subr.mxu0 0.0
  %1941 = vmatpush1.msra.mxu0 0.0
  %1942 = vmatprep.subr.mxu0 0.0
  %1943 = vmatpush1.msra.mxu0 0.0
  %1944 = vmatprep.subr.mxu0 0.0
  %1945 = vmatpush1.msra.mxu0 0.0
  %1946 = vmatprep.subr.mxu0 0.0
  %1947 = vmatpush1.msra.mxu0 0.0
  %1948 = vmatprep.subr.mxu0 0.0
  %1949 = vmatpush1.msra.mxu0 0.0
  %1950 = vmatprep.subr.mxu0 0.0
  %1951 = vmatpush1.msra.mxu0 0.0
  %1952 = vmatprep.subr.mxu0 0.0
  %1953 = vmatpush1.msra.mxu0 0.0
  %1954 = vmatprep.subr.mxu0 0.0
  %1955 = vmatpush1.msra.mxu0 0.0
  %1956 = vmatprep.subr.mxu0 0.0
  %1957 = vmatpush1.msra.mxu0 0.0
  %1958 = vmatprep.subr.mxu0 0.0
  %1959 = vmatpush1.msra.mxu0 0.0
  %1960 = vmatprep.subr.mxu0 0.0
  %1961 = vmatpush1.msra.mxu0 0.0
  %1962 = vmatprep.mubr.f32.mxu0 0.0
  %1963 = vmatmul.mubr.f32.gmra.mrb[0].mxu0 %v1896
  %v1964 = vpop.f32.mrb[0].mxu0
  %v1965 = vadd.f32 %v1890, %v1964
  %v1966 = vpop.f32.mrb[0].mxu0
  %1967 = vdwg.mxu0
  %v1968 = vadd.f32 %v1965, %v606
  %v1969 = vxor.u32 %v1968, 2147483648
  %v1970 = vmul.f32 %v1969, 1.442695
  %v1971 = vpow.pop %v1970
  %v1972 = vadd.f32 %v1971, 1.0
  %v1973 = vrcp.pop %v1972
  %v1974 = vmul.f32 1.0, %v1973
  %v1975 = vtanh.pop %v1968
  %v1976 = vmul.f32 %v1974, %v1714
  %1978 = vrot.lane.b32.xlu0 %v1975, 96
  %v1979 = vpop.permute.xlu0 %1978
  %v1981 = vmul.f32 %v1974, %v1979
  %1983 = vrot.lane.b32.xlu0 %v1981, 16
  %v1984 = vpop.permute.xlu0 %1983
  %v1986 = vadd.f32 %v1976, %v1984
  %v1987 = vtanh.pop %v1986
  %1989 = vrot.lane.b32.xlu0 %v1987, 32
  %v1990 = vpop.permute.xlu0 %1989
  %v1992 = vmul.f32 %v1974, %v1990
  %s1993 = scalar_lea.vmem [#allocation2], 48
  %v1994 = vld [vmem:[%s1993] sm:$0xff]
  %1995 = vmatprep.subr.mxu0 0.0
  %1996 = vmatpush1.msra.mxu0 %v350
  %1997 = vmatprep.subr.mxu0 0.0
  %1998 = vmatpush1.msra.mxu0 %v351
  %1999 = vmatprep.subr.mxu0 0.0
  %2000 = vmatpush1.msra.mxu0 0.0
  %2001 = vmatprep.subr.mxu0 0.0
  %2002 = vmatpush1.msra.mxu0 0.0
  %2003 = vmatprep.subr.mxu0 0.0
  %2004 = vmatpush1.msra.mxu0 0.0
  %2005 = vmatprep.subr.mxu0 0.0
  %2006 = vmatpush1.msra.mxu0 0.0
  %2007 = vmatprep.subr.mxu0 0.0
  %2008 = vmatpush1.msra.mxu0 0.0
  %2009 = vmatprep.subr.mxu0 0.0
  %2010 = vmatpush1.msra.mxu0 0.0
  %2011 = vmatprep.subr.mxu0 0.0
  %2012 = vmatpush1.msra.mxu0 0.0
  %2013 = vmatprep.subr.mxu0 0.0
  %2014 = vmatpush1.msra.mxu0 0.0
  %2015 = vmatprep.subr.mxu0 0.0
  %2016 = vmatpush1.msra.mxu0 0.0
  %2017 = vmatprep.subr.mxu0 0.0
  %2018 = vmatpush1.msra.mxu0 0.0
  %2019 = vmatprep.subr.mxu0 0.0
  %2020 = vmatpush1.msra.mxu0 0.0
  %2021 = vmatprep.subr.mxu0 0.0
  %2022 = vmatpush1.msra.mxu0 0.0
  %2023 = vmatprep.subr.mxu0 0.0
  %2024 = vmatpush1.msra.mxu0 0.0
  %2025 = vmatprep.subr.mxu0 0.0
  %2026 = vmatpush1.msra.mxu0 0.0
  %2027 = vmatprep.subr.mxu0 0.0
  %2028 = vmatpush1.msra.mxu0 0.0
  %2029 = vmatprep.subr.mxu0 0.0
  %2030 = vmatpush1.msra.mxu0 0.0
  %2031 = vmatprep.subr.mxu0 0.0
  %2032 = vmatpush1.msra.mxu0 0.0
  %2033 = vmatprep.subr.mxu0 0.0
  %2034 = vmatpush1.msra.mxu0 0.0
  %2035 = vmatprep.subr.mxu0 0.0
  %2036 = vmatpush1.msra.mxu0 0.0
  %2037 = vmatprep.subr.mxu0 0.0
  %2038 = vmatpush1.msra.mxu0 0.0
  %2039 = vmatprep.subr.mxu0 0.0
  %2040 = vmatpush1.msra.mxu0 0.0
  %2041 = vmatprep.subr.mxu0 0.0
  %2042 = vmatpush1.msra.mxu0 0.0
  %2043 = vmatprep.subr.mxu0 0.0
  %2044 = vmatpush1.msra.mxu0 0.0
  %2045 = vmatprep.subr.mxu0 0.0
  %2046 = vmatpush1.msra.mxu0 0.0
  %2047 = vmatprep.subr.mxu0 0.0
  %2048 = vmatpush1.msra.mxu0 0.0
  %2049 = vmatprep.subr.mxu0 0.0
  %2050 = vmatpush1.msra.mxu0 0.0
  %2051 = vmatprep.subr.mxu0 0.0
  %2052 = vmatpush1.msra.mxu0 0.0
  %2053 = vmatprep.subr.mxu0 0.0
  %2054 = vmatpush1.msra.mxu0 0.0
  %2055 = vmatprep.subr.mxu0 0.0
  %2056 = vmatpush1.msra.mxu0 0.0
  %2057 = vmatprep.subr.mxu0 0.0
  %2058 = vmatpush1.msra.mxu0 0.0
  %2059 = vmatprep.mubr.f32.mxu0 0.0
  %2060 = vmatmul.mubr.f32.gmra.mrb[0].mxu0 %v1821
  %v2061 = vpop.f32.mrb[0].mxu0
  %v2062 = vadd.f32 0.0, %v2061
  %v2063 = vpop.f32.mrb[0].mxu0
  %2064 = vdwg.mxu0
  %v2065 = vadd.f32 %v1994, %v2062
  %v2066 = vxor.u32 %v2065, 2147483648
  %v2067 = vmul.f32 %v2066, 1.442695
  %v2068 = vpow.pop %v2067
  %v2069 = vadd.f32 %v2068, 1.0
  %v2070 = vrcp.pop %v2069
  %v2071 = vmul.f32 1.0, %v2070
  %v2072 = vtanh.pop %v2065
  %v2073 = vmul.f32 %v2071, %v1811
  %2075 = vrot.lane.b32.xlu0 %v2072, 96
  %v2076 = vpop.permute.xlu0 %2075
  %v2078 = vmul.f32 %v2071, %v2076
  %2080 = vrot.lane.b32.xlu0 %v2078, 16
  %v2081 = vpop.permute.xlu0 %2080
  %v2083 = vadd.f32 %v2073, %v2081
  %v2084 = vtanh.pop %v2083
  %2086 = vrot.lane.b32.xlu0 %v2084, 32
  %v2087 = vpop.permute.xlu0 %2086
  %v2089 = vmul.f32 %v2071, %v2087
  %2091 = vrot.lane.b32.xlu0 %v2089, 80
  %v2092 = vpop.permute.xlu0 %2091
  %v2093 = vsel %vm358, %v2092, 0
  %2095 = vmatprep.subr.mxu0 0.0
  %2096 = vmatpush1.msra.mxu0 %v352
  %2097 = vmatprep.subr.mxu0 0.0
  %2098 = vmatpush1.msra.mxu0 %v353
  %2099 = vmatprep.subr.mxu0 0.0
  %2100 = vmatpush1.msra.mxu0 0.0
  %2101 = vmatprep.subr.mxu0 0.0
  %2102 = vmatpush1.msra.mxu0 0.0
  %2103 = vmatprep.subr.mxu0 0.0
  %2104 = vmatpush1.msra.mxu0 0.0
  %2105 = vmatprep.subr.mxu0 0.0
  %2106 = vmatpush1.msra.mxu0 0.0
  %2107 = vmatprep.subr.mxu0 0.0
  %2108 = vmatpush1.msra.mxu0 0.0
  %2109 = vmatprep.subr.mxu0 0.0
  %2110 = vmatpush1.msra.mxu0 0.0
  %2111 = vmatprep.subr.mxu0 0.0
  %2112 = vmatpush1.msra.mxu0 0.0
  %2113 = vmatprep.subr.mxu0 0.0
  %2114 = vmatpush1.msra.mxu0 0.0
  %2115 = vmatprep.subr.mxu0 0.0
  %2116 = vmatpush1.msra.mxu0 0.0
  %2117 = vmatprep.subr.mxu0 0.0
  %2118 = vmatpush1.msra.mxu0 0.0
  %2119 = vmatprep.subr.mxu0 0.0
  %2120 = vmatpush1.msra.mxu0 0.0
  %2121 = vmatprep.subr.mxu0 0.0
  %2122 = vmatpush1.msra.mxu0 0.0
  %2123 = vmatprep.subr.mxu0 0.0
  %2124 = vmatpush1.msra.mxu0 0.0
  %2125 = vmatprep.subr.mxu0 0.0
  %2126 = vmatpush1.msra.mxu0 0.0
  %2127 = vmatprep.subr.mxu0 0.0
  %2128 = vmatpush1.msra.mxu0 0.0
  %2129 = vmatprep.subr.mxu0 0.0
  %2130 = vmatpush1.msra.mxu0 0.0
  %2131 = vmatprep.subr.mxu0 0.0
  %2132 = vmatpush1.msra.mxu0 0.0
  %2133 = vmatprep.subr.mxu0 0.0
  %2134 = vmatpush1.msra.mxu0 0.0
  %2135 = vmatprep.subr.mxu0 0.0
  %2136 = vmatpush1.msra.mxu0 0.0
  %2137 = vmatprep.subr.mxu0 0.0
  %2138 = vmatpush1.msra.mxu0 0.0
  %2139 = vmatprep.subr.mxu0 0.0
  %2140 = vmatpush1.msra.mxu0 0.0
  %2141 = vmatprep.subr.mxu0 0.0
  %2142 = vmatpush1.msra.mxu0 0.0
  %2143 = vmatprep.subr.mxu0 0.0
  %2144 = vmatpush1.msra.mxu0 0.0
  %2145 = vmatprep.subr.mxu0 0.0
  %2146 = vmatpush1.msra.mxu0 0.0
  %2147 = vmatprep.subr.mxu0 0.0
  %2148 = vmatpush1.msra.mxu0 0.0
  %2149 = vmatprep.subr.mxu0 0.0
  %2150 = vmatpush1.msra.mxu0 0.0
  %2151 = vmatprep.subr.mxu0 0.0
  %2152 = vmatpush1.msra.mxu0 0.0
  %2153 = vmatprep.subr.mxu0 0.0
  %2154 = vmatpush1.msra.mxu0 0.0
  %2155 = vmatprep.subr.mxu0 0.0
  %2156 = vmatpush1.msra.mxu0 0.0
  %2157 = vmatprep.subr.mxu0 0.0
  %2158 = vmatpush1.msra.mxu0 0.0
  %2159 = vmatprep.mubr.f32.mxu0 0.0
  %2160 = vmatmul.mubr.f32.gmra.mrb[0].mxu0 %v2093
  %v2161 = vpop.f32.mrb[0].mxu0
  %v2162 = vadd.f32 0.0, %v2161
  %v2163 = vpop.f32.mrb[0].mxu0
  %2164 = vdwg.mxu0
  %2166 = vrot.lane.b32.xlu0 %v1992, 80
  %v2167 = vpop.permute.xlu0 %2166
  %v2168 = vsel %vm358, %v2167, 0
  %2170 = vmatprep.subr.mxu0 0.0
  %2171 = vmatpush1.msra.mxu0 %v354
  %2172 = vmatprep.subr.mxu0 0.0
  %2173 = vmatpush1.msra.mxu0 %v355
  %2174 = vmatprep.subr.mxu0 0.0
  %2175 = vmatpush1.msra.mxu0 0.0
  %2176 = vmatprep.subr.mxu0 0.0
  %2177 = vmatpush1.msra.mxu0 0.0
  %2178 = vmatprep.subr.mxu0 0.0
  %2179 = vmatpush1.msra.mxu0 0.0
  %2180 = vmatprep.subr.mxu0 0.0
  %2181 = vmatpush1.msra.mxu0 0.0
  %2182 = vmatprep.subr.mxu0 0.0
  %2183 = vmatpush1.msra.mxu0 0.0
  %2184 = vmatprep.subr.mxu0 0.0
  %2185 = vmatpush1.msra.mxu0 0.0
  %2186 = vmatprep.subr.mxu0 0.0
  %2187 = vmatpush1.msra.mxu0 0.0
  %2188 = vmatprep.subr.mxu0 0.0
  %2189 = vmatpush1.msra.mxu0 0.0
  %2190 = vmatprep.subr.mxu0 0.0
  %2191 = vmatpush1.msra.mxu0 0.0
  %2192 = vmatprep.subr.mxu0 0.0
  %2193 = vmatpush1.msra.mxu0 0.0
  %2194 = vmatprep.subr.mxu0 0.0
  %2195 = vmatpush1.msra.mxu0 0.0
  %2196 = vmatprep.subr.mxu0 0.0
  %2197 = vmatpush1.msra.mxu0 0.0
  %2198 = vmatprep.subr.mxu0 0.0
  %2199 = vmatpush1.msra.mxu0 0.0
  %2200 = vmatprep.subr.mxu0 0.0
  %2201 = vmatpush1.msra.mxu0 0.0
  %2202 = vmatprep.subr.mxu0 0.0
  %2203 = vmatpush1.msra.mxu0 0.0
  %2204 = vmatprep.subr.mxu0 0.0
  %2205 = vmatpush1.msra.mxu0 0.0
  %2206 = vmatprep.subr.mxu0 0.0
  %2207 = vmatpush1.msra.mxu0 0.0
  %2208 = vmatprep.subr.mxu0 0.0
  %2209 = vmatpush1.msra.mxu0 0.0
  %2210 = vmatprep.subr.mxu0 0.0
  %2211 = vmatpush1.msra.mxu0 0.0
  %2212 = vmatprep.subr.mxu0 0.0
  %2213 = vmatpush1.msra.mxu0 0.0
  %2214 = vmatprep.subr.mxu0 0.0
  %2215 = vmatpush1.msra.mxu0 0.0
  %2216 = vmatprep.subr.mxu0 0.0
  %2217 = vmatpush1.msra.mxu0 0.0
  %2218 = vmatprep.subr.mxu0 0.0
  %2219 = vmatpush1.msra.mxu0 0.0
  %2220 = vmatprep.subr.mxu0 0.0
  %2221 = vmatpush1.msra.mxu0 0.0
  %2222 = vmatprep.subr.mxu0 0.0
  %2223 = vmatpush1.msra.mxu0 0.0
  %2224 = vmatprep.subr.mxu0 0.0
  %2225 = vmatpush1.msra.mxu0 0.0
  %2226 = vmatprep.subr.mxu0 0.0
  %2227 = vmatpush1.msra.mxu0 0.0
  %2228 = vmatprep.subr.mxu0 0.0
  %2229 = vmatpush1.msra.mxu0 0.0
  %2230 = vmatprep.subr.mxu0 0.0
  %2231 = vmatpush1.msra.mxu0 0.0
  %2232 = vmatprep.subr.mxu0 0.0
  %2233 = vmatpush1.msra.mxu0 0.0
  %2234 = vmatprep.mubr.f32.mxu0 0.0
  %2235 = vmatmul.mubr.f32.gmra.mrb[0].mxu0 %v2168
  %v2236 = vpop.f32.mrb[0].mxu0
  %v2237 = vadd.f32 %v2162, %v2236
  %v2238 = vpop.f32.mrb[0].mxu0
  %2239 = vdwg.mxu0
  %v2240 = vadd.f32 %v2237, %v606
  %v2241 = vxor.u32 %v2240, 2147483648
  %v2242 = vmul.f32 %v2241, 1.442695
  %v2243 = vpow.pop %v2242
  %v2244 = vadd.f32 %v2243, 1.0
  %v2245 = vrcp.pop %v2244
  %v2246 = vmul.f32 1.0, %v2245
  %v2247 = vtanh.pop %v2240
  %v2248 = vmul.f32 %v2246, %v1986
  %2250 = vrot.lane.b32.xlu0 %v2247, 96
  %v2251 = vpop.permute.xlu0 %2250
  %v2253 = vmul.f32 %v2246, %v2251
  %2255 = vrot.lane.b32.xlu0 %v2253, 16
  %v2256 = vpop.permute.xlu0 %2255
  %v2258 = vadd.f32 %v2248, %v2256
  %v2259 = vtanh.pop %v2258
  %2261 = vrot.lane.b32.xlu0 %v2259, 32
  %v2262 = vpop.permute.xlu0 %2261
  %v2264 = vmul.f32 %v2246, %v2262
  %s2265 = scalar_lea.vmem [#allocation2], 56
  %v2266 = vld [vmem:[%s2265] sm:$0xff]
  %2267 = vmatprep.subr.mxu0 0.0
  %2268 = vmatpush1.msra.mxu0 %v350
  %2269 = vmatprep.subr.mxu0 0.0
  %2270 = vmatpush1.msra.mxu0 %v351
  %2271 = vmatprep.subr.mxu0 0.0
  %2272 = vmatpush1.msra.mxu0 0.0
  %2273 = vmatprep.subr.mxu0 0.0
  %2274 = vmatpush1.msra.mxu0 0.0
  %2275 = vmatprep.subr.mxu0 0.0
  %2276 = vmatpush1.msra.mxu0 0.0
  %2277 = vmatprep.subr.mxu0 0.0
  %2278 = vmatpush1.msra.mxu0 0.0
  %2279 = vmatprep.subr.mxu0 0.0
  %2280 = vmatpush1.msra.mxu0 0.0
  %2281 = vmatprep.subr.mxu0 0.0
  %2282 = vmatpush1.msra.mxu0 0.0
  %2283 = vmatprep.subr.mxu0 0.0
  %2284 = vmatpush1.msra.mxu0 0.0
  %2285 = vmatprep.subr.mxu0 0.0
  %2286 = vmatpush1.msra.mxu0 0.0
  %2287 = vmatprep.subr.mxu0 0.0
  %2288 = vmatpush1.msra.mxu0 0.0
  %2289 = vmatprep.subr.mxu0 0.0
  %2290 = vmatpush1.msra.mxu0 0.0
  %2291 = vmatprep.subr.mxu0 0.0
  %2292 = vmatpush1.msra.mxu0 0.0
  %2293 = vmatprep.subr.mxu0 0.0
  %2294 = vmatpush1.msra.mxu0 0.0
  %2295 = vmatprep.subr.mxu0 0.0
  %2296 = vmatpush1.msra.mxu0 0.0
  %2297 = vmatprep.subr.mxu0 0.0
  %2298 = vmatpush1.msra.mxu0 0.0
  %2299 = vmatprep.subr.mxu0 0.0
  %2300 = vmatpush1.msra.mxu0 0.0
  %2301 = vmatprep.subr.mxu0 0.0
  %2302 = vmatpush1.msra.mxu0 0.0
  %2303 = vmatprep.subr.mxu0 0.0
  %2304 = vmatpush1.msra.mxu0 0.0
  %2305 = vmatprep.subr.mxu0 0.0
  %2306 = vmatpush1.msra.mxu0 0.0
  %2307 = vmatprep.subr.mxu0 0.0
  %2308 = vmatpush1.msra.mxu0 0.0
  %2309 = vmatprep.subr.mxu0 0.0
  %2310 = vmatpush1.msra.mxu0 0.0
  %2311 = vmatprep.subr.mxu0 0.0
  %2312 = vmatpush1.msra.mxu0 0.0
  %2313 = vmatprep.subr.mxu0 0.0
  %2314 = vmatpush1.msra.mxu0 0.0
  %2315 = vmatprep.subr.mxu0 0.0
  %2316 = vmatpush1.msra.mxu0 0.0
  %2317 = vmatprep.subr.mxu0 0.0
  %2318 = vmatpush1.msra.mxu0 0.0
  %2319 = vmatprep.subr.mxu0 0.0
  %2320 = vmatpush1.msra.mxu0 0.0
  %2321 = vmatprep.subr.mxu0 0.0
  %2322 = vmatpush1.msra.mxu0 0.0
  %2323 = vmatprep.subr.mxu0 0.0
  %2324 = vmatpush1.msra.mxu0 0.0
  %2325 = vmatprep.subr.mxu0 0.0
  %2326 = vmatpush1.msra.mxu0 0.0
  %2327 = vmatprep.subr.mxu0 0.0
  %2328 = vmatpush1.msra.mxu0 0.0
  %2329 = vmatprep.subr.mxu0 0.0
  %2330 = vmatpush1.msra.mxu0 0.0
  %2331 = vmatprep.mubr.f32.mxu0 0.0
  %2332 = vmatmul.mubr.f32.gmra.mrb[0].mxu0 %v2093
  %v2333 = vpop.f32.mrb[0].mxu0
  %v2334 = vadd.f32 0.0, %v2333
  %v2335 = vpop.f32.mrb[0].mxu0
  %2336 = vdwg.mxu0
  %v2337 = vadd.f32 %v2266, %v2334
  %v2338 = vxor.u32 %v2337, 2147483648
  %v2339 = vmul.f32 %v2338, 1.442695
  %v2340 = vpow.pop %v2339
  %v2341 = vadd.f32 %v2340, 1.0
  %v2342 = vrcp.pop %v2341
  %v2343 = vmul.f32 1.0, %v2342
  %v2344 = vtanh.pop %v2337
  %v2345 = vmul.f32 %v2343, %v2083
  %2347 = vrot.lane.b32.xlu0 %v2344, 96
  %v2348 = vpop.permute.xlu0 %2347
  %v2350 = vmul.f32 %v2343, %v2348
  %2352 = vrot.lane.b32.xlu0 %v2350, 16
  %v2353 = vpop.permute.xlu0 %2352
  %v2355 = vadd.f32 %v2345, %v2353
  %v2356 = vtanh.pop %v2355
  %2358 = vrot.lane.b32.xlu0 %v2356, 32
  %v2359 = vpop.permute.xlu0 %2358
  %v2361 = vmul.f32 %v2343, %v2359
  %2363 = vrot.lane.b32.xlu0 %v2361, 80
  %v2364 = vpop.permute.xlu0 %2363
  %v2365 = vsel %vm358, %v2364, 0
  %2367 = vmatprep.subr.mxu0 0.0
  %2368 = vmatpush1.msra.mxu0 %v352
  %2369 = vmatprep.subr.mxu0 0.0
  %2370 = vmatpush1.msra.mxu0 %v353
  %2371 = vmatprep.subr.mxu0 0.0
  %2372 = vmatpush1.msra.mxu0 0.0
  %2373 = vmatprep.subr.mxu0 0.0
  %2374 = vmatpush1.msra.mxu0 0.0
  %2375 = vmatprep.subr.mxu0 0.0
  %2376 = vmatpush1.msra.mxu0 0.0
  %2377 = vmatprep.subr.mxu0 0.0
  %2378 = vmatpush1.msra.mxu0 0.0
  %2379 = vmatprep.subr.mxu0 0.0
  %2380 = vmatpush1.msra.mxu0 0.0
  %2381 = vmatprep.subr.mxu0 0.0
  %2382 = vmatpush1.msra.mxu0 0.0
  %2383 = vmatprep.subr.mxu0 0.0
  %2384 = vmatpush1.msra.mxu0 0.0
  %2385 = vmatprep.subr.mxu0 0.0
  %2386 = vmatpush1.msra.mxu0 0.0
  %2387 = vmatprep.subr.mxu0 0.0
  %2388 = vmatpush1.msra.mxu0 0.0
  %2389 = vmatprep.subr.mxu0 0.0
  %2390 = vmatpush1.msra.mxu0 0.0
  %2391 = vmatprep.subr.mxu0 0.0
  %2392 = vmatpush1.msra.mxu0 0.0
  %2393 = vmatprep.subr.mxu0 0.0
  %2394 = vmatpush1.msra.mxu0 0.0
  %2395 = vmatprep.subr.mxu0 0.0
  %2396 = vmatpush1.msra.mxu0 0.0
  %2397 = vmatprep.subr.mxu0 0.0
  %2398 = vmatpush1.msra.mxu0 0.0
  %2399 = vmatprep.subr.mxu0 0.0
  %2400 = vmatpush1.msra.mxu0 0.0
  %2401 = vmatprep.subr.mxu0 0.0
  %2402 = vmatpush1.msra.mxu0 0.0
  %2403 = vmatprep.subr.mxu0 0.0
  %2404 = vmatpush1.msra.mxu0 0.0
  %2405 = vmatprep.subr.mxu0 0.0
  %2406 = vmatpush1.msra.mxu0 0.0
  %2407 = vmatprep.subr.mxu0 0.0
  %2408 = vmatpush1.msra.mxu0 0.0
  %2409 = vmatprep.subr.mxu0 0.0
  %2410 = vmatpush1.msra.mxu0 0.0
  %2411 = vmatprep.subr.mxu0 0.0
  %2412 = vmatpush1.msra.mxu0 0.0
  %2413 = vmatprep.subr.mxu0 0.0
  %2414 = vmatpush1.msra.mxu0 0.0
  %2415 = vmatprep.subr.mxu0 0.0
  %2416 = vmatpush1.msra.mxu0 0.0
  %2417 = vmatprep.subr.mxu0 0.0
  %2418 = vmatpush1.msra.mxu0 0.0
  %2419 = vmatprep.subr.mxu0 0.0
  %2420 = vmatpush1.msra.mxu0 0.0
  %2421 = vmatprep.subr.mxu0 0.0
  %2422 = vmatpush1.msra.mxu0 0.0
  %2423 = vmatprep.subr.mxu0 0.0
  %2424 = vmatpush1.msra.mxu0 0.0
  %2425 = vmatprep.subr.mxu0 0.0
  %2426 = vmatpush1.msra.mxu0 0.0
  %2427 = vmatprep.subr.mxu0 0.0
  %2428 = vmatpush1.msra.mxu0 0.0
  %2429 = vmatprep.subr.mxu0 0.0
  %2430 = vmatpush1.msra.mxu0 0.0
  %2431 = vmatprep.mubr.f32.mxu0 0.0
  %2432 = vmatmul.mubr.f32.gmra.mrb[0].mxu0 %v2365
  %v2433 = vpop.f32.mrb[0].mxu0
  %v2434 = vadd.f32 0.0, %v2433
  %v2435 = vpop.f32.mrb[0].mxu0
  %2436 = vdwg.mxu0
  %2438 = vrot.lane.b32.xlu0 %v2264, 80
  %v2439 = vpop.permute.xlu0 %2438
  %v2440 = vsel %vm358, %v2439, 0
  %2442 = vmatprep.subr.mxu0 0.0
  %2443 = vmatpush1.msra.mxu0 %v354
  %2444 = vmatprep.subr.mxu0 0.0
  %2445 = vmatpush1.msra.mxu0 %v355
  %2446 = vmatprep.subr.mxu0 0.0
  %2447 = vmatpush1.msra.mxu0 0.0
  %2448 = vmatprep.subr.mxu0 0.0
  %2449 = vmatpush1.msra.mxu0 0.0
  %2450 = vmatprep.subr.mxu0 0.0
  %2451 = vmatpush1.msra.mxu0 0.0
  %2452 = vmatprep.subr.mxu0 0.0
  %2453 = vmatpush1.msra.mxu0 0.0
  %2454 = vmatprep.subr.mxu0 0.0
  %2455 = vmatpush1.msra.mxu0 0.0
  %2456 = vmatprep.subr.mxu0 0.0
  %2457 = vmatpush1.msra.mxu0 0.0
  %2458 = vmatprep.subr.mxu0 0.0
  %2459 = vmatpush1.msra.mxu0 0.0
  %2460 = vmatprep.subr.mxu0 0.0
  %2461 = vmatpush1.msra.mxu0 0.0
  %2462 = vmatprep.subr.mxu0 0.0
  %2463 = vmatpush1.msra.mxu0 0.0
  %2464 = vmatprep.subr.mxu0 0.0
  %2465 = vmatpush1.msra.mxu0 0.0
  %2466 = vmatprep.subr.mxu0 0.0
  %2467 = vmatpush1.msra.mxu0 0.0
  %2468 = vmatprep.subr.mxu0 0.0
  %2469 = vmatpush1.msra.mxu0 0.0
  %2470 = vmatprep.subr.mxu0 0.0
  %2471 = vmatpush1.msra.mxu0 0.0
  %2472 = vmatprep.subr.mxu0 0.0
  %2473 = vmatpush1.msra.mxu0 0.0
  %2474 = vmatprep.subr.mxu0 0.0
  %2475 = vmatpush1.msra.mxu0 0.0
  %2476 = vmatprep.subr.mxu0 0.0
  %2477 = vmatpush1.msra.mxu0 0.0
  %2478 = vmatprep.subr.mxu0 0.0
  %2479 = vmatpush1.msra.mxu0 0.0
  %2480 = vmatprep.subr.mxu0 0.0
  %2481 = vmatpush1.msra.mxu0 0.0
  %2482 = vmatprep.subr.mxu0 0.0
  %2483 = vmatpush1.msra.mxu0 0.0
  %2484 = vmatprep.subr.mxu0 0.0
  %2485 = vmatpush1.msra.mxu0 0.0
  %2486 = vmatprep.subr.mxu0 0.0
  %2487 = vmatpush1.msra.mxu0 0.0
  %2488 = vmatprep.subr.mxu0 0.0
  %2489 = vmatpush1.msra.mxu0 0.0
  %2490 = vmatprep.subr.mxu0 0.0
  %2491 = vmatpush1.msra.mxu0 0.0
  %2492 = vmatprep.subr.mxu0 0.0
  %2493 = vmatpush1.msra.mxu0 0.0
  %2494 = vmatprep.subr.mxu0 0.0
  %2495 = vmatpush1.msra.mxu0 0.0
  %2496 = vmatprep.subr.mxu0 0.0
  %2497 = vmatpush1.msra.mxu0 0.0
  %2498 = vmatprep.subr.mxu0 0.0
  %2499 = vmatpush1.msra.mxu0 0.0
  %2500 = vmatprep.subr.mxu0 0.0
  %2501 = vmatpush1.msra.mxu0 0.0
  %2502 = vmatprep.subr.mxu0 0.0
  %2503 = vmatpush1.msra.mxu0 0.0
  %2504 = vmatprep.subr.mxu0 0.0
  %2505 = vmatpush1.msra.mxu0 0.0
  %2506 = vmatprep.mubr.f32.mxu0 0.0
  %2507 = vmatmul.mubr.f32.gmra.mrb[0].mxu0 %v2440
  %v2508 = vpop.f32.mrb[0].mxu0
  %v2509 = vadd.f32 %v2434, %v2508
  %v2510 = vpop.f32.mrb[0].mxu0
  %2511 = vdwg.mxu0
  %v2512 = vadd.f32 %v2509, %v606
  %v2513 = vxor.u32 %v2512, 2147483648
  %v2514 = vmul.f32 %v2513, 1.442695
  %v2515 = vpow.pop %v2514
  %v2516 = vadd.f32 %v2515, 1.0
  %v2517 = vrcp.pop %v2516
  %v2518 = vmul.f32 1.0, %v2517
  %v2519 = vtanh.pop %v2512
  %v2520 = vmul.f32 %v2518, %v2258
  %2522 = vrot.lane.b32.xlu0 %v2519, 96
  %v2523 = vpop.permute.xlu0 %2522
  %v2525 = vmul.f32 %v2518, %v2523
  %2527 = vrot.lane.b32.xlu0 %v2525, 16
  %v2528 = vpop.permute.xlu0 %2527
  %v2530 = vadd.f32 %v2520, %v2528
  %v2531 = vtanh.pop %v2530
  %2533 = vrot.lane.b32.xlu0 %v2531, 32
  %v2534 = vpop.permute.xlu0 %2533
  %v2536 = vmul.f32 %v2518, %v2534
  %2538 = vrot.lane.b32.xlu0 %v2536, 80
  %v2539 = vpop.permute.xlu0 %2538
  %2541 = vst.msk [vmem:[%s14] sm:$0xff] %vm358, %v2539
  %v2542 = vld [vmem:[%s7] sm:$0xff]
  %v2543 = vld [vmem:[%s7 + $0x8] sm:$0xff]
  %v2544 = vld [vmem:[%s8] sm:$0x1]
  %v2546 = vlaneseq
  %v2547 = vshrl.u32 %v2546, 7
  %v2548 = vsub.s32 0, %v2547
  %v2549 = vrot.slane %v2544, %v2548
  %v2551 = vsel %vm358, %v2539, 0
  %2553 = vmatprep.subr.mxu0 0.0
  %2554 = vmatpush1.msra.mxu0 %v2542
  %2555 = vmatprep.subr.mxu0 0.0
  %2556 = vmatpush1.msra.mxu0 %v2543
  %2557 = vmatprep.subr.mxu0 0.0
  %2558 = vmatpush1.msra.mxu0 0.0
  %2559 = vmatprep.subr.mxu0 0.0
  %2560 = vmatpush1.msra.mxu0 0.0
  %2561 = vmatprep.subr.mxu0 0.0
  %2562 = vmatpush1.msra.mxu0 0.0
  %2563 = vmatprep.subr.mxu0 0.0
  %2564 = vmatpush1.msra.mxu0 0.0
  %2565 = vmatprep.subr.mxu0 0.0
  %2566 = vmatpush1.msra.mxu0 0.0
  %2567 = vmatprep.subr.mxu0 0.0
  %2568 = vmatpush1.msra.mxu0 0.0
  %2569 = vmatprep.subr.mxu0 0.0
  %2570 = vmatpush1.msra.mxu0 0.0
  %2571 = vmatprep.subr.mxu0 0.0
  %2572 = vmatpush1.msra.mxu0 0.0
  %2573 = vmatprep.subr.mxu0 0.0
  %2574 = vmatpush1.msra.mxu0 0.0
  %2575 = vmatprep.subr.mxu0 0.0
  %2576 = vmatpush1.msra.mxu0 0.0
  %2577 = vmatprep.subr.mxu0 0.0
  %2578 = vmatpush1.msra.mxu0 0.0
  %2579 = vmatprep.subr.mxu0 0.0
  %2580 = vmatpush1.msra.mxu0 0.0
  %2581 = vmatprep.subr.mxu0 0.0
  %2582 = vmatpush1.msra.mxu0 0.0
  %2583 = vmatprep.subr.mxu0 0.0
  %2584 = vmatpush1.msra.mxu0 0.0
  %2585 = vmatprep.subr.mxu0 0.0
  %2586 = vmatpush1.msra.mxu0 0.0
  %2587 = vmatprep.subr.mxu0 0.0
  %2588 = vmatpush1.msra.mxu0 0.0
  %2589 = vmatprep.subr.mxu0 0.0
  %2590 = vmatpush1.msra.mxu0 0.0
  %2591 = vmatprep.subr.mxu0 0.0
  %2592 = vmatpush1.msra.mxu0 0.0
  %2593 = vmatprep.subr.mxu0 0.0
  %2594 = vmatpush1.msra.mxu0 0.0
  %2595 = vmatprep.subr.mxu0 0.0
  %2596 = vmatpush1.msra.mxu0 0.0
  %2597 = vmatprep.subr.mxu0 0.0
  %2598 = vmatpush1.msra.mxu0 0.0
  %2599 = vmatprep.subr.mxu0 0.0
  %2600 = vmatpush1.msra.mxu0 0.0
  %2601 = vmatprep.subr.mxu0 0.0
  %2602 = vmatpush1.msra.mxu0 0.0
  %2603 = vmatprep.subr.mxu0 0.0
  %2604 = vmatpush1.msra.mxu0 0.0
  %2605 = vmatprep.subr.mxu0 0.0
  %2606 = vmatpush1.msra.mxu0 0.0
  %2607 = vmatprep.subr.mxu0 0.0
  %2608 = vmatpush1.msra.mxu0 0.0
  %2609 = vmatprep.subr.mxu0 0.0
  %2610 = vmatpush1.msra.mxu0 0.0
  %2611 = vmatprep.subr.mxu0 0.0
  %2612 = vmatpush1.msra.mxu0 0.0
  %2613 = vmatprep.subr.mxu0 0.0
  %2614 = vmatpush1.msra.mxu0 0.0
  %2615 = vmatprep.subr.mxu0 0.0
  %2616 = vmatpush1.msra.mxu0 0.0
  %2617 = vmatprep.mubr.f32.mxu0 0.0
  %2618 = vmatmul.mubr.f32.gmra.mrb[0].mxu0 %v2551
  %v2619 = vpop.f32.mrb[0].mxu0
  %v2620 = vadd.f32 %v2549, %v2619
  %v2621 = vpop.f32.mrb[0].mxu0
  %2622 = vdwg.mxu0
  %v2623 = vmax.f32 %v2620, 0.0
  %v2624 = vld [vmem:[%s9] sm:$0xff]
  %v2625 = vld [vmem:[%s10] sm:$0x1]
  %v2627 = vlaneseq
  %v2628 = vshrl.u32 %v2627, 7
  %v2629 = vsub.s32 0, %v2628
  %v2630 = vrot.slane %v2625, %v2629
  %vm2632 = vcmask 64512
  %v2634 = vsel %vm2632, %v2623, 0
  %2636 = vmatprep.subr.mxu0 0.0
  %2637 = vmatpush1.msra.mxu0 %v2624
  %2638 = vmatprep.subr.mxu0 0.0
  %2639 = vmatpush1.msra.mxu0 0.0
  %2640 = vmatprep.subr.mxu0 0.0
  %2641 = vmatpush1.msra.mxu0 0.0
  %2642 = vmatprep.subr.mxu0 0.0
  %2643 = vmatpush1.msra.mxu0 0.0
  %2644 = vmatprep.subr.mxu0 0.0
  %2645 = vmatpush1.msra.mxu0 0.0
  %2646 = vmatprep.subr.mxu0 0.0
  %2647 = vmatpush1.msra.mxu0 0.0
  %2648 = vmatprep.subr.mxu0 0.0
  %2649 = vmatpush1.msra.mxu0 0.0
  %2650 = vmatprep.subr.mxu0 0.0
  %2651 = vmatpush1.msra.mxu0 0.0
  %2652 = vmatprep.subr.mxu0 0.0
  %2653 = vmatpush1.msra.mxu0 0.0
  %2654 = vmatprep.subr.mxu0 0.0
  %2655 = vmatpush1.msra.mxu0 0.0
  %2656 = vmatprep.subr.mxu0 0.0
  %2657 = vmatpush1.msra.mxu0 0.0
  %2658 = vmatprep.subr.mxu0 0.0
  %2659 = vmatpush1.msra.mxu0 0.0
  %2660 = vmatprep.subr.mxu0 0.0
  %2661 = vmatpush1.msra.mxu0 0.0
  %2662 = vmatprep.subr.mxu0 0.0
  %2663 = vmatpush1.msra.mxu0 0.0
  %2664 = vmatprep.subr.mxu0 0.0
  %2665 = vmatpush1.msra.mxu0 0.0
  %2666 = vmatprep.subr.mxu0 0.0
  %2667 = vmatpush1.msra.mxu0 0.0
  %2668 = vmatprep.subr.mxu0 0.0
  %2669 = vmatpush1.msra.mxu0 0.0
  %2670 = vmatprep.subr.mxu0 0.0
  %2671 = vmatpush1.msra.mxu0 0.0
  %2672 = vmatprep.subr.mxu0 0.0
  %2673 = vmatpush1.msra.mxu0 0.0
  %2674 = vmatprep.subr.mxu0 0.0
  %2675 = vmatpush1.msra.mxu0 0.0
  %2676 = vmatprep.subr.mxu0 0.0
  %2677 = vmatpush1.msra.mxu0 0.0
  %2678 = vmatprep.subr.mxu0 0.0
  %2679 = vmatpush1.msra.mxu0 0.0
  %2680 = vmatprep.subr.mxu0 0.0
  %2681 = vmatpush1.msra.mxu0 0.0
  %2682 = vmatprep.subr.mxu0 0.0
  %2683 = vmatpush1.msra.mxu0 0.0
  %2684 = vmatprep.subr.mxu0 0.0
  %2685 = vmatpush1.msra.mxu0 0.0
  %2686 = vmatprep.subr.mxu0 0.0
  %2687 = vmatpush1.msra.mxu0 0.0
  %2688 = vmatprep.subr.mxu0 0.0
  %2689 = vmatpush1.msra.mxu0 0.0
  %2690 = vmatprep.subr.mxu0 0.0
  %2691 = vmatpush1.msra.mxu0 0.0
  %2692 = vmatprep.subr.mxu0 0.0
  %2693 = vmatpush1.msra.mxu0 0.0
  %2694 = vmatprep.subr.mxu0 0.0
  %2695 = vmatpush1.msra.mxu0 0.0
  %2696 = vmatprep.subr.mxu0 0.0
  %2697 = vmatpush1.msra.mxu0 0.0
  %2698 = vmatprep.subr.mxu0 0.0
  %2699 = vmatpush1.msra.mxu0 0.0
  %2700 = vmatprep.mubr.f32.mxu0 0.0
  %2701 = vmatmul.mubr.f32.gmra.mrb[0].mxu0 %v2634
  %v2702 = vpop.f32.mrb[0].mxu0
  %v2703 = vadd.f32 %v2630, %v2702
  %v2704 = vpop.f32.mrb[0].mxu0
  %2705 = vdwg.mxu0
  %v2706 = vmax.f32 %v2703, 0.0
  %v2707 = vld [vmem:[%s11] sm:$0xf]
  %v2708 = vld [vmem:[%s12] sm:$0x1]
  %v2710 = vlaneseq
  %v2711 = vshrl.u32 %v2710, 7
  %v2712 = vsub.s32 0, %v2711
  %v2713 = vrot.slane %v2708, %v2712
  %vm2715 = vcmask 31744
  %v2717 = vsel %vm2715, %v2706, 0
  %vm2719 = vcmask 1043456
  %v2721 = vsel %vm2719, %v2707, 0
  %2723 = vmatprep.subr.mxu0 0.0
  %2724 = vmatpush1.msra.mxu0 %v2721
  %2725 = vmatprep.subr.mxu0 0.0
  %2726 = vmatpush1.msra.mxu0 0.0
  %2727 = vmatprep.subr.mxu0 0.0
  %2728 = vmatpush1.msra.mxu0 0.0
  %2729 = vmatprep.subr.mxu0 0.0
  %2730 = vmatpush1.msra.mxu0 0.0
  %2731 = vmatprep.subr.mxu0 0.0
  %2732 = vmatpush1.msra.mxu0 0.0
  %2733 = vmatprep.subr.mxu0 0.0
  %2734 = vmatpush1.msra.mxu0 0.0
  %2735 = vmatprep.subr.mxu0 0.0
  %2736 = vmatpush1.msra.mxu0 0.0
  %2737 = vmatprep.subr.mxu0 0.0
  %2738 = vmatpush1.msra.mxu0 0.0
  %2739 = vmatprep.subr.mxu0 0.0
  %2740 = vmatpush1.msra.mxu0 0.0
  %2741 = vmatprep.subr.mxu0 0.0
  %2742 = vmatpush1.msra.mxu0 0.0
  %2743 = vmatprep.subr.mxu0 0.0
  %2744 = vmatpush1.msra.mxu0 0.0
  %2745 = vmatprep.subr.mxu0 0.0
  %2746 = vmatpush1.msra.mxu0 0.0
  %2747 = vmatprep.subr.mxu0 0.0
  %2748 = vmatpush1.msra.mxu0 0.0
  %2749 = vmatprep.subr.mxu0 0.0
  %2750 = vmatpush1.msra.mxu0 0.0
  %2751 = vmatprep.subr.mxu0 0.0
  %2752 = vmatpush1.msra.mxu0 0.0
  %2753 = vmatprep.subr.mxu0 0.0
  %2754 = vmatpush1.msra.mxu0 0.0
  %2755 = vmatprep.subr.mxu0 0.0
  %2756 = vmatpush1.msra.mxu0 0.0
  %2757 = vmatprep.subr.mxu0 0.0
  %2758 = vmatpush1.msra.mxu0 0.0
  %2759 = vmatprep.subr.mxu0 0.0
  %2760 = vmatpush1.msra.mxu0 0.0
  %2761 = vmatprep.subr.mxu0 0.0
  %2762 = vmatpush1.msra.mxu0 0.0
  %2763 = vmatprep.subr.mxu0 0.0
  %2764 = vmatpush1.msra.mxu0 0.0
  %2765 = vmatprep.subr.mxu0 0.0
  %2766 = vmatpush1.msra.mxu0 0.0
  %2767 = vmatprep.subr.mxu0 0.0
  %2768 = vmatpush1.msra.mxu0 0.0
  %2769 = vmatprep.subr.mxu0 0.0
  %2770 = vmatpush1.msra.mxu0 0.0
  %2771 = vmatprep.subr.mxu0 0.0
  %2772 = vmatpush1.msra.mxu0 0.0
  %2773 = vmatprep.subr.mxu0 0.0
  %2774 = vmatpush1.msra.mxu0 0.0
  %2775 = vmatprep.subr.mxu0 0.0
  %2776 = vmatpush1.msra.mxu0 0.0
  %2777 = vmatprep.subr.mxu0 0.0
  %2778 = vmatpush1.msra.mxu0 0.0
  %2779 = vmatprep.subr.mxu0 0.0
  %2780 = vmatpush1.msra.mxu0 0.0
  %2781 = vmatprep.subr.mxu0 0.0
  %2782 = vmatpush1.msra.mxu0 0.0
  %2783 = vmatprep.subr.mxu0 0.0
  %2784 = vmatpush1.msra.mxu0 0.0
  %2785 = vmatprep.subr.mxu0 0.0
  %2786 = vmatpush1.msra.mxu0 0.0
  %2787 = vmatprep.mubr.f32.mxu0 0.0
  %2788 = vmatmul.mubr.f32.gmra.mrb[0].mxu0 %v2717
  %v2789 = vpop.f32.mrb[0].mxu0
  %v2790 = vadd.f32 %v2713, %v2789
  %v2791 = vpop.f32.mrb[0].mxu0
  %2792 = vdwg.mxu0
  %vm2793 = vcmask 23552
  %2794 = vst.msk [vmem:[%s13] sm:$0xff] %vm2793, %v2790
  // Predicated region
  $region54: #{our_model_forward.1} parent=0 // pred_check
    _
  $region55: #{our_model_forward.1} parent=0 // pred_check_branch
    %2796 = sbr.rel (0) target = $region57
  $region56: #{our_model_forward.1} parent=0 // pred_region
    _
  $region57: #{our_model_forward.1} parent=0 // pred_fallthru
    _
  // Predicated region
  $region58: #{our_model_forward.1} parent=0 // pred_check
    _
  $region59: #{our_model_forward.1} parent=0 // pred_check_branch
    %2798 = sbr.rel (0) target = $region61
  $region60: #{our_model_forward.1} parent=0 // pred_region
    _
  $region61: #{our_model_forward.1} parent=0 // pred_fallthru
    _
  // Predicated region
  $region62: #{our_model_forward.1} parent=0 // pred_check
    _
  $region63: #{our_model_forward.1} parent=0 // pred_check_branch
    %2800 = sbr.rel (0) target = $region65
  $region64: #{our_model_forward.1} parent=0 // pred_region
    _
  $region65: #{our_model_forward.1} parent=0 // pred_fallthru
    _
  // Predicated region
  $region66: #{our_model_forward.1} parent=0 // pred_check
    _
  $region67: #{our_model_forward.1} parent=0 // pred_check_branch
    %2802 = sbr.rel (0) target = $region69
  $region68: #{our_model_forward.1} parent=0 // pred_region
    _
  $region69: #{our_model_forward.1} parent=0 // pred_fallthru
    _

</llo_original>
